<compile_context>
chip_gen: v7x
topology: tpu7x:2x2x1
jax: 0.10.0
libtpu: 0.0.40
codegen_flags: <defaults>
</compile_context>

<pallas_src>
import functools

import jax
import jax.numpy as jnp
from jax.experimental import pallas as pl
from jax.experimental.pallas import tpu as pltpu

LANE = 128  # vreg lane width -> lane-dense embedding dim


def _round_up(x, m):
    return ((x + m - 1) // m) * m


def _vmem_capacity_bytes():
    """Physical VMEM of the local chip; conservative default if unknown."""
    try:
        return int(pltpu.get_tpu_info().vmem_capacity_bytes)
    except Exception:
        return 64 << 20  # v7x per-TensorCore VMEM (smallest of the three gens)


def _axis_tiles(n, *, tk_target=1024, tm_target=256):
    """Padded extent + row tile (tm) + contraction tile (tk) for a node axis.

    tk > tm (long contiguous HBM rows per DMA, fewer grid steps); the row tile
    always yields >= 2 blocks when the axis allows it, so the "parallel" grid
    axis feeds both TensorCores on v7x.
    """
    n_pad = _round_up(n, LANE)
    tk = min(tk_target, n_pad)
    n_pad = _round_up(n_pad, tk)
    if n_pad % tm_target == 0 and n_pad >= 2 * tm_target:
        tm = tm_target
    elif n_pad >= 2 * LANE:
        tm = LANE  # guarantees >= 2 row blocks
    else:
        tm = n_pad
    return n_pad, tm, tk


def _fused_vmem_need(nu_pad, ni_pad, d_pad, n_hops, r_itemsize):
    r_b = nu_pad * ni_pad * r_itemsize
    in_b = (nu_pad + ni_pad) * d_pad * 4
    out_b = (n_hops + 1) * (nu_pad + ni_pad) * d_pad * 4
    work_b = 8 * max(nu_pad, ni_pad) * d_pad * 4  # live intermediates, generous
    return r_b + in_b + out_b + work_b


# ----------------------------------------------------------------------------
# Primary path: whole forward fused in one kernel, R resident in VMEM.
# ----------------------------------------------------------------------------
def _fused_kernel(r_ref, u0_ref, i0_ref, u_out_ref, i_out_ref, *, n_hops):
    # Hop 0 = the original (un-quantized) embeddings, exactly as the reference.
    u_out_ref[0] = u0_ref[...]
    i_out_ref[0] = i0_ref[...]

    r = r_ref[...]                    # (nu_pad, ni_pad), bf16 -- read ONCE
    cdt = r.dtype
    u_cur = u0_ref[...].astype(cdt)   # bf16 MXU operands, f32 accumulation
    i_cur = i0_ref[...].astype(cdt)

    for h in range(n_hops):           # n_hops is small and static -> unroll
        u_next = jnp.dot(r, i_cur, preferred_element_type=jnp.float32)
        i_next = jax.lax.dot_general(
            r, u_cur,
            dimension_numbers=(((0,), (0,)), ((), ())),   # R^T @ u, no R^T copy
            preferred_element_type=jnp.float32)
        u_out_ref[h + 1] = u_next
        i_out_ref[h + 1] = i_next
        if h + 1 < n_hops:
            u_cur = u_next.astype(cdt)
            i_cur = i_next.astype(cdt)


def _fused_forward(r_pad, u0, i0, *, n_hops, vmem_cap):
    nu_pad, ni_pad = r_pad.shape
    d_pad = u0.shape[1]
    need = _fused_vmem_need(nu_pad, ni_pad, d_pad, n_hops, r_pad.dtype.itemsize)
    vmem_limit = min(max(int(1.3 * need) + (8 << 20), 32 << 20),
                     int(0.9 * vmem_cap))
    return pl.pallas_call(
        functools.partial(_fused_kernel, n_hops=n_hops),
        out_shape=(
            jax.ShapeDtypeStruct((n_hops + 1, nu_pad, d_pad), jnp.float32),
            jax.ShapeDtypeStruct((n_hops + 1, ni_pad, d_pad), jnp.float32),
        ),
        compiler_params=pltpu.CompilerParams(vmem_limit_bytes=vmem_limit),
    )(r_pad, u0, i0)


# ----------------------------------------------------------------------------
# Fallback path (large graphs): tiled per-hop SpMM streaming R tiles only.
# Output block is the accumulator (constant index along the reduction axis).
# ----------------------------------------------------------------------------
def _spmm_nt_kernel(a_ref, e_ref, o_ref, *, tk, e_resident):
    # out[i_blk] += R[i_blk, k_blk] @ E[k_blk]
    k = pl.program_id(1)
    if e_resident:
        e_blk = e_ref[pl.ds(pl.multiple_of(k * tk, tk), tk), :]
    else:
        e_blk = e_ref[...]
    prod = jnp.dot(a_ref[...], e_blk, preferred_element_type=jnp.float32)

    @pl.when(k == 0)
    def _():
        o_ref[...] = prod

    @pl.when(k > 0)
    def _():
        o_ref[...] += prod


def _spmm_tn_kernel(a_ref, e_ref, o_ref, *, tk, e_resident):
    # out[i_blk] += R[k_blk, i_blk]^T @ E[k_blk]   (reads R, never R^T)
    k = pl.program_id(1)
    if e_resident:
        e_blk = e_ref[pl.ds(pl.multiple_of(k * tk, tk), tk), :]
    else:
        e_blk = e_ref[...]
    prod = jax.lax.dot_general(
        a_ref[...], e_blk,
        dimension_numbers=(((0,), (0,)), ((), ())),
        preferred_element_type=jnp.float32)

    @pl.when(k == 0)
    def _():
        o_ref[...] = prod

    @pl.when(k > 0)
    def _():
        o_ref[...] += prod


def _spmm(r_pad, embed, *, transpose, tm, tk, e_resident, vmem_cap):
    """out = R @ E (transpose=False) or R^T @ E (transpose=True)."""
    nu_pad, ni_pad = r_pad.shape
    k_pad, d_pad = embed.shape
    if transpose:
        m_pad = ni_pad
        assert k_pad == nu_pad
        a_block, a_map = (tk, tm), (lambda i, k: (k, i))
        kernel_fn = _spmm_tn_kernel
    else:
        m_pad = nu_pad
        assert k_pad == ni_pad
        a_block, a_map = (tm, tk), (lambda i, k: (i, k))
        kernel_fn = _spmm_nt_kernel
    assert m_pad % tm == 0 and k_pad % tk == 0 and d_pad % LANE == 0

    if e_resident:
        # Full (K, d) embedding slab resident in VMEM (DMA'd once).
        # TODO(synk): pipeline_mode=pl.Buffered(1) would halve this buffer's
        # VMEM footprint since its block index never changes.
        e_spec = pl.BlockSpec((k_pad, d_pad), lambda i, k: (0, 0))
        e_bytes = 2 * k_pad * d_pad * embed.dtype.itemsize
    else:
        e_spec = pl.BlockSpec((tk, d_pad), lambda i, k: (k, 0))
        e_bytes = 2 * tk * d_pad * embed.dtype.itemsize

    a_bytes = 2 * tm * tk * r_pad.dtype.itemsize       # double-buffered R tile
    o_bytes = 2 * tm * d_pad * 4                        # f32 output/accumulator
    need = int(1.25 * (a_bytes + e_bytes + o_bytes)) + (4 << 20)
    vmem_limit = min(max(need, 32 << 20), int(0.75 * vmem_cap))

    kernel = functools.partial(kernel_fn, tk=tk, e_resident=e_resident)
    return pl.pallas_call(
        kernel,
        out_shape=jax.ShapeDtypeStruct((m_pad, d_pad), jnp.float32),
        grid_spec=pltpu.PrefetchScalarGridSpec(
            num_scalar_prefetch=0,
            grid=(m_pad // tm, k_pad // tk),
            in_specs=[pl.BlockSpec(a_block, a_map), e_spec],
            out_specs=pl.BlockSpec((tm, d_pad), lambda i, k: (i, 0)),
        ),
        compiler_params=pltpu.CompilerParams(
            dimension_semantics=("parallel", "arbitrary"),
            vmem_limit_bytes=vmem_limit,
        ),
    )(r_pad, embed)


# ----------------------------------------------------------------------------
# Graph preparation: only the nonzero bipartite quadrant R, bf16, tile-padded.
# ----------------------------------------------------------------------------
def prepare_graph(r_norm, *, compute_dtype=jnp.bfloat16):
    """Pad + cast the normalized user-item interaction block (no R^T copy)."""
    # TODO(synk): int8 (v5e/v6e) or fp8-e4m3 (v7x) adjacency would halve the
    # R HBM stream again on the tiled path, at the cost of the tight bf16
    # numerics check; kept bf16 here.
    nu, ni = r_norm.shape
    nu_pad, tm_u, tk_u = _axis_tiles(nu)
    ni_pad, tm_i, tk_i = _axis_tiles(ni)
    r_pad = jnp.zeros((nu_pad, ni_pad), compute_dtype).at[:nu, :ni].set(
        r_norm.astype(compute_dtype))
    return r_pad, (tm_u, tk_u, tm_i, tk_i)


# ----------------------------------------------------------------------------
# GraphConv forward
# ----------------------------------------------------------------------------
@functools.partial(jax.jit, static_argnames=("n_hops", "tiles", "force_tiled"))
def graph_conv_forward(r_pad, user_embed, item_embed, *, n_hops, tiles,
                       force_tiled=False):
    tm_u, tk_u, tm_i, tk_i = tiles
    nu, d = user_embed.shape
    ni, _ = item_embed.shape
    nu_pad, ni_pad = r_pad.shape
    d_pad = _round_up(d, LANE)
    cdt = r_pad.dtype
    vmem_cap = _vmem_capacity_bytes()

    # Zero-pad embeddings once: rows to padded node counts, dim to 128 lanes
    # (lane-dense stores, full MXU output columns).
    u0 = jnp.zeros((nu_pad, d_pad), jnp.float32).at[:nu, :d].set(user_embed)
    i0 = jnp.zeros((ni_pad, d_pad), jnp.float32).at[:ni, :d].set(item_embed)

    fused_need = _fused_vmem_need(nu_pad, ni_pad, d_pad, n_hops, cdt.itemsize)
    use_fused = (not force_tiled) and fused_need <= int(0.55 * vmem_cap)

    if use_fused:
        u_all, i_all = _fused_forward(r_pad, u0, i0, n_hops=n_hops,
                                      vmem_cap=vmem_cap)
        user_out = jnp.transpose(u_all, (1, 0, 2))[:nu, :, :d]
        item_out = jnp.transpose(i_all, (1, 0, 2))[:ni, :, :d]
        return user_out, item_out

    # Tiled fallback: per hop,
    #   new_user = R   @ item_agg
    #   new_item = R^T @ user_agg      (transposed contraction of the SAME r_pad)
    # TODO(synk): a dual-output streaming kernel (one R tile read feeding both
    # products) would halve the remaining R HBM stream; today R is streamed
    # twice per hop but R^T is never materialized in HBM.
    e_budget = int(0.25 * vmem_cap)
    e_res_u = nu_pad * d_pad * cdt.itemsize <= e_budget
    e_res_i = ni_pad * d_pad * cdt.itemsize <= e_budget

    u_hops, i_hops = [u0], [i0]
    u_cur, i_cur = u0, i0
    for _ in range(n_hops):
        u_next = _spmm(r_pad, i_cur.astype(cdt), transpose=False,
                       tm=tm_u, tk=tk_i, e_resident=e_res_i, vmem_cap=vmem_cap)
        i_next = _spmm(r_pad, u_cur.astype(cdt), transpose=True,
                       tm=tm_i, tk=tk_u, e_resident=e_res_u, vmem_cap=vmem_cap)
        u_cur, i_cur = u_next, i_next
        u_hops.append(u_cur)
        i_hops.append(i_cur)

    user_out = jnp.stack(u_hops, axis=1)[:nu, :, :d]
    item_out = jnp.stack(i_hops, axis=1)[:ni, :, :d]
    return user_out, item_out


# ----------------------------------------------------------------------------
# Deterministic synthetic graph + parameters
# ----------------------------------------------------------------------------
def build_normalized_interactions(key, n_users, n_items, p=0.1):
    """Symmetrically-normalized user-item block of the bipartite adjacency."""
    r = jax.random.bernoulli(key, p=p, shape=(n_users, n_items)).astype(jnp.float32)
    deg_u = jnp.sum(r, axis=1)
    deg_i = jnp.sum(r, axis=0)
    du = jnp.where(deg_u > 0, 1.0 / jnp.sqrt(jnp.maximum(deg_u, 1e-12)), 0.0)
    di = jnp.where(deg_i > 0, 1.0 / jnp.sqrt(jnp.maximum(deg_i, 1e-12)), 0.0)
    return du[:, None] * r * di[None, :]


if __name__ == "__main__":
    n_users, n_items, dim, n_hops = 192, 320, 64, 3

    key = jax.random.PRNGKey(0)
    k_adj, k_u, k_i = jax.random.split(key, 3)

    r_norm = build_normalized_interactions(k_adj, n_users, n_items)
    user_embed = jax.random.normal(k_u, (n_users, dim), jnp.float32) * 0.1
    item_embed = jax.random.normal(k_i, (n_items, dim), jnp.float32) * 0.1

    r_pad, tiles = prepare_graph(r_norm)

    # Primary (hop-fused, single pallas_call) path.
    user_out, item_out = graph_conv_forward(
        r_pad, user_embed, item_embed, n_hops=n_hops, tiles=tiles)
    jax.block_until_ready((user_out, item_out))

    assert user_out.shape == (n_users, n_hops + 1, dim)
    assert item_out.shape == (n_items, n_hops + 1, dim)

    hi = jax.lax.Precision.HIGHEST

    # (a) Reference mirroring the kernel's bf16 quantization of R and of each
    #     hop's input (tight tolerance: only accumulation-order diffs remain).
    rq = r_norm.astype(jnp.bfloat16).astype(jnp.float32)
    u_cur, i_cur = user_embed, item_embed
    u_ref, i_ref = [u_cur], [i_cur]
    for _ in range(n_hops):
        u_in = u_cur.astype(jnp.bfloat16).astype(jnp.float32)
        i_in = i_cur.astype(jnp.bfloat16).astype(jnp.float32)
        u_cur = jnp.dot(rq, i_in, precision=hi)
        i_cur = jnp.dot(rq.T, u_in, precision=hi)
        u_ref.append(u_cur)
        i_ref.append(i_cur)
    u_ref = jnp.stack(u_ref, axis=1)
    i_ref = jnp.stack(i_ref, axis=1)
    assert jnp.allclose(user_out, u_ref, atol=2e-3, rtol=2e-3)
    assert jnp.allclose(item_out, i_ref, atol=2e-3, rtol=2e-3)

    # (b) Loose check against the pure-f32 GraphConv reference
    #     (bounds the bf16 approximation error of the fast path).
    u_cur, i_cur = user_embed, item_embed
    u32, i32 = [u_cur], [i_cur]
    for _ in range(n_hops):
        u_nxt = jnp.dot(r_norm, i_cur, precision=hi)
        i_nxt = jnp.dot(r_norm.T, u_cur, precision=hi)
        u_cur, i_cur = u_nxt, i_nxt
        u32.append(u_cur)
        i32.append(i_cur)
    u32 = jnp.stack(u32, axis=1)
    i32 = jnp.stack(i32, axis=1)
    assert jnp.allclose(user_out, u32, atol=3e-2, rtol=3e-2)
    assert jnp.allclose(item_out, i32, atol=3e-2, rtol=3e-2)

    # (c) Also exercise the tiled fallback path (large-graph code path) and
    #     cross-check it against the same bf16-mirrored reference.
    user_t, item_t = graph_conv_forward(
        r_pad, user_embed, item_embed, n_hops=n_hops, tiles=tiles,
        force_tiled=True)
    jax.block_until_ready((user_t, item_t))
    assert user_t.shape == (n_users, n_hops + 1, dim)
    assert item_t.shape == (n_items, n_hops + 1, dim)
    assert jnp.allclose(user_t, u_ref, atol=2e-3, rtol=2e-3)
    assert jnp.allclose(item_t, i_ref, atol=2e-3, rtol=2e-3)

    print("KERNEL_OK")
</pallas_src>

<mosaic_0001>
module attributes {stable_mosaic.version = 11 : i64} {
  func.func @_fused_kernel(%arg0: memref<256x384xbf16, #tpu.memory_space<vmem>>, %arg1: memref<256x128xf32, #tpu.memory_space<vmem>>, %arg2: memref<384x128xf32, #tpu.memory_space<vmem>>, %arg3: memref<4x256x128xf32, #tpu.memory_space<vmem>>, %arg4: memref<4x384x128xf32, #tpu.memory_space<vmem>>) attributes {dimension_semantics = [], scalar_prefetch = 0 : i64, scratch_operands = 0 : i64, tpu.core_type = #tpu.core_type<tc>} {
    %c0 = arith.constant 0 : index
    %c0_0 = arith.constant 0 : index
    %0 = vector.load %arg1[%c0, %c0_0] : memref<256x128xf32, #tpu.memory_space<vmem>>, vector<256x128xf32>
    %c0_1 = arith.constant 0 : index
    %c0_2 = arith.constant 0 : index
    %c0_3 = arith.constant 0 : index
    %1 = vector.load %arg3[%c0_1, %c0_2, %c0_3] : memref<4x256x128xf32, #tpu.memory_space<vmem>>, vector<1x256x128xf32>
    %2 = vector.shape_cast %1 : vector<1x256x128xf32> to vector<256x128xf32>
    %3 = vector.shape_cast %0 : vector<256x128xf32> to vector<1x256x128xf32>
    tpu.vector_store %arg3[%c0_1, %c0_2, %c0_3], %3 {strides = array<i32>} : memref<4x256x128xf32, #tpu.memory_space<vmem>>, vector<1x256x128xf32>,
    %c0_4 = arith.constant 0 : index
    %c0_5 = arith.constant 0 : index
    %4 = vector.load %arg2[%c0_4, %c0_5] : memref<384x128xf32, #tpu.memory_space<vmem>>, vector<384x128xf32>
    %c0_6 = arith.constant 0 : index
    %c0_7 = arith.constant 0 : index
    %c0_8 = arith.constant 0 : index
    %5 = vector.load %arg4[%c0_6, %c0_7, %c0_8] : memref<4x384x128xf32, #tpu.memory_space<vmem>>, vector<1x384x128xf32>
    %6 = vector.shape_cast %5 : vector<1x384x128xf32> to vector<384x128xf32>
    %7 = vector.shape_cast %4 : vector<384x128xf32> to vector<1x384x128xf32>
    tpu.vector_store %arg4[%c0_6, %c0_7, %c0_8], %7 {strides = array<i32>} : memref<4x384x128xf32, #tpu.memory_space<vmem>>, vector<1x384x128xf32>,
    %c0_9 = arith.constant 0 : index
    %c0_10 = arith.constant 0 : index
    %8 = vector.load %arg0[%c0_9, %c0_10] : memref<256x384xbf16, #tpu.memory_space<vmem>>, vector<256x384xbf16>
    %c0_11 = arith.constant 0 : index
    %c0_12 = arith.constant 0 : index
    %9 = vector.load %arg1[%c0_11, %c0_12] : memref<256x128xf32, #tpu.memory_space<vmem>>, vector<256x128xf32>
    %10 = arith.truncf %9 : vector<256x128xf32> to vector<256x128xbf16>
    %c0_13 = arith.constant 0 : index
    %c0_14 = arith.constant 0 : index
    %11 = vector.load %arg2[%c0_13, %c0_14] : memref<384x128xf32, #tpu.memory_space<vmem>>, vector<384x128xf32>
    %12 = arith.truncf %11 : vector<384x128xf32> to vector<384x128xbf16>
    %cst = arith.constant dense<0.000000e+00> : vector<256x128xf32>
    %13 = tpu.matmul %8, %12, %cst {dimension_numbers = #tpu.dot_dimension_numbers<[1], [0], [0], [1], [0, 0, 1, 1], [], []>} : vector<256x384xbf16>, vector<384x128xbf16>, vector<256x128xf32> -> vector<256x128xf32>
    %cst_15 = arith.constant dense<0.000000e+00> : vector<384x128xf32>
    %14 = tpu.matmul %8, %10, %cst_15 {dimension_numbers = #tpu.dot_dimension_numbers<[0], [0], [1], [1], [0, 1, 1, 1], [], []>} : vector<256x384xbf16>, vector<256x128xbf16>, vector<384x128xf32> -> vector<384x128xf32>
    %c1 = arith.constant 1 : index
    %c0_16 = arith.constant 0 : index
    %c0_17 = arith.constant 0 : index
    %15 = vector.load %arg3[%c1, %c0_16, %c0_17] : memref<4x256x128xf32, #tpu.memory_space<vmem>>, vector<1x256x128xf32>
    %16 = vector.shape_cast %15 : vector<1x256x128xf32> to vector<256x128xf32>
    %17 = vector.shape_cast %13 : vector<256x128xf32> to vector<1x256x128xf32>
    tpu.vector_store %arg3[%c1, %c0_16, %c0_17], %17 {strides = array<i32>} : memref<4x256x128xf32, #tpu.memory_space<vmem>>, vector<1x256x128xf32>,
    %c1_18 = arith.constant 1 : index
    %c0_19 = arith.constant 0 : index
    %c0_20 = arith.constant 0 : index
    %18 = vector.load %arg4[%c1_18, %c0_19, %c0_20] : memref<4x384x128xf32, #tpu.memory_space<vmem>>, vector<1x384x128xf32>
    %19 = vector.shape_cast %18 : vector<1x384x128xf32> to vector<384x128xf32>
    %20 = vector.shape_cast %14 : vector<384x128xf32> to vector<1x384x128xf32>
    tpu.vector_store %arg4[%c1_18, %c0_19, %c0_20], %20 {strides = array<i32>} : memref<4x384x128xf32, #tpu.memory_space<vmem>>, vector<1x384x128xf32>,
    %21 = arith.truncf %13 : vector<256x128xf32> to vector<256x128xbf16>
    %22 = arith.truncf %14 : vector<384x128xf32> to vector<384x128xbf16>
    %cst_21 = arith.constant dense<0.000000e+00> : vector<256x128xf32>
    %23 = tpu.matmul %8, %22, %cst_21 {dimension_numbers = #tpu.dot_dimension_numbers<[1], [0], [0], [1], [0, 0, 1, 1], [], []>} : vector<256x384xbf16>, vector<384x128xbf16>, vector<256x128xf32> -> vector<256x128xf32>
    %cst_22 = arith.constant dense<0.000000e+00> : vector<384x128xf32>
    %24 = tpu.matmul %8, %21, %cst_22 {dimension_numbers = #tpu.dot_dimension_numbers<[0], [0], [1], [1], [0, 1, 1, 1], [], []>} : vector<256x384xbf16>, vector<256x128xbf16>, vector<384x128xf32> -> vector<384x128xf32>
    %c2 = arith.constant 2 : index
    %c0_23 = arith.constant 0 : index
    %c0_24 = arith.constant 0 : index
    %25 = vector.load %arg3[%c2, %c0_23, %c0_24] : memref<4x256x128xf32, #tpu.memory_space<vmem>>, vector<1x256x128xf32>
    %26 = vector.shape_cast %25 : vector<1x256x128xf32> to vector<256x128xf32>
    %27 = vector.shape_cast %23 : vector<256x128xf32> to vector<1x256x128xf32>
    tpu.vector_store %arg3[%c2, %c0_23, %c0_24], %27 {strides = array<i32>} : memref<4x256x128xf32, #tpu.memory_space<vmem>>, vector<1x256x128xf32>,
    %c2_25 = arith.constant 2 : index
    %c0_26 = arith.constant 0 : index
    %c0_27 = arith.constant 0 : index
    %28 = vector.load %arg4[%c2_25, %c0_26, %c0_27] : memref<4x384x128xf32, #tpu.memory_space<vmem>>, vector<1x384x128xf32>
    %29 = vector.shape_cast %28 : vector<1x384x128xf32> to vector<384x128xf32>
    %30 = vector.shape_cast %24 : vector<384x128xf32> to vector<1x384x128xf32>
    tpu.vector_store %arg4[%c2_25, %c0_26, %c0_27], %30 {strides = array<i32>} : memref<4x384x128xf32, #tpu.memory_space<vmem>>, vector<1x384x128xf32>,
    %31 = arith.truncf %23 : vector<256x128xf32> to vector<256x128xbf16>
    %32 = arith.truncf %24 : vector<384x128xf32> to vector<384x128xbf16>
    %cst_28 = arith.constant dense<0.000000e+00> : vector<256x128xf32>
    %33 = tpu.matmul %8, %32, %cst_28 {dimension_numbers = #tpu.dot_dimension_numbers<[1], [0], [0], [1], [0, 0, 1, 1], [], []>} : vector<256x384xbf16>, vector<384x128xbf16>, vector<256x128xf32> -> vector<256x128xf32>
    %cst_29 = arith.constant dense<0.000000e+00> : vector<384x128xf32>
    %34 = tpu.matmul %8, %31, %cst_29 {dimension_numbers = #tpu.dot_dimension_numbers<[0], [0], [1], [1], [0, 1, 1, 1], [], []>} : vector<256x384xbf16>, vector<256x128xbf16>, vector<384x128xf32> -> vector<384x128xf32>
    %c3 = arith.constant 3 : index
    %c0_30 = arith.constant 0 : index
    %c0_31 = arith.constant 0 : index
    %35 = vector.load %arg3[%c3, %c0_30, %c0_31] : memref<4x256x128xf32, #tpu.memory_space<vmem>>, vector<1x256x128xf32>
    %36 = vector.shape_cast %35 : vector<1x256x128xf32> to vector<256x128xf32>
    %37 = vector.shape_cast %33 : vector<256x128xf32> to vector<1x256x128xf32>
    tpu.vector_store %arg3[%c3, %c0_30, %c0_31], %37 {strides = array<i32>} : memref<4x256x128xf32, #tpu.memory_space<vmem>>, vector<1x256x128xf32>,
    %c3_32 = arith.constant 3 : index
    %c0_33 = arith.constant 0 : index
    %c0_34 = arith.constant 0 : index
    %38 = vector.load %arg4[%c3_32, %c0_33, %c0_34] : memref<4x384x128xf32, #tpu.memory_space<vmem>>, vector<1x384x128xf32>
    %39 = vector.shape_cast %38 : vector<1x384x128xf32> to vector<384x128xf32>
    %40 = vector.shape_cast %34 : vector<384x128xf32> to vector<1x384x128xf32>
    tpu.vector_store %arg4[%c3_32, %c0_33, %c0_34], %40 {strides = array<i32>} : memref<4x384x128xf32, #tpu.memory_space<vmem>>, vector<1x384x128xf32>,
    return
  }
}

</mosaic_0001>

<llo_original>
// kernel: graph_conv_forward.1
$region0: #{graph_conv_forward.1}
  #allocation0 [shape = 'u32[]', space=smem, size = 0x4, offset = 0x4, fixed_abs, tag = 'smem constant byte address 0x4 - core index']
  #allocation1 [shape = 'u32[144,128]{1,0:T(1,128)}', space=vmem, size = 0x12000, scoped, tag = 'internal scratch']
  %s0 = inlined_call_operand.vmem [shape: bf16[256,384], index: 0, kind: input, shape index: {}]
  %s1 = inlined_call_operand.vmem [shape: f32[256,128], index: 1, kind: input, shape index: {}]
  %s2 = inlined_call_operand.vmem [shape: f32[384,128], index: 2, kind: input, shape index: {}]
  %s3 = inlined_call_operand.vmem [shape: f32[4,256,128], index: 3, kind: output, shape index: {0}]
  %s4 = inlined_call_operand.vmem [shape: f32[4,384,128], index: 4, kind: output, shape index: {1}]
  %5 = xla_tuple %s3, %s4
  %s6 = sld [smem:[#allocation0]]
  $region30: #{graph_conv_forward.1} parent=0
    _
  %s8 = ssub.s32 1, %s6
  %s9 = scalar_select 0, %s8, %s6
  // Predicated region
  $region2: #{graph_conv_forward.1} parent=0 // pred_check
    _
  $region3: #{graph_conv_forward.1} parent=0 // pred_check_branch
    %11 = sbr.rel (0) target = $region5
  $region4: #{graph_conv_forward.1} parent=0 // pred_region
    _
  $region5: #{graph_conv_forward.1} parent=0 // pred_fallthru
    _
  // Predicated region
  $region6: #{graph_conv_forward.1} parent=0 // pred_check
    _
  $region7: #{graph_conv_forward.1} parent=0 // pred_check_branch
    %13 = sbr.rel (0) target = $region9
  $region8: #{graph_conv_forward.1} parent=0 // pred_region
    _
  $region9: #{graph_conv_forward.1} parent=0 // pred_fallthru
    _
  // Predicated region
  $region10: #{graph_conv_forward.1} parent=0 // pred_check
    _
  $region11: #{graph_conv_forward.1} parent=0 // pred_check_branch
    %15 = sbr.rel (0) target = $region13
  $region12: #{graph_conv_forward.1} parent=0 // pred_region
    _
  $region13: #{graph_conv_forward.1} parent=0 // pred_fallthru
    _
  %v17 = vld [vmem:[%s1] sm:$0xff]
  %v18 = vld [vmem:[%s1 + $0x8] sm:$0xff]
  %v19 = vld [vmem:[%s1 + $0x10] sm:$0xff]
  %v20 = vld [vmem:[%s1 + $0x18] sm:$0xff]
  %v21 = vld [vmem:[%s1 + $0x20] sm:$0xff]
  %v22 = vld [vmem:[%s1 + $0x28] sm:$0xff]
  %v23 = vld [vmem:[%s1 + $0x30] sm:$0xff]
  %v24 = vld [vmem:[%s1 + $0x38] sm:$0xff]
  %v25 = vld [vmem:[%s1 + $0x40] sm:$0xff]
  %v26 = vld [vmem:[%s1 + $0x48] sm:$0xff]
  %v27 = vld [vmem:[%s1 + $0x50] sm:$0xff]
  %v28 = vld [vmem:[%s1 + $0x58] sm:$0xff]
  %v29 = vld [vmem:[%s1 + $0x60] sm:$0xff]
  %v30 = vld [vmem:[%s1 + $0x68] sm:$0xff]
  %v31 = vld [vmem:[%s1 + $0x70] sm:$0xff]
  %v32 = vld [vmem:[%s1 + $0x78] sm:$0xff]
  %v33 = vld [vmem:[%s1 + $0x80] sm:$0xff]
  %v34 = vld [vmem:[%s1 + $0x88] sm:$0xff]
  %v35 = vld [vmem:[%s1 + $0x90] sm:$0xff]
  %v36 = vld [vmem:[%s1 + $0x98] sm:$0xff]
  %v37 = vld [vmem:[%s1 + $0xa0] sm:$0xff]
  %v38 = vld [vmem:[%s1 + $0xa8] sm:$0xff]
  %v39 = vld [vmem:[%s1 + $0xb0] sm:$0xff]
  %v40 = vld [vmem:[%s1 + $0xb8] sm:$0xff]
  %v41 = vld [vmem:[%s1 + $0xc0] sm:$0xff]
  %v42 = vld [vmem:[%s1 + $0xc8] sm:$0xff]
  %v43 = vld [vmem:[%s1 + $0xd0] sm:$0xff]
  %v44 = vld [vmem:[%s1 + $0xd8] sm:$0xff]
  %v45 = vld [vmem:[%s1 + $0xe0] sm:$0xff]
  %v46 = vld [vmem:[%s1 + $0xe8] sm:$0xff]
  %v47 = vld [vmem:[%s1 + $0xf0] sm:$0xff]
  %v48 = vld [vmem:[%s1 + $0xf8] sm:$0xff]
  %49 = vst [vmem:[%s3] sm:$0xff] %v17
  %50 = vst [vmem:[%s3 + $0x8] sm:$0xff] %v18
  %51 = vst [vmem:[%s3 + $0x10] sm:$0xff] %v19
  %52 = vst [vmem:[%s3 + $0x18] sm:$0xff] %v20
  %53 = vst [vmem:[%s3 + $0x20] sm:$0xff] %v21
  %54 = vst [vmem:[%s3 + $0x28] sm:$0xff] %v22
  %55 = vst [vmem:[%s3 + $0x30] sm:$0xff] %v23
  %56 = vst [vmem:[%s3 + $0x38] sm:$0xff] %v24
  %57 = vst [vmem:[%s3 + $0x40] sm:$0xff] %v25
  %58 = vst [vmem:[%s3 + $0x48] sm:$0xff] %v26
  %59 = vst [vmem:[%s3 + $0x50] sm:$0xff] %v27
  %60 = vst [vmem:[%s3 + $0x58] sm:$0xff] %v28
  %61 = vst [vmem:[%s3 + $0x60] sm:$0xff] %v29
  %62 = vst [vmem:[%s3 + $0x68] sm:$0xff] %v30
  %63 = vst [vmem:[%s3 + $0x70] sm:$0xff] %v31
  %64 = vst [vmem:[%s3 + $0x78] sm:$0xff] %v32
  %65 = vst [vmem:[%s3 + $0x80] sm:$0xff] %v33
  %66 = vst [vmem:[%s3 + $0x88] sm:$0xff] %v34
  %67 = vst [vmem:[%s3 + $0x90] sm:$0xff] %v35
  %68 = vst [vmem:[%s3 + $0x98] sm:$0xff] %v36
  %69 = vst [vmem:[%s3 + $0xa0] sm:$0xff] %v37
  %70 = vst [vmem:[%s3 + $0xa8] sm:$0xff] %v38
  %71 = vst [vmem:[%s3 + $0xb0] sm:$0xff] %v39
  %72 = vst [vmem:[%s3 + $0xb8] sm:$0xff] %v40
  %73 = vst [vmem:[%s3 + $0xc0] sm:$0xff] %v41
  %74 = vst [vmem:[%s3 + $0xc8] sm:$0xff] %v42
  %75 = vst [vmem:[%s3 + $0xd0] sm:$0xff] %v43
  %76 = vst [vmem:[%s3 + $0xd8] sm:$0xff] %v44
  %77 = vst [vmem:[%s3 + $0xe0] sm:$0xff] %v45
  %78 = vst [vmem:[%s3 + $0xe8] sm:$0xff] %v46
  %79 = vst [vmem:[%s3 + $0xf0] sm:$0xff] %v47
  %80 = vst [vmem:[%s3 + $0xf8] sm:$0xff] %v48
  %v81 = vld [vmem:[%s2] sm:$0xff]
  %v82 = vld [vmem:[%s2 + $0x8] sm:$0xff]
  %v83 = vld [vmem:[%s2 + $0x10] sm:$0xff]
  %v84 = vld [vmem:[%s2 + $0x18] sm:$0xff]
  %v85 = vld [vmem:[%s2 + $0x20] sm:$0xff]
  %v86 = vld [vmem:[%s2 + $0x28] sm:$0xff]
  %v87 = vld [vmem:[%s2 + $0x30] sm:$0xff]
  %v88 = vld [vmem:[%s2 + $0x38] sm:$0xff]
  %v89 = vld [vmem:[%s2 + $0x40] sm:$0xff]
  %v90 = vld [vmem:[%s2 + $0x48] sm:$0xff]
  %v91 = vld [vmem:[%s2 + $0x50] sm:$0xff]
  %v92 = vld [vmem:[%s2 + $0x58] sm:$0xff]
  %v93 = vld [vmem:[%s2 + $0x60] sm:$0xff]
  %v94 = vld [vmem:[%s2 + $0x68] sm:$0xff]
  %v95 = vld [vmem:[%s2 + $0x70] sm:$0xff]
  %v96 = vld [vmem:[%s2 + $0x78] sm:$0xff]
  %v97 = vld [vmem:[%s2 + $0x80] sm:$0xff]
  %v98 = vld [vmem:[%s2 + $0x88] sm:$0xff]
  %v99 = vld [vmem:[%s2 + $0x90] sm:$0xff]
  %v100 = vld [vmem:[%s2 + $0x98] sm:$0xff]
  %v101 = vld [vmem:[%s2 + $0xa0] sm:$0xff]
  %v102 = vld [vmem:[%s2 + $0xa8] sm:$0xff]
  %v103 = vld [vmem:[%s2 + $0xb0] sm:$0xff]
  %v104 = vld [vmem:[%s2 + $0xb8] sm:$0xff]
  %v105 = vld [vmem:[%s2 + $0xc0] sm:$0xff]
  %v106 = vld [vmem:[%s2 + $0xc8] sm:$0xff]
  %v107 = vld [vmem:[%s2 + $0xd0] sm:$0xff]
  %v108 = vld [vmem:[%s2 + $0xd8] sm:$0xff]
  %v109 = vld [vmem:[%s2 + $0xe0] sm:$0xff]
  %v110 = vld [vmem:[%s2 + $0xe8] sm:$0xff]
  %v111 = vld [vmem:[%s2 + $0xf0] sm:$0xff]
  %v112 = vld [vmem:[%s2 + $0xf8] sm:$0xff]
  %v113 = vld [vmem:[%s2 + $0x100] sm:$0xff]
  %v114 = vld [vmem:[%s2 + $0x108] sm:$0xff]
  %v115 = vld [vmem:[%s2 + $0x110] sm:$0xff]
  %v116 = vld [vmem:[%s2 + $0x118] sm:$0xff]
  %v117 = vld [vmem:[%s2 + $0x120] sm:$0xff]
  %v118 = vld [vmem:[%s2 + $0x128] sm:$0xff]
  %v119 = vld [vmem:[%s2 + $0x130] sm:$0xff]
  %v120 = vld [vmem:[%s2 + $0x138] sm:$0xff]
  %v121 = vld [vmem:[%s2 + $0x140] sm:$0xff]
  %v122 = vld [vmem:[%s2 + $0x148] sm:$0xff]
  %v123 = vld [vmem:[%s2 + $0x150] sm:$0xff]
  %v124 = vld [vmem:[%s2 + $0x158] sm:$0xff]
  %v125 = vld [vmem:[%s2 + $0x160] sm:$0xff]
  %v126 = vld [vmem:[%s2 + $0x168] sm:$0xff]
  %v127 = vld [vmem:[%s2 + $0x170] sm:$0xff]
  %v128 = vld [vmem:[%s2 + $0x178] sm:$0xff]
  %129 = vst [vmem:[%s4] sm:$0xff] %v81
  %130 = vst [vmem:[%s4 + $0x8] sm:$0xff] %v82
  %131 = vst [vmem:[%s4 + $0x10] sm:$0xff] %v83
  %132 = vst [vmem:[%s4 + $0x18] sm:$0xff] %v84
  %133 = vst [vmem:[%s4 + $0x20] sm:$0xff] %v85
  %134 = vst [vmem:[%s4 + $0x28] sm:$0xff] %v86
  %135 = vst [vmem:[%s4 + $0x30] sm:$0xff] %v87
  %136 = vst [vmem:[%s4 + $0x38] sm:$0xff] %v88
  %137 = vst [vmem:[%s4 + $0x40] sm:$0xff] %v89
  %138 = vst [vmem:[%s4 + $0x48] sm:$0xff] %v90
  %139 = vst [vmem:[%s4 + $0x50] sm:$0xff] %v91
  %140 = vst [vmem:[%s4 + $0x58] sm:$0xff] %v92
  %141 = vst [vmem:[%s4 + $0x60] sm:$0xff] %v93
  %142 = vst [vmem:[%s4 + $0x68] sm:$0xff] %v94
  %143 = vst [vmem:[%s4 + $0x70] sm:$0xff] %v95
  %144 = vst [vmem:[%s4 + $0x78] sm:$0xff] %v96
  %145 = vst [vmem:[%s4 + $0x80] sm:$0xff] %v97
  %146 = vst [vmem:[%s4 + $0x88] sm:$0xff] %v98
  %147 = vst [vmem:[%s4 + $0x90] sm:$0xff] %v99
  %148 = vst [vmem:[%s4 + $0x98] sm:$0xff] %v100
  %149 = vst [vmem:[%s4 + $0xa0] sm:$0xff] %v101
  %150 = vst [vmem:[%s4 + $0xa8] sm:$0xff] %v102
  %151 = vst [vmem:[%s4 + $0xb0] sm:$0xff] %v103
  %152 = vst [vmem:[%s4 + $0xb8] sm:$0xff] %v104
  %153 = vst [vmem:[%s4 + $0xc0] sm:$0xff] %v105
  %154 = vst [vmem:[%s4 + $0xc8] sm:$0xff] %v106
  %155 = vst [vmem:[%s4 + $0xd0] sm:$0xff] %v107
  %156 = vst [vmem:[%s4 + $0xd8] sm:$0xff] %v108
  %157 = vst [vmem:[%s4 + $0xe0] sm:$0xff] %v109
  %158 = vst [vmem:[%s4 + $0xe8] sm:$0xff] %v110
  %159 = vst [vmem:[%s4 + $0xf0] sm:$0xff] %v111
  %160 = vst [vmem:[%s4 + $0xf8] sm:$0xff] %v112
  %161 = vst [vmem:[%s4 + $0x100] sm:$0xff] %v113
  %162 = vst [vmem:[%s4 + $0x108] sm:$0xff] %v114
  %163 = vst [vmem:[%s4 + $0x110] sm:$0xff] %v115
  %164 = vst [vmem:[%s4 + $0x118] sm:$0xff] %v116
  %165 = vst [vmem:[%s4 + $0x120] sm:$0xff] %v117
  %166 = vst [vmem:[%s4 + $0x128] sm:$0xff] %v118
  %167 = vst [vmem:[%s4 + $0x130] sm:$0xff] %v119
  %168 = vst [vmem:[%s4 + $0x138] sm:$0xff] %v120
  %169 = vst [vmem:[%s4 + $0x140] sm:$0xff] %v121
  %170 = vst [vmem:[%s4 + $0x148] sm:$0xff] %v122
  %171 = vst [vmem:[%s4 + $0x150] sm:$0xff] %v123
  %172 = vst [vmem:[%s4 + $0x158] sm:$0xff] %v124
  %173 = vst [vmem:[%s4 + $0x160] sm:$0xff] %v125
  %174 = vst [vmem:[%s4 + $0x168] sm:$0xff] %v126
  %175 = vst [vmem:[%s4 + $0x170] sm:$0xff] %v127
  %176 = vst [vmem:[%s4 + $0x178] sm:$0xff] %v128
  %v177 = vld [vmem:[%s0] sm:$0xff]
  %v178 = vld [vmem:[%s0 + $0x8] sm:$0xf]
  %v179 = vld [vmem:[%s0 + $0xc] sm:$0xff]
  %v180 = vld [vmem:[%s0 + $0x14] sm:$0xf]
  %v181 = vld [vmem:[%s0 + $0x18] sm:$0xff]
  %v182 = vld [vmem:[%s0 + $0x20] sm:$0xf]
  %v183 = vld [vmem:[%s0 + $0x24] sm:$0xff]
  %v184 = vld [vmem:[%s0 + $0x2c] sm:$0xf]
  %v185 = vld [vmem:[%s0 + $0x30] sm:$0xff]
  %v186 = vld [vmem:[%s0 + $0x38] sm:$0xf]
  %v187 = vld [vmem:[%s0 + $0x3c] sm:$0xff]
  %v188 = vld [vmem:[%s0 + $0x44] sm:$0xf]
  %v189 = vld [vmem:[%s0 + $0x48] sm:$0xff]
  %v190 = vld [vmem:[%s0 + $0x50] sm:$0xf]
  %v191 = vld [vmem:[%s0 + $0x54] sm:$0xff]
  %v192 = vld [vmem:[%s0 + $0x5c] sm:$0xf]
  %v193 = vld [vmem:[%s0 + $0x60] sm:$0xff]
  %v194 = vld [vmem:[%s0 + $0x68] sm:$0xf]
  %v195 = vld [vmem:[%s0 + $0x6c] sm:$0xff]
  %v196 = vld [vmem:[%s0 + $0x74] sm:$0xf]
  %v197 = vld [vmem:[%s0 + $0x78] sm:$0xff]
  %v198 = vld [vmem:[%s0 + $0x80] sm:$0xf]
  %v199 = vld [vmem:[%s0 + $0x84] sm:$0xff]
  %v200 = vld [vmem:[%s0 + $0x8c] sm:$0xf]
  %v201 = vld [vmem:[%s0 + $0x90] sm:$0xff]
  %v202 = vld [vmem:[%s0 + $0x98] sm:$0xf]
  %v203 = vld [vmem:[%s0 + $0x9c] sm:$0xff]
  %v204 = vld [vmem:[%s0 + $0xa4] sm:$0xf]
  %v205 = vld [vmem:[%s0 + $0xa8] sm:$0xff]
  %v206 = vld [vmem:[%s0 + $0xb0] sm:$0xf]
  %v207 = vld [vmem:[%s0 + $0xb4] sm:$0xff]
  %v208 = vld [vmem:[%s0 + $0xbc] sm:$0xf]
  %v209 = vld [vmem:[%s0 + $0xc0] sm:$0xff]
  %v210 = vld [vmem:[%s0 + $0xc8] sm:$0xf]
  %v211 = vld [vmem:[%s0 + $0xcc] sm:$0xff]
  %v212 = vld [vmem:[%s0 + $0xd4] sm:$0xf]
  %v213 = vld [vmem:[%s0 + $0xd8] sm:$0xff]
  %v214 = vld [vmem:[%s0 + $0xe0] sm:$0xf]
  %v215 = vld [vmem:[%s0 + $0xe4] sm:$0xff]
  %v216 = vld [vmem:[%s0 + $0xec] sm:$0xf]
  %v217 = vld [vmem:[%s0 + $0xf0] sm:$0xff]
  %v218 = vld [vmem:[%s0 + $0xf8] sm:$0xf]
  %v219 = vld [vmem:[%s0 + $0xfc] sm:$0xff]
  %v220 = vld [vmem:[%s0 + $0x104] sm:$0xf]
  %v221 = vld [vmem:[%s0 + $0x108] sm:$0xff]
  %v222 = vld [vmem:[%s0 + $0x110] sm:$0xf]
  %v223 = vld [vmem:[%s0 + $0x114] sm:$0xff]
  %v224 = vld [vmem:[%s0 + $0x11c] sm:$0xf]
  %v225 = vld [vmem:[%s0 + $0x120] sm:$0xff]
  %v226 = vld [vmem:[%s0 + $0x128] sm:$0xf]
  %v227 = vld [vmem:[%s0 + $0x12c] sm:$0xff]
  %v228 = vld [vmem:[%s0 + $0x134] sm:$0xf]
  %v229 = vld [vmem:[%s0 + $0x138] sm:$0xff]
  %v230 = vld [vmem:[%s0 + $0x140] sm:$0xf]
  %v231 = vld [vmem:[%s0 + $0x144] sm:$0xff]
  %v232 = vld [vmem:[%s0 + $0x14c] sm:$0xf]
  %v233 = vld [vmem:[%s0 + $0x150] sm:$0xff]
  %v234 = vld [vmem:[%s0 + $0x158] sm:$0xf]
  %v235 = vld [vmem:[%s0 + $0x15c] sm:$0xff]
  %v236 = vld [vmem:[%s0 + $0x164] sm:$0xf]
  %v237 = vld [vmem:[%s0 + $0x168] sm:$0xff]
  %v238 = vld [vmem:[%s0 + $0x170] sm:$0xf]
  %v239 = vld [vmem:[%s0 + $0x174] sm:$0xff]
  %v240 = vld [vmem:[%s0 + $0x17c] sm:$0xf]
  %v241 = vld [vmem:[%s1] sm:$0xff]
  %v242 = vld [vmem:[%s1 + $0x8] sm:$0xff]
  %v243 = vld [vmem:[%s1 + $0x10] sm:$0xff]
  %v244 = vld [vmem:[%s1 + $0x18] sm:$0xff]
  %v245 = vld [vmem:[%s1 + $0x20] sm:$0xff]
  %v246 = vld [vmem:[%s1 + $0x28] sm:$0xff]
  %v247 = vld [vmem:[%s1 + $0x30] sm:$0xff]
  %v248 = vld [vmem:[%s1 + $0x38] sm:$0xff]
  %v249 = vld [vmem:[%s1 + $0x40] sm:$0xff]
  %v250 = vld [vmem:[%s1 + $0x48] sm:$0xff]
  %v251 = vld [vmem:[%s1 + $0x50] sm:$0xff]
  %v252 = vld [vmem:[%s1 + $0x58] sm:$0xff]
  %v253 = vld [vmem:[%s1 + $0x60] sm:$0xff]
  %v254 = vld [vmem:[%s1 + $0x68] sm:$0xff]
  %v255 = vld [vmem:[%s1 + $0x70] sm:$0xff]
  %v256 = vld [vmem:[%s1 + $0x78] sm:$0xff]
  %v257 = vld [vmem:[%s1 + $0x80] sm:$0xff]
  %v258 = vld [vmem:[%s1 + $0x88] sm:$0xff]
  %v259 = vld [vmem:[%s1 + $0x90] sm:$0xff]
  %v260 = vld [vmem:[%s1 + $0x98] sm:$0xff]
  %v261 = vld [vmem:[%s1 + $0xa0] sm:$0xff]
  %v262 = vld [vmem:[%s1 + $0xa8] sm:$0xff]
  %v263 = vld [vmem:[%s1 + $0xb0] sm:$0xff]
  %v264 = vld [vmem:[%s1 + $0xb8] sm:$0xff]
  %v265 = vld [vmem:[%s1 + $0xc0] sm:$0xff]
  %v266 = vld [vmem:[%s1 + $0xc8] sm:$0xff]
  %v267 = vld [vmem:[%s1 + $0xd0] sm:$0xff]
  %v268 = vld [vmem:[%s1 + $0xd8] sm:$0xff]
  %v269 = vld [vmem:[%s1 + $0xe0] sm:$0xff]
  %v270 = vld [vmem:[%s1 + $0xe8] sm:$0xff]
  %v271 = vld [vmem:[%s1 + $0xf0] sm:$0xff]
  %v272 = vld [vmem:[%s1 + $0xf8] sm:$0xff]
  %v273 = vpack.c.bf16 %v242, %v241
  %v274 = vpack.c.bf16 %v244, %v243
  %v275 = vpack.c.bf16 %v246, %v245
  %v276 = vpack.c.bf16 %v248, %v247
  %v277 = vpack.c.bf16 %v250, %v249
  %v278 = vpack.c.bf16 %v252, %v251
  %v279 = vpack.c.bf16 %v254, %v253
  %v280 = vpack.c.bf16 %v256, %v255
  %v281 = vpack.c.bf16 %v258, %v257
  %v282 = vpack.c.bf16 %v260, %v259
  %v283 = vpack.c.bf16 %v262, %v261
  %v284 = vpack.c.bf16 %v264, %v263
  %v285 = vpack.c.bf16 %v266, %v265
  %v286 = vpack.c.bf16 %v268, %v267
  %v287 = vpack.c.bf16 %v270, %v269
  %v288 = vpack.c.bf16 %v272, %v271
  %v289 = vld [vmem:[%s2] sm:$0xff]
  %v290 = vld [vmem:[%s2 + $0x8] sm:$0xff]
  %v291 = vld [vmem:[%s2 + $0x10] sm:$0xff]
  %v292 = vld [vmem:[%s2 + $0x18] sm:$0xff]
  %v293 = vld [vmem:[%s2 + $0x20] sm:$0xff]
  %v294 = vld [vmem:[%s2 + $0x28] sm:$0xff]
  %v295 = vld [vmem:[%s2 + $0x30] sm:$0xff]
  %v296 = vld [vmem:[%s2 + $0x38] sm:$0xff]
  %v297 = vld [vmem:[%s2 + $0x40] sm:$0xff]
  %v298 = vld [vmem:[%s2 + $0x48] sm:$0xff]
  %v299 = vld [vmem:[%s2 + $0x50] sm:$0xff]
  %v300 = vld [vmem:[%s2 + $0x58] sm:$0xff]
  %v301 = vld [vmem:[%s2 + $0x60] sm:$0xff]
  %v302 = vld [vmem:[%s2 + $0x68] sm:$0xff]
  %v303 = vld [vmem:[%s2 + $0x70] sm:$0xff]
  %v304 = vld [vmem:[%s2 + $0x78] sm:$0xff]
  %v305 = vld [vmem:[%s2 + $0x80] sm:$0xff]
  %v306 = vld [vmem:[%s2 + $0x88] sm:$0xff]
  %v307 = vld [vmem:[%s2 + $0x90] sm:$0xff]
  %v308 = vld [vmem:[%s2 + $0x98] sm:$0xff]
  %v309 = vld [vmem:[%s2 + $0xa0] sm:$0xff]
  %v310 = vld [vmem:[%s2 + $0xa8] sm:$0xff]
  %v311 = vld [vmem:[%s2 + $0xb0] sm:$0xff]
  %v312 = vld [vmem:[%s2 + $0xb8] sm:$0xff]
  %v313 = vld [vmem:[%s2 + $0xc0] sm:$0xff]
  %v314 = vld [vmem:[%s2 + $0xc8] sm:$0xff]
  %v315 = vld [vmem:[%s2 + $0xd0] sm:$0xff]
  %v316 = vld [vmem:[%s2 + $0xd8] sm:$0xff]
  %v317 = vld [vmem:[%s2 + $0xe0] sm:$0xff]
  %v318 = vld [vmem:[%s2 + $0xe8] sm:$0xff]
  %v319 = vld [vmem:[%s2 + $0xf0] sm:$0xff]
  %v320 = vld [vmem:[%s2 + $0xf8] sm:$0xff]
  %v321 = vld [vmem:[%s2 + $0x100] sm:$0xff]
  %v322 = vld [vmem:[%s2 + $0x108] sm:$0xff]
  %v323 = vld [vmem:[%s2 + $0x110] sm:$0xff]
  %v324 = vld [vmem:[%s2 + $0x118] sm:$0xff]
  %v325 = vld [vmem:[%s2 + $0x120] sm:$0xff]
  %v326 = vld [vmem:[%s2 + $0x128] sm:$0xff]
  %v327 = vld [vmem:[%s2 + $0x130] sm:$0xff]
  %v328 = vld [vmem:[%s2 + $0x138] sm:$0xff]
  %v329 = vld [vmem:[%s2 + $0x140] sm:$0xff]
  %v330 = vld [vmem:[%s2 + $0x148] sm:$0xff]
  %v331 = vld [vmem:[%s2 + $0x150] sm:$0xff]
  %v332 = vld [vmem:[%s2 + $0x158] sm:$0xff]
  %v333 = vld [vmem:[%s2 + $0x160] sm:$0xff]
  %v334 = vld [vmem:[%s2 + $0x168] sm:$0xff]
  %v335 = vld [vmem:[%s2 + $0x170] sm:$0xff]
  %v336 = vld [vmem:[%s2 + $0x178] sm:$0xff]
  %v337 = vpack.c.bf16 %v290, %v289
  %v338 = vpack.c.bf16 %v292, %v291
  %v339 = vpack.c.bf16 %v294, %v293
  %v340 = vpack.c.bf16 %v296, %v295
  %v341 = vpack.c.bf16 %v298, %v297
  %v342 = vpack.c.bf16 %v300, %v299
  %v343 = vpack.c.bf16 %v302, %v301
  %v344 = vpack.c.bf16 %v304, %v303
  %v345 = vpack.c.bf16 %v306, %v305
  %v346 = vpack.c.bf16 %v308, %v307
  %v347 = vpack.c.bf16 %v310, %v309
  %v348 = vpack.c.bf16 %v312, %v311
  %v349 = vpack.c.bf16 %v314, %v313
  %v350 = vpack.c.bf16 %v316, %v315
  %v351 = vpack.c.bf16 %v318, %v317
  %v352 = vpack.c.bf16 %v320, %v319
  %v353 = vpack.c.bf16 %v322, %v321
  %v354 = vpack.c.bf16 %v324, %v323
  %v355 = vpack.c.bf16 %v326, %v325
  %v356 = vpack.c.bf16 %v328, %v327
  %v357 = vpack.c.bf16 %v330, %v329
  %v358 = vpack.c.bf16 %v332, %v331
  %v359 = vpack.c.bf16 %v334, %v333
  %v360 = vpack.c.bf16 %v336, %v335
  %v425 = vunpack.c.l.b16 %v177
  %v426 = vunpack.c.h.b16 %v177
  %v427 = vunpack.c.l.b16 %v178
  %v428 = vunpack.c.l.b16 %v179
  %v429 = vunpack.c.h.b16 %v179
  %v430 = vunpack.c.l.b16 %v180
  %v431 = vunpack.c.l.b16 %v181
  %v432 = vunpack.c.h.b16 %v181
  %v433 = vunpack.c.l.b16 %v182
  %v434 = vunpack.c.l.b16 %v183
  %v435 = vunpack.c.h.b16 %v183
  %v436 = vunpack.c.l.b16 %v184
  %v437 = vunpack.c.l.b16 %v185
  %v438 = vunpack.c.h.b16 %v185
  %v439 = vunpack.c.l.b16 %v186
  %v440 = vunpack.c.l.b16 %v187
  %v441 = vunpack.c.h.b16 %v187
  %v442 = vunpack.c.l.b16 %v188
  %v443 = vunpack.c.l.b16 %v189
  %v444 = vunpack.c.h.b16 %v189
  %v445 = vunpack.c.l.b16 %v190
  %v446 = vunpack.c.l.b16 %v191
  %v447 = vunpack.c.h.b16 %v191
  %v448 = vunpack.c.l.b16 %v192
  %v449 = vunpack.c.l.b16 %v193
  %v450 = vunpack.c.h.b16 %v193
  %v451 = vunpack.c.l.b16 %v194
  %v452 = vunpack.c.l.b16 %v195
  %v453 = vunpack.c.h.b16 %v195
  %v454 = vunpack.c.l.b16 %v196
  %v455 = vunpack.c.l.b16 %v197
  %v456 = vunpack.c.h.b16 %v197
  %v457 = vunpack.c.l.b16 %v198
  %v458 = vunpack.c.l.b16 %v199
  %v459 = vunpack.c.h.b16 %v199
  %v460 = vunpack.c.l.b16 %v200
  %v461 = vunpack.c.l.b16 %v201
  %v462 = vunpack.c.h.b16 %v201
  %v463 = vunpack.c.l.b16 %v202
  %v464 = vunpack.c.l.b16 %v203
  %v465 = vunpack.c.h.b16 %v203
  %v466 = vunpack.c.l.b16 %v204
  %v467 = vunpack.c.l.b16 %v205
  %v468 = vunpack.c.h.b16 %v205
  %v469 = vunpack.c.l.b16 %v206
  %v470 = vunpack.c.l.b16 %v207
  %v471 = vunpack.c.h.b16 %v207
  %v472 = vunpack.c.l.b16 %v208
  %v473 = vunpack.c.l.b16 %v209
  %v474 = vunpack.c.h.b16 %v209
  %v475 = vunpack.c.l.b16 %v210
  %v476 = vunpack.c.l.b16 %v211
  %v477 = vunpack.c.h.b16 %v211
  %v478 = vunpack.c.l.b16 %v212
  %v479 = vunpack.c.l.b16 %v213
  %v480 = vunpack.c.h.b16 %v213
  %v481 = vunpack.c.l.b16 %v214
  %v482 = vunpack.c.l.b16 %v215
  %v483 = vunpack.c.h.b16 %v215
  %v484 = vunpack.c.l.b16 %v216
  %v485 = vunpack.c.l.b16 %v217
  %v486 = vunpack.c.h.b16 %v217
  %v487 = vunpack.c.l.b16 %v218
  %v488 = vunpack.c.l.b16 %v219
  %v489 = vunpack.c.h.b16 %v219
  %v490 = vunpack.c.l.b16 %v220
  %v491 = vunpack.c.l.b16 %v221
  %v492 = vunpack.c.h.b16 %v221
  %v493 = vunpack.c.l.b16 %v222
  %v494 = vunpack.c.l.b16 %v223
  %v495 = vunpack.c.h.b16 %v223
  %v496 = vunpack.c.l.b16 %v224
  %v497 = vunpack.c.l.b16 %v225
  %v498 = vunpack.c.h.b16 %v225
  %v499 = vunpack.c.l.b16 %v226
  %v500 = vunpack.c.l.b16 %v227
  %v501 = vunpack.c.h.b16 %v227
  %v502 = vunpack.c.l.b16 %v228
  %v503 = vunpack.c.l.b16 %v229
  %v504 = vunpack.c.h.b16 %v229
  %v505 = vunpack.c.l.b16 %v230
  %v506 = vunpack.c.l.b16 %v231
  %v507 = vunpack.c.h.b16 %v231
  %v508 = vunpack.c.l.b16 %v232
  %v509 = vunpack.c.l.b16 %v233
  %v510 = vunpack.c.h.b16 %v233
  %v511 = vunpack.c.l.b16 %v234
  %v512 = vunpack.c.l.b16 %v235
  %v513 = vunpack.c.h.b16 %v235
  %v514 = vunpack.c.l.b16 %v236
  %v515 = vunpack.c.l.b16 %v237
  %v516 = vunpack.c.h.b16 %v237
  %v517 = vunpack.c.l.b16 %v238
  %v518 = vunpack.c.l.b16 %v239
  %v519 = vunpack.c.h.b16 %v239
  %v520 = vunpack.c.l.b16 %v240
  %v521 = vpack.c.b16 %v428, %v425
  %v522 = vpack.c.b16 %v429, %v426
  %v523 = vpack.c.b16 %v430, %v427
  %v524 = vpack.c.b16 %v434, %v431
  %v525 = vpack.c.b16 %v435, %v432
  %v526 = vpack.c.b16 %v436, %v433
  %v527 = vpack.c.b16 %v440, %v437
  %v528 = vpack.c.b16 %v441, %v438
  %v529 = vpack.c.b16 %v442, %v439
  %v530 = vpack.c.b16 %v446, %v443
  %v531 = vpack.c.b16 %v447, %v444
  %v532 = vpack.c.b16 %v448, %v445
  %v533 = vpack.c.b16 %v452, %v449
  %v534 = vpack.c.b16 %v453, %v450
  %v535 = vpack.c.b16 %v454, %v451
  %v536 = vpack.c.b16 %v458, %v455
  %v537 = vpack.c.b16 %v459, %v456
  %v538 = vpack.c.b16 %v460, %v457
  %v539 = vpack.c.b16 %v464, %v461
  %v540 = vpack.c.b16 %v465, %v462
  %v541 = vpack.c.b16 %v466, %v463
  %v542 = vpack.c.b16 %v470, %v467
  %v543 = vpack.c.b16 %v471, %v468
  %v544 = vpack.c.b16 %v472, %v469
  %v545 = vpack.c.b16 %v476, %v473
  %v546 = vpack.c.b16 %v477, %v474
  %v547 = vpack.c.b16 %v478, %v475
  %v548 = vpack.c.b16 %v482, %v479
  %v549 = vpack.c.b16 %v483, %v480
  %v550 = vpack.c.b16 %v484, %v481
  %v551 = vpack.c.b16 %v488, %v485
  %v552 = vpack.c.b16 %v489, %v486
  %v553 = vpack.c.b16 %v490, %v487
  %v554 = vpack.c.b16 %v494, %v491
  %v555 = vpack.c.b16 %v495, %v492
  %v556 = vpack.c.b16 %v496, %v493
  %v557 = vpack.c.b16 %v500, %v497
  %v558 = vpack.c.b16 %v501, %v498
  %v559 = vpack.c.b16 %v502, %v499
  %v560 = vpack.c.b16 %v506, %v503
  %v561 = vpack.c.b16 %v507, %v504
  %v562 = vpack.c.b16 %v508, %v505
  %v563 = vpack.c.b16 %v512, %v509
  %v564 = vpack.c.b16 %v513, %v510
  %v565 = vpack.c.b16 %v514, %v511
  %v566 = vpack.c.b16 %v518, %v515
  %v567 = vpack.c.b16 %v519, %v516
  %v568 = vpack.c.b16 %v520, %v517
  %617 = vmatprep.subr.bf16.mxu0 0
  %618 = vmatpush1.bf16.msra.mxu0 %v337
  %619 = vmatprep.subr.bf16.mxu0 0
  %620 = vmatpush1.bf16.msra.mxu0 %v338
  %621 = vmatprep.subr.bf16.mxu0 0
  %622 = vmatpush1.bf16.msra.mxu0 %v339
  %623 = vmatprep.subr.bf16.mxu0 0
  %624 = vmatpush1.bf16.msra.mxu0 %v340
  %625 = vmatprep.subr.bf16.mxu0 0
  %626 = vmatpush1.bf16.msra.mxu0 %v341
  %627 = vmatprep.subr.bf16.mxu0 0
  %628 = vmatpush1.bf16.msra.mxu0 %v342
  %629 = vmatprep.subr.bf16.mxu0 0
  %630 = vmatpush1.bf16.msra.mxu0 %v343
  %631 = vmatprep.subr.bf16.mxu0 0
  %632 = vmatpush1.bf16.msra.mxu0 %v344
  %633 = vmatprep.subr.bf16.mxu0 0
  %634 = vmatpush1.bf16.msra.mxu0 %v345
  %635 = vmatprep.subr.bf16.mxu0 0
  %636 = vmatpush1.bf16.msra.mxu0 %v346
  %637 = vmatprep.subr.bf16.mxu0 0
  %638 = vmatpush1.bf16.msra.mxu0 %v347
  %639 = vmatprep.subr.bf16.mxu0 0
  %640 = vmatpush1.bf16.msra.mxu0 %v348
  %641 = vmatprep.subr.bf16.mxu0 0
  %642 = vmatpush1.bf16.msra.mxu0 %v349
  %643 = vmatprep.subr.bf16.mxu0 0
  %644 = vmatpush1.bf16.msra.mxu0 %v350
  %645 = vmatprep.subr.bf16.mxu0 0
  %646 = vmatpush1.bf16.msra.mxu0 %v351
  %647 = vmatprep.subr.bf16.mxu0 0
  %648 = vmatpush1.bf16.msra.mxu0 %v352
  %649 = vmatprep.mubr.bf16.mxu0 %v522
  %650 = vmatmul.mubr.bf16.gmra.mrb[0].mxu0 %v521
  %v651 = vpop.f32.mrb[0].mxu0
  %v652 = vadd.f32 0.0, %v651
  %v653 = vpop.f32.mrb[0].mxu0
  %v654 = vpop.f32.mrb[0].mxu0
  %v655 = vadd.f32 0.0, %v654
  %v656 = vpop.f32.mrb[0].mxu0
  %657 = vmatprep.mubr.bf16.mxu0 %v525
  %658 = vmatmul.mubr.bf16.gmra.mrb[0].mxu0 %v524
  %v659 = vpop.f32.mrb[0].mxu0
  %v660 = vadd.f32 0.0, %v659
  %v661 = vpop.f32.mrb[0].mxu0
  %v662 = vpop.f32.mrb[0].mxu0
  %v663 = vadd.f32 0.0, %v662
  %v664 = vpop.f32.mrb[0].mxu0
  %665 = vmatprep.mubr.bf16.mxu0 %v528
  %666 = vmatmul.mubr.bf16.gmra.mrb[0].mxu0 %v527
  %v667 = vpop.f32.mrb[0].mxu0
  %v668 = vadd.f32 0.0, %v667
  %v669 = vpop.f32.mrb[0].mxu0
  %v670 = vpop.f32.mrb[0].mxu0
  %v671 = vadd.f32 0.0, %v670
  %v672 = vpop.f32.mrb[0].mxu0
  %673 = vmatprep.mubr.bf16.mxu0 %v531
  %674 = vmatmul.mubr.bf16.gmra.mrb[0].mxu0 %v530
  %v675 = vpop.f32.mrb[0].mxu0
  %v676 = vadd.f32 0.0, %v675
  %v677 = vpop.f32.mrb[0].mxu0
  %v678 = vpop.f32.mrb[0].mxu0
  %v679 = vadd.f32 0.0, %v678
  %v680 = vpop.f32.mrb[0].mxu0
  %681 = vmatprep.mubr.bf16.mxu0 %v534
  %682 = vmatmul.mubr.bf16.gmra.mrb[0].mxu0 %v533
  %v683 = vpop.f32.mrb[0].mxu0
  %v684 = vadd.f32 0.0, %v683
  %v685 = vpop.f32.mrb[0].mxu0
  %v686 = vpop.f32.mrb[0].mxu0
  %v687 = vadd.f32 0.0, %v686
  %v688 = vpop.f32.mrb[0].mxu0
  %689 = vmatprep.mubr.bf16.mxu0 %v537
  %690 = vmatmul.mubr.bf16.gmra.mrb[0].mxu0 %v536
  %v691 = vpop.f32.mrb[0].mxu0
  %v692 = vadd.f32 0.0, %v691
  %v693 = vpop.f32.mrb[0].mxu0
  %v694 = vpop.f32.mrb[0].mxu0
  %v695 = vadd.f32 0.0, %v694
  %v696 = vpop.f32.mrb[0].mxu0
  %697 = vmatprep.mubr.bf16.mxu0 %v540
  %698 = vmatmul.mubr.bf16.gmra.mrb[0].mxu0 %v539
  %v699 = vpop.f32.mrb[0].mxu0
  %v700 = vadd.f32 0.0, %v699
  %v701 = vpop.f32.mrb[0].mxu0
  %v702 = vpop.f32.mrb[0].mxu0
  %v703 = vadd.f32 0.0, %v702
  %v704 = vpop.f32.mrb[0].mxu0
  %705 = vmatprep.mubr.bf16.mxu0 %v543
  %706 = vmatmul.mubr.bf16.gmra.mrb[0].mxu0 %v542
  %v707 = vpop.f32.mrb[0].mxu0
  %v708 = vadd.f32 0.0, %v707
  %v709 = vpop.f32.mrb[0].mxu0
  %v710 = vpop.f32.mrb[0].mxu0
  %v711 = vadd.f32 0.0, %v710
  %v712 = vpop.f32.mrb[0].mxu0
  %713 = vmatprep.mubr.bf16.mxu0 %v546
  %714 = vmatmul.mubr.bf16.gmra.mrb[0].mxu0 %v545
  %v715 = vpop.f32.mrb[0].mxu0
  %v716 = vadd.f32 0.0, %v715
  %v717 = vpop.f32.mrb[0].mxu0
  %v718 = vpop.f32.mrb[0].mxu0
  %v719 = vadd.f32 0.0, %v718
  %v720 = vpop.f32.mrb[0].mxu0
  %721 = vmatprep.mubr.bf16.mxu0 %v549
  %722 = vmatmul.mubr.bf16.gmra.mrb[0].mxu0 %v548
  %v723 = vpop.f32.mrb[0].mxu0
  %v724 = vadd.f32 0.0, %v723
  %v725 = vpop.f32.mrb[0].mxu0
  %v726 = vpop.f32.mrb[0].mxu0
  %v727 = vadd.f32 0.0, %v726
  %v728 = vpop.f32.mrb[0].mxu0
  %729 = vmatprep.mubr.bf16.mxu0 %v552
  %730 = vmatmul.mubr.bf16.gmra.mrb[0].mxu0 %v551
  %v731 = vpop.f32.mrb[0].mxu0
  %v732 = vadd.f32 0.0, %v731
  %v733 = vpop.f32.mrb[0].mxu0
  %v734 = vpop.f32.mrb[0].mxu0
  %v735 = vadd.f32 0.0, %v734
  %v736 = vpop.f32.mrb[0].mxu0
  %737 = vmatprep.mubr.bf16.mxu0 %v555
  %738 = vmatmul.mubr.bf16.gmra.mrb[0].mxu0 %v554
  %v739 = vpop.f32.mrb[0].mxu0
  %v740 = vadd.f32 0.0, %v739
  %v741 = vpop.f32.mrb[0].mxu0
  %v742 = vpop.f32.mrb[0].mxu0
  %v743 = vadd.f32 0.0, %v742
  %v744 = vpop.f32.mrb[0].mxu0
  %745 = vmatprep.mubr.bf16.mxu0 %v558
  %746 = vmatmul.mubr.bf16.gmra.mrb[0].mxu0 %v557
  %v747 = vpop.f32.mrb[0].mxu0
  %v748 = vadd.f32 0.0, %v747
  %v749 = vpop.f32.mrb[0].mxu0
  %v750 = vpop.f32.mrb[0].mxu0
  %v751 = vadd.f32 0.0, %v750
  %v752 = vpop.f32.mrb[0].mxu0
  %753 = vmatprep.mubr.bf16.mxu0 %v561
  %754 = vmatmul.mubr.bf16.gmra.mrb[0].mxu0 %v560
  %v755 = vpop.f32.mrb[0].mxu0
  %v756 = vadd.f32 0.0, %v755
  %v757 = vpop.f32.mrb[0].mxu0
  %v758 = vpop.f32.mrb[0].mxu0
  %v759 = vadd.f32 0.0, %v758
  %v760 = vpop.f32.mrb[0].mxu0
  %761 = vmatprep.mubr.bf16.mxu0 %v564
  %762 = vmatmul.mubr.bf16.gmra.mrb[0].mxu0 %v563
  %v763 = vpop.f32.mrb[0].mxu0
  %v764 = vadd.f32 0.0, %v763
  %v765 = vpop.f32.mrb[0].mxu0
  %v766 = vpop.f32.mrb[0].mxu0
  %v767 = vadd.f32 0.0, %v766
  %v768 = vpop.f32.mrb[0].mxu0
  %769 = vmatprep.mubr.bf16.mxu0 %v567
  %770 = vmatmul.mubr.bf16.gmra.mrb[0].mxu0 %v566
  %v771 = vpop.f32.mrb[0].mxu0
  %v772 = vadd.f32 0.0, %v771
  %v773 = vpop.f32.mrb[0].mxu0
  %v774 = vpop.f32.mrb[0].mxu0
  %v775 = vadd.f32 0.0, %v774
  %v776 = vpop.f32.mrb[0].mxu0
  %777 = vdwg.mxu0
  %778 = vmatprep.subr.bf16.mxu0 0
  %779 = vmatpush1.bf16.msra.mxu0 %v353
  %780 = vmatprep.subr.bf16.mxu0 0
  %781 = vmatpush1.bf16.msra.mxu0 %v354
  %782 = vmatprep.subr.bf16.mxu0 0
  %783 = vmatpush1.bf16.msra.mxu0 %v355
  %784 = vmatprep.subr.bf16.mxu0 0
  %785 = vmatpush1.bf16.msra.mxu0 %v356
  %786 = vmatprep.subr.bf16.mxu0 0
  %787 = vmatpush1.bf16.msra.mxu0 %v357
  %788 = vmatprep.subr.bf16.mxu0 0
  %789 = vmatpush1.bf16.msra.mxu0 %v358
  %790 = vmatprep.subr.bf16.mxu0 0
  %791 = vmatpush1.bf16.msra.mxu0 %v359
  %792 = vmatprep.subr.bf16.mxu0 0
  %793 = vmatpush1.bf16.msra.mxu0 %v360
  %794 = vmatprep.subr.bf16.mxu0 0
  %795 = vmatpush1.bf16.msra.mxu0 0
  %796 = vmatprep.subr.bf16.mxu0 0
  %797 = vmatpush1.bf16.msra.mxu0 0
  %798 = vmatprep.subr.bf16.mxu0 0
  %799 = vmatpush1.bf16.msra.mxu0 0
  %800 = vmatprep.subr.bf16.mxu0 0
  %801 = vmatpush1.bf16.msra.mxu0 0
  %802 = vmatprep.subr.bf16.mxu0 0
  %803 = vmatpush1.bf16.msra.mxu0 0
  %804 = vmatprep.subr.bf16.mxu0 0
  %805 = vmatpush1.bf16.msra.mxu0 0
  %806 = vmatprep.subr.bf16.mxu0 0
  %807 = vmatpush1.bf16.msra.mxu0 0
  %808 = vmatprep.subr.bf16.mxu0 0
  %809 = vmatpush1.bf16.msra.mxu0 0
  %810 = vmatprep.mubr.bf16.mxu0 0
  %811 = vmatmul.mubr.bf16.gmra.mrb[0].mxu0 %v523
  %v812 = vpop.f32.mrb[0].mxu0
  %v813 = vadd.f32 %v652, %v812
  %v814 = vpop.f32.mrb[0].mxu0
  %v815 = vpop.f32.mrb[0].mxu0
  %v816 = vadd.f32 %v655, %v815
  %v817 = vpop.f32.mrb[0].mxu0
  %818 = vmatprep.mubr.bf16.mxu0 0
  %819 = vmatmul.mubr.bf16.gmra.mrb[0].mxu0 %v526
  %v820 = vpop.f32.mrb[0].mxu0
  %v821 = vadd.f32 %v660, %v820
  %v822 = vpop.f32.mrb[0].mxu0
  %v823 = vpop.f32.mrb[0].mxu0
  %v824 = vadd.f32 %v663, %v823
  %v825 = vpop.f32.mrb[0].mxu0
  %826 = vmatprep.mubr.bf16.mxu0 0
  %827 = vmatmul.mubr.bf16.gmra.mrb[0].mxu0 %v529
  %v828 = vpop.f32.mrb[0].mxu0
  %v829 = vadd.f32 %v668, %v828
  %v830 = vpop.f32.mrb[0].mxu0
  %v831 = vpop.f32.mrb[0].mxu0
  %v832 = vadd.f32 %v671, %v831
  %v833 = vpop.f32.mrb[0].mxu0
  %834 = vmatprep.mubr.bf16.mxu0 0
  %835 = vmatmul.mubr.bf16.gmra.mrb[0].mxu0 %v532
  %v836 = vpop.f32.mrb[0].mxu0
  %v837 = vadd.f32 %v676, %v836
  %v838 = vpop.f32.mrb[0].mxu0
  %v839 = vpop.f32.mrb[0].mxu0
  %v840 = vadd.f32 %v679, %v839
  %v841 = vpop.f32.mrb[0].mxu0
  %842 = vmatprep.mubr.bf16.mxu0 0
  %843 = vmatmul.mubr.bf16.gmra.mrb[0].mxu0 %v535
  %v844 = vpop.f32.mrb[0].mxu0
  %v845 = vadd.f32 %v684, %v844
  %v846 = vpop.f32.mrb[0].mxu0
  %v847 = vpop.f32.mrb[0].mxu0
  %v848 = vadd.f32 %v687, %v847
  %v849 = vpop.f32.mrb[0].mxu0
  %850 = vmatprep.mubr.bf16.mxu0 0
  %851 = vmatmul.mubr.bf16.gmra.mrb[0].mxu0 %v538
  %v852 = vpop.f32.mrb[0].mxu0
  %v853 = vadd.f32 %v692, %v852
  %v854 = vpop.f32.mrb[0].mxu0
  %v855 = vpop.f32.mrb[0].mxu0
  %v856 = vadd.f32 %v695, %v855
  %v857 = vpop.f32.mrb[0].mxu0
  %858 = vmatprep.mubr.bf16.mxu0 0
  %859 = vmatmul.mubr.bf16.gmra.mrb[0].mxu0 %v541
  %v860 = vpop.f32.mrb[0].mxu0
  %v861 = vadd.f32 %v700, %v860
  %v862 = vpop.f32.mrb[0].mxu0
  %v863 = vpop.f32.mrb[0].mxu0
  %v864 = vadd.f32 %v703, %v863
  %v865 = vpop.f32.mrb[0].mxu0
  %866 = vmatprep.mubr.bf16.mxu0 0
  %867 = vmatmul.mubr.bf16.gmra.mrb[0].mxu0 %v544
  %v868 = vpop.f32.mrb[0].mxu0
  %v869 = vadd.f32 %v708, %v868
  %v870 = vpop.f32.mrb[0].mxu0
  %v871 = vpop.f32.mrb[0].mxu0
  %v872 = vadd.f32 %v711, %v871
  %v873 = vpop.f32.mrb[0].mxu0
  %874 = vmatprep.mubr.bf16.mxu0 0
  %875 = vmatmul.mubr.bf16.gmra.mrb[0].mxu0 %v547
  %v876 = vpop.f32.mrb[0].mxu0
  %v877 = vadd.f32 %v716, %v876
  %v878 = vpop.f32.mrb[0].mxu0
  %v879 = vpop.f32.mrb[0].mxu0
  %v880 = vadd.f32 %v719, %v879
  %v881 = vpop.f32.mrb[0].mxu0
  %882 = vmatprep.mubr.bf16.mxu0 0
  %883 = vmatmul.mubr.bf16.gmra.mrb[0].mxu0 %v550
  %v884 = vpop.f32.mrb[0].mxu0
  %v885 = vadd.f32 %v724, %v884
  %v886 = vpop.f32.mrb[0].mxu0
  %v887 = vpop.f32.mrb[0].mxu0
  %v888 = vadd.f32 %v727, %v887
  %v889 = vpop.f32.mrb[0].mxu0
  %890 = vmatprep.mubr.bf16.mxu0 0
  %891 = vmatmul.mubr.bf16.gmra.mrb[0].mxu0 %v553
  %v892 = vpop.f32.mrb[0].mxu0
  %v893 = vadd.f32 %v732, %v892
  %v894 = vpop.f32.mrb[0].mxu0
  %v895 = vpop.f32.mrb[0].mxu0
  %v896 = vadd.f32 %v735, %v895
  %v897 = vpop.f32.mrb[0].mxu0
  %898 = vmatprep.mubr.bf16.mxu0 0
  %899 = vmatmul.mubr.bf16.gmra.mrb[0].mxu0 %v556
  %v900 = vpop.f32.mrb[0].mxu0
  %v901 = vadd.f32 %v740, %v900
  %v902 = vpop.f32.mrb[0].mxu0
  %v903 = vpop.f32.mrb[0].mxu0
  %v904 = vadd.f32 %v743, %v903
  %v905 = vpop.f32.mrb[0].mxu0
  %906 = vmatprep.mubr.bf16.mxu0 0
  %907 = vmatmul.mubr.bf16.gmra.mrb[0].mxu0 %v559
  %v908 = vpop.f32.mrb[0].mxu0
  %v909 = vadd.f32 %v748, %v908
  %v910 = vpop.f32.mrb[0].mxu0
  %v911 = vpop.f32.mrb[0].mxu0
  %v912 = vadd.f32 %v751, %v911
  %v913 = vpop.f32.mrb[0].mxu0
  %914 = vmatprep.mubr.bf16.mxu0 0
  %915 = vmatmul.mubr.bf16.gmra.mrb[0].mxu0 %v562
  %v916 = vpop.f32.mrb[0].mxu0
  %v917 = vadd.f32 %v756, %v916
  %v918 = vpop.f32.mrb[0].mxu0
  %v919 = vpop.f32.mrb[0].mxu0
  %v920 = vadd.f32 %v759, %v919
  %v921 = vpop.f32.mrb[0].mxu0
  %922 = vmatprep.mubr.bf16.mxu0 0
  %923 = vmatmul.mubr.bf16.gmra.mrb[0].mxu0 %v565
  %v924 = vpop.f32.mrb[0].mxu0
  %v925 = vadd.f32 %v764, %v924
  %v926 = vpop.f32.mrb[0].mxu0
  %v927 = vpop.f32.mrb[0].mxu0
  %v928 = vadd.f32 %v767, %v927
  %v929 = vpop.f32.mrb[0].mxu0
  %930 = vmatprep.mubr.bf16.mxu0 0
  %931 = vmatmul.mubr.bf16.gmra.mrb[0].mxu0 %v568
  %v932 = vpop.f32.mrb[0].mxu0
  %v933 = vadd.f32 %v772, %v932
  %v934 = vpop.f32.mrb[0].mxu0
  %v935 = vpop.f32.mrb[0].mxu0
  %v936 = vadd.f32 %v775, %v935
  %v937 = vpop.f32.mrb[0].mxu0
  %938 = vdwg.mxu0
  %939 = vxpose.xlu0.c.b16.start [1/8] %v521, 128
  %940 = vxpose.xlu0.c.b16.cont [2/8] %v524, 128
  %941 = vxpose.xlu0.c.b16.cont [3/8] %v527, 128
  %942 = vxpose.xlu0.c.b16.cont [4/8] %v530, 128
  %943 = vxpose.xlu0.c.b16.cont [5/8] %v533, 128
  %944 = vxpose.xlu0.c.b16.cont [6/8] %v536, 128
  %945 = vxpose.xlu0.c.b16.cont [7/8] %v539, 128
  %946 = vxpose.xlu0.c.b16.end [8/8] %v542, 128
  %v947 = vpop.trf.xlu0
  %v948 = vpop.trf.xlu0
  %v949 = vpop.trf.xlu0
  %v950 = vpop.trf.xlu0
  %v951 = vpop.trf.xlu0
  %v952 = vpop.trf.xlu0
  %v953 = vpop.trf.xlu0
  %v954 = vpop.trf.xlu0
  %955 = vxpose.xlu0.c.b16.start [1/8] %v522, 128
  %956 = vxpose.xlu0.c.b16.cont [2/8] %v525, 128
  %957 = vxpose.xlu0.c.b16.cont [3/8] %v528, 128
  %958 = vxpose.xlu0.c.b16.cont [4/8] %v531, 128
  %959 = vxpose.xlu0.c.b16.cont [5/8] %v534, 128
  %960 = vxpose.xlu0.c.b16.cont [6/8] %v537, 128
  %961 = vxpose.xlu0.c.b16.cont [7/8] %v540, 128
  %962 = vxpose.xlu0.c.b16.end [8/8] %v543, 128
  %v963 = vpop.trf.xlu0
  %v964 = vpop.trf.xlu0
  %v965 = vpop.trf.xlu0
  %v966 = vpop.trf.xlu0
  %v967 = vpop.trf.xlu0
  %v968 = vpop.trf.xlu0
  %v969 = vpop.trf.xlu0
  %v970 = vpop.trf.xlu0
  %971 = vxpose.xlu0.c.b16.start [1/8] %v523, 128
  %972 = vxpose.xlu0.c.b16.cont [2/8] %v526, 128
  %973 = vxpose.xlu0.c.b16.cont [3/8] %v529, 128
  %974 = vxpose.xlu0.c.b16.cont [4/8] %v532, 128
  %975 = vxpose.xlu0.c.b16.cont [5/8] %v535, 128
  %976 = vxpose.xlu0.c.b16.cont [6/8] %v538, 128
  %977 = vxpose.xlu0.c.b16.cont [7/8] %v541, 128
  %978 = vxpose.xlu0.c.b16.end [8/8] %v544, 128
  %v979 = vpop.trf.xlu0
  %v980 = vpop.trf.xlu0
  %v981 = vpop.trf.xlu0
  %v982 = vpop.trf.xlu0
  %v983 = vpop.trf.xlu0
  %v984 = vpop.trf.xlu0
  %v985 = vpop.trf.xlu0
  %v986 = vpop.trf.xlu0
  %987 = vxpose.xlu0.c.b16.start [1/8] %v545, 128
  %988 = vxpose.xlu0.c.b16.cont [2/8] %v548, 128
  %989 = vxpose.xlu0.c.b16.cont [3/8] %v551, 128
  %990 = vxpose.xlu0.c.b16.cont [4/8] %v554, 128
  %991 = vxpose.xlu0.c.b16.cont [5/8] %v557, 128
  %992 = vxpose.xlu0.c.b16.cont [6/8] %v560, 128
  %993 = vxpose.xlu0.c.b16.cont [7/8] %v563, 128
  %994 = vxpose.xlu0.c.b16.end [8/8] %v566, 128
  %v995 = vpop.trf.xlu0
  %v996 = vpop.trf.xlu0
  %v997 = vpop.trf.xlu0
  %v998 = vpop.trf.xlu0
  %v999 = vpop.trf.xlu0
  %v1000 = vpop.trf.xlu0
  %v1001 = vpop.trf.xlu0
  %v1002 = vpop.trf.xlu0
  %1003 = vxpose.xlu0.c.b16.start [1/8] %v546, 128
  %1004 = vxpose.xlu0.c.b16.cont [2/8] %v549, 128
  %1005 = vxpose.xlu0.c.b16.cont [3/8] %v552, 128
  %1006 = vxpose.xlu0.c.b16.cont [4/8] %v555, 128
  %1007 = vxpose.xlu0.c.b16.cont [5/8] %v558, 128
  %1008 = vxpose.xlu0.c.b16.cont [6/8] %v561, 128
  %1009 = vxpose.xlu0.c.b16.cont [7/8] %v564, 128
  %1010 = vxpose.xlu0.c.b16.end [8/8] %v567, 128
  %v1011 = vpop.trf.xlu0
  %v1012 = vpop.trf.xlu0
  %v1013 = vpop.trf.xlu0
  %v1014 = vpop.trf.xlu0
  %v1015 = vpop.trf.xlu0
  %v1016 = vpop.trf.xlu0
  %v1017 = vpop.trf.xlu0
  %v1018 = vpop.trf.xlu0
  %1019 = vxpose.xlu0.c.b16.start [1/8] %v547, 128
  %1020 = vxpose.xlu0.c.b16.cont [2/8] %v550, 128
  %1021 = vxpose.xlu0.c.b16.cont [3/8] %v553, 128
  %1022 = vxpose.xlu0.c.b16.cont [4/8] %v556, 128
  %1023 = vxpose.xlu0.c.b16.cont [5/8] %v559, 128
  %1024 = vxpose.xlu0.c.b16.cont [6/8] %v562, 128
  %1025 = vxpose.xlu0.c.b16.cont [7/8] %v565, 128
  %1026 = vxpose.xlu0.c.b16.end [8/8] %v568, 128
  %v1027 = vpop.trf.xlu0
  %v1028 = vpop.trf.xlu0
  %v1029 = vpop.trf.xlu0
  %v1030 = vpop.trf.xlu0
  %v1031 = vpop.trf.xlu0
  %v1032 = vpop.trf.xlu0
  %v1033 = vpop.trf.xlu0
  %v1034 = vpop.trf.xlu0
  %1035 = vmatprep.subr.bf16.mxu0 0
  %1036 = vmatpush1.bf16.msra.mxu0 %v273
  %1037 = vmatprep.subr.bf16.mxu0 0
  %1038 = vmatpush1.bf16.msra.mxu0 %v274
  %1039 = vmatprep.subr.bf16.mxu0 0
  %1040 = vmatpush1.bf16.msra.mxu0 %v275
  %1041 = vmatprep.subr.bf16.mxu0 0
  %1042 = vmatpush1.bf16.msra.mxu0 %v276
  %1043 = vmatprep.subr.bf16.mxu0 0
  %1044 = vmatpush1.bf16.msra.mxu0 %v277
  %1045 = vmatprep.subr.bf16.mxu0 0
  %1046 = vmatpush1.bf16.msra.mxu0 %v278
  %1047 = vmatprep.subr.bf16.mxu0 0
  %1048 = vmatpush1.bf16.msra.mxu0 %v279
  %1049 = vmatprep.subr.bf16.mxu0 0
  %1050 = vmatpush1.bf16.msra.mxu0 %v280
  %1051 = vmatprep.subr.bf16.mxu0 0
  %1052 = vmatpush1.bf16.msra.mxu0 %v281
  %1053 = vmatprep.subr.bf16.mxu0 0
  %1054 = vmatpush1.bf16.msra.mxu0 %v282
  %1055 = vmatprep.subr.bf16.mxu0 0
  %1056 = vmatpush1.bf16.msra.mxu0 %v283
  %1057 = vmatprep.subr.bf16.mxu0 0
  %1058 = vmatpush1.bf16.msra.mxu0 %v284
  %1059 = vmatprep.subr.bf16.mxu0 0
  %1060 = vmatpush1.bf16.msra.mxu0 %v285
  %1061 = vmatprep.subr.bf16.mxu0 0
  %1062 = vmatpush1.bf16.msra.mxu0 %v286
  %1063 = vmatprep.subr.bf16.mxu0 0
  %1064 = vmatpush1.bf16.msra.mxu0 %v287
  %1065 = vmatprep.subr.bf16.mxu0 0
  %1066 = vmatpush1.bf16.msra.mxu0 %v288
  %1067 = vmatprep.mubr.bf16.mxu0 %v995
  %1068 = vmatmul.mubr.bf16.gmra.mrb[0].mxu0 %v947
  %v1069 = vpop.f32.mrb[0].mxu0
  %v1070 = vadd.f32 0.0, %v1069
  %v1071 = vpop.f32.mrb[0].mxu0
  %v1072 = vpop.f32.mrb[0].mxu0
  %v1073 = vadd.f32 0.0, %v1072
  %v1074 = vpop.f32.mrb[0].mxu0
  %1075 = vmatprep.mubr.bf16.mxu0 %v996
  %1076 = vmatmul.mubr.bf16.gmra.mrb[0].mxu0 %v948
  %v1077 = vpop.f32.mrb[0].mxu0
  %v1078 = vadd.f32 0.0, %v1077
  %v1079 = vpop.f32.mrb[0].mxu0
  %v1080 = vpop.f32.mrb[0].mxu0
  %v1081 = vadd.f32 0.0, %v1080
  %v1082 = vpop.f32.mrb[0].mxu0
  %1083 = vmatprep.mubr.bf16.mxu0 %v997
  %1084 = vmatmul.mubr.bf16.gmra.mrb[0].mxu0 %v949
  %v1085 = vpop.f32.mrb[0].mxu0
  %v1086 = vadd.f32 0.0, %v1085
  %v1087 = vpop.f32.mrb[0].mxu0
  %v1088 = vpop.f32.mrb[0].mxu0
  %v1089 = vadd.f32 0.0, %v1088
  %v1090 = vpop.f32.mrb[0].mxu0
  %1091 = vmatprep.mubr.bf16.mxu0 %v998
  %1092 = vmatmul.mubr.bf16.gmra.mrb[0].mxu0 %v950
  %v1093 = vpop.f32.mrb[0].mxu0
  %v1094 = vadd.f32 0.0, %v1093
  %v1095 = vpop.f32.mrb[0].mxu0
  %v1096 = vpop.f32.mrb[0].mxu0
  %v1097 = vadd.f32 0.0, %v1096
  %v1098 = vpop.f32.mrb[0].mxu0
  %1099 = vmatprep.mubr.bf16.mxu0 %v999
  %1100 = vmatmul.mubr.bf16.gmra.mrb[0].mxu0 %v951
  %v1101 = vpop.f32.mrb[0].mxu0
  %v1102 = vadd.f32 0.0, %v1101
  %v1103 = vpop.f32.mrb[0].mxu0
  %v1104 = vpop.f32.mrb[0].mxu0
  %v1105 = vadd.f32 0.0, %v1104
  %v1106 = vpop.f32.mrb[0].mxu0
  %1107 = vmatprep.mubr.bf16.mxu0 %v1000
  %1108 = vmatmul.mubr.bf16.gmra.mrb[0].mxu0 %v952
  %v1109 = vpop.f32.mrb[0].mxu0
  %v1110 = vadd.f32 0.0, %v1109
  %v1111 = vpop.f32.mrb[0].mxu0
  %v1112 = vpop.f32.mrb[0].mxu0
  %v1113 = vadd.f32 0.0, %v1112
  %v1114 = vpop.f32.mrb[0].mxu0
  %1115 = vmatprep.mubr.bf16.mxu0 %v1001
  %1116 = vmatmul.mubr.bf16.gmra.mrb[0].mxu0 %v953
  %v1117 = vpop.f32.mrb[0].mxu0
  %v1118 = vadd.f32 0.0, %v1117
  %v1119 = vpop.f32.mrb[0].mxu0
  %v1120 = vpop.f32.mrb[0].mxu0
  %v1121 = vadd.f32 0.0, %v1120
  %v1122 = vpop.f32.mrb[0].mxu0
  %1123 = vmatprep.mubr.bf16.mxu0 %v1002
  %1124 = vmatmul.mubr.bf16.gmra.mrb[0].mxu0 %v954
  %v1125 = vpop.f32.mrb[0].mxu0
  %v1126 = vadd.f32 0.0, %v1125
  %v1127 = vpop.f32.mrb[0].mxu0
  %v1128 = vpop.f32.mrb[0].mxu0
  %v1129 = vadd.f32 0.0, %v1128
  %v1130 = vpop.f32.mrb[0].mxu0
  %1131 = vmatprep.mubr.bf16.mxu0 %v1011
  %1132 = vmatmul.mubr.bf16.gmra.mrb[0].mxu0 %v963
  %v1133 = vpop.f32.mrb[0].mxu0
  %v1134 = vadd.f32 0.0, %v1133
  %v1135 = vpop.f32.mrb[0].mxu0
  %v1136 = vpop.f32.mrb[0].mxu0
  %v1137 = vadd.f32 0.0, %v1136
  %v1138 = vpop.f32.mrb[0].mxu0
  %1139 = vmatprep.mubr.bf16.mxu0 %v1012
  %1140 = vmatmul.mubr.bf16.gmra.mrb[0].mxu0 %v964
  %v1141 = vpop.f32.mrb[0].mxu0
  %v1142 = vadd.f32 0.0, %v1141
  %v1143 = vpop.f32.mrb[0].mxu0
  %v1144 = vpop.f32.mrb[0].mxu0
  %v1145 = vadd.f32 0.0, %v1144
  %v1146 = vpop.f32.mrb[0].mxu0
  %1147 = vmatprep.mubr.bf16.mxu0 %v1013
  %1148 = vmatmul.mubr.bf16.gmra.mrb[0].mxu0 %v965
  %v1149 = vpop.f32.mrb[0].mxu0
  %v1150 = vadd.f32 0.0, %v1149
  %v1151 = vpop.f32.mrb[0].mxu0
  %v1152 = vpop.f32.mrb[0].mxu0
  %v1153 = vadd.f32 0.0, %v1152
  %v1154 = vpop.f32.mrb[0].mxu0
  %1155 = vmatprep.mubr.bf16.mxu0 %v1014
  %1156 = vmatmul.mubr.bf16.gmra.mrb[0].mxu0 %v966
  %v1157 = vpop.f32.mrb[0].mxu0
  %v1158 = vadd.f32 0.0, %v1157
  %v1159 = vpop.f32.mrb[0].mxu0
  %v1160 = vpop.f32.mrb[0].mxu0
  %v1161 = vadd.f32 0.0, %v1160
  %v1162 = vpop.f32.mrb[0].mxu0
  %1163 = vmatprep.mubr.bf16.mxu0 %v1015
  %1164 = vmatmul.mubr.bf16.gmra.mrb[0].mxu0 %v967
  %v1165 = vpop.f32.mrb[0].mxu0
  %v1166 = vadd.f32 0.0, %v1165
  %v1167 = vpop.f32.mrb[0].mxu0
  %v1168 = vpop.f32.mrb[0].mxu0
  %v1169 = vadd.f32 0.0, %v1168
  %v1170 = vpop.f32.mrb[0].mxu0
  %1171 = vmatprep.mubr.bf16.mxu0 %v1016
  %1172 = vmatmul.mubr.bf16.gmra.mrb[0].mxu0 %v968
  %v1173 = vpop.f32.mrb[0].mxu0
  %v1174 = vadd.f32 0.0, %v1173
  %v1175 = vpop.f32.mrb[0].mxu0
  %v1176 = vpop.f32.mrb[0].mxu0
  %v1177 = vadd.f32 0.0, %v1176
  %v1178 = vpop.f32.mrb[0].mxu0
  %1179 = vmatprep.mubr.bf16.mxu0 %v1017
  %1180 = vmatmul.mubr.bf16.gmra.mrb[0].mxu0 %v969
  %v1181 = vpop.f32.mrb[0].mxu0
  %v1182 = vadd.f32 0.0, %v1181
  %v1183 = vpop.f32.mrb[0].mxu0
  %v1184 = vpop.f32.mrb[0].mxu0
  %v1185 = vadd.f32 0.0, %v1184
  %v1186 = vpop.f32.mrb[0].mxu0
  %1187 = vmatprep.mubr.bf16.mxu0 %v1018
  %1188 = vmatmul.mubr.bf16.gmra.mrb[0].mxu0 %v970
  %v1189 = vpop.f32.mrb[0].mxu0
  %v1190 = vadd.f32 0.0, %v1189
  %v1191 = vpop.f32.mrb[0].mxu0
  %v1192 = vpop.f32.mrb[0].mxu0
  %v1193 = vadd.f32 0.0, %v1192
  %v1194 = vpop.f32.mrb[0].mxu0
  %1195 = vmatprep.mubr.bf16.mxu0 %v1027
  %1196 = vmatmul.mubr.bf16.gmra.mrb[0].mxu0 %v979
  %v1197 = vpop.f32.mrb[0].mxu0
  %v1198 = vadd.f32 0.0, %v1197
  %v1199 = vpop.f32.mrb[0].mxu0
  %v1200 = vpop.f32.mrb[0].mxu0
  %v1201 = vadd.f32 0.0, %v1200
  %v1202 = vpop.f32.mrb[0].mxu0
  %1203 = vmatprep.mubr.bf16.mxu0 %v1028
  %1204 = vmatmul.mubr.bf16.gmra.mrb[0].mxu0 %v980
  %v1205 = vpop.f32.mrb[0].mxu0
  %v1206 = vadd.f32 0.0, %v1205
  %v1207 = vpop.f32.mrb[0].mxu0
  %v1208 = vpop.f32.mrb[0].mxu0
  %v1209 = vadd.f32 0.0, %v1208
  %v1210 = vpop.f32.mrb[0].mxu0
  %1211 = vmatprep.mubr.bf16.mxu0 %v1029
  %1212 = vmatmul.mubr.bf16.gmra.mrb[0].mxu0 %v981
  %v1213 = vpop.f32.mrb[0].mxu0
  %v1214 = vadd.f32 0.0, %v1213
  %v1215 = vpop.f32.mrb[0].mxu0
  %v1216 = vpop.f32.mrb[0].mxu0
  %v1217 = vadd.f32 0.0, %v1216
  %v1218 = vpop.f32.mrb[0].mxu0
  %1219 = vmatprep.mubr.bf16.mxu0 %v1030
  %1220 = vmatmul.mubr.bf16.gmra.mrb[0].mxu0 %v982
  %v1221 = vpop.f32.mrb[0].mxu0
  %v1222 = vadd.f32 0.0, %v1221
  %v1223 = vpop.f32.mrb[0].mxu0
  %v1224 = vpop.f32.mrb[0].mxu0
  %v1225 = vadd.f32 0.0, %v1224
  %v1226 = vpop.f32.mrb[0].mxu0
  %1227 = vmatprep.mubr.bf16.mxu0 %v1031
  %1228 = vmatmul.mubr.bf16.gmra.mrb[0].mxu0 %v983
  %v1229 = vpop.f32.mrb[0].mxu0
  %v1230 = vadd.f32 0.0, %v1229
  %v1231 = vpop.f32.mrb[0].mxu0
  %v1232 = vpop.f32.mrb[0].mxu0
  %v1233 = vadd.f32 0.0, %v1232
  %v1234 = vpop.f32.mrb[0].mxu0
  %1235 = vmatprep.mubr.bf16.mxu0 %v1032
  %1236 = vmatmul.mubr.bf16.gmra.mrb[0].mxu0 %v984
  %v1237 = vpop.f32.mrb[0].mxu0
  %v1238 = vadd.f32 0.0, %v1237
  %v1239 = vpop.f32.mrb[0].mxu0
  %v1240 = vpop.f32.mrb[0].mxu0
  %v1241 = vadd.f32 0.0, %v1240
  %v1242 = vpop.f32.mrb[0].mxu0
  %1243 = vmatprep.mubr.bf16.mxu0 %v1033
  %1244 = vmatmul.mubr.bf16.gmra.mrb[0].mxu0 %v985
  %v1245 = vpop.f32.mrb[0].mxu0
  %v1246 = vadd.f32 0.0, %v1245
  %v1247 = vpop.f32.mrb[0].mxu0
  %v1248 = vpop.f32.mrb[0].mxu0
  %v1249 = vadd.f32 0.0, %v1248
  %v1250 = vpop.f32.mrb[0].mxu0
  %1251 = vmatprep.mubr.bf16.mxu0 %v1034
  %1252 = vmatmul.mubr.bf16.gmra.mrb[0].mxu0 %v986
  %v1253 = vpop.f32.mrb[0].mxu0
  %v1254 = vadd.f32 0.0, %v1253
  %v1255 = vpop.f32.mrb[0].mxu0
  %v1256 = vpop.f32.mrb[0].mxu0
  %v1257 = vadd.f32 0.0, %v1256
  %v1258 = vpop.f32.mrb[0].mxu0
  %1259 = vdwg.mxu0
  %s1260 = scalar_lea.vmem %s3, 256
  %1261 = vst [vmem:[%s1260] sm:$0xff] %v813
  %1262 = vst [vmem:[%s1260 + $0x8] sm:$0xff] %v816
  %1263 = vst [vmem:[%s1260 + $0x10] sm:$0xff] %v821
  %1264 = vst [vmem:[%s1260 + $0x18] sm:$0xff] %v824
  %1265 = vst [vmem:[%s1260 + $0x20] sm:$0xff] %v829
  %1266 = vst [vmem:[%s1260 + $0x28] sm:$0xff] %v832
  %1267 = vst [vmem:[%s1260 + $0x30] sm:$0xff] %v837
  %1268 = vst [vmem:[%s1260 + $0x38] sm:$0xff] %v840
  %1269 = vst [vmem:[%s1260 + $0x40] sm:$0xff] %v845
  %1270 = vst [vmem:[%s1260 + $0x48] sm:$0xff] %v848
  %1271 = vst [vmem:[%s1260 + $0x50] sm:$0xff] %v853
  %1272 = vst [vmem:[%s1260 + $0x58] sm:$0xff] %v856
  %1273 = vst [vmem:[%s1260 + $0x60] sm:$0xff] %v861
  %1274 = vst [vmem:[%s1260 + $0x68] sm:$0xff] %v864
  %1275 = vst [vmem:[%s1260 + $0x70] sm:$0xff] %v869
  %1276 = vst [vmem:[%s1260 + $0x78] sm:$0xff] %v872
  %1277 = vst [vmem:[%s1260 + $0x80] sm:$0xff] %v877
  %1278 = vst [vmem:[%s1260 + $0x88] sm:$0xff] %v880
  %1279 = vst [vmem:[%s1260 + $0x90] sm:$0xff] %v885
  %1280 = vst [vmem:[%s1260 + $0x98] sm:$0xff] %v888
  %1281 = vst [vmem:[%s1260 + $0xa0] sm:$0xff] %v893
  %1282 = vst [vmem:[%s1260 + $0xa8] sm:$0xff] %v896
  %1283 = vst [vmem:[%s1260 + $0xb0] sm:$0xff] %v901
  %1284 = vst [vmem:[%s1260 + $0xb8] sm:$0xff] %v904
  %1285 = vst [vmem:[%s1260 + $0xc0] sm:$0xff] %v909
  %1286 = vst [vmem:[%s1260 + $0xc8] sm:$0xff] %v912
  %1287 = vst [vmem:[%s1260 + $0xd0] sm:$0xff] %v917
  %1288 = vst [vmem:[%s1260 + $0xd8] sm:$0xff] %v920
  %1289 = vst [vmem:[%s1260 + $0xe0] sm:$0xff] %v925
  %1290 = vst [vmem:[%s1260 + $0xe8] sm:$0xff] %v928
  %1291 = vst [vmem:[%s1260 + $0xf0] sm:$0xff] %v933
  %1292 = vst [vmem:[%s1260 + $0xf8] sm:$0xff] %v936
  %s1293 = scalar_lea.vmem %s4, 384
  %1294 = vst [vmem:[%s1293] sm:$0xff] %v1070
  %1295 = vst [vmem:[%s1293 + $0x8] sm:$0xff] %v1073
  %1296 = vst [vmem:[%s1293 + $0x10] sm:$0xff] %v1078
  %1297 = vst [vmem:[%s1293 + $0x18] sm:$0xff] %v1081
  %1298 = vst [vmem:[%s1293 + $0x20] sm:$0xff] %v1086
  %1299 = vst [vmem:[%s1293 + $0x28] sm:$0xff] %v1089
  %1300 = vst [vmem:[%s1293 + $0x30] sm:$0xff] %v1094
  %1301 = vst [vmem:[%s1293 + $0x38] sm:$0xff] %v1097
  %1302 = vst [vmem:[%s1293 + $0x40] sm:$0xff] %v1102
  %1303 = vst [vmem:[%s1293 + $0x48] sm:$0xff] %v1105
  %1304 = vst [vmem:[%s1293 + $0x50] sm:$0xff] %v1110
  %1305 = vst [vmem:[%s1293 + $0x58] sm:$0xff] %v1113
  %1306 = vst [vmem:[%s1293 + $0x60] sm:$0xff] %v1118
  %1307 = vst [vmem:[%s1293 + $0x68] sm:$0xff] %v1121
  %1308 = vst [vmem:[%s1293 + $0x70] sm:$0xff] %v1126
  %1309 = vst [vmem:[%s1293 + $0x78] sm:$0xff] %v1129
  %1310 = vst [vmem:[%s1293 + $0x80] sm:$0xff] %v1134
  %1311 = vst [vmem:[%s1293 + $0x88] sm:$0xff] %v1137
  %1312 = vst [vmem:[%s1293 + $0x90] sm:$0xff] %v1142
  %1313 = vst [vmem:[%s1293 + $0x98] sm:$0xff] %v1145
  %1314 = vst [vmem:[%s1293 + $0xa0] sm:$0xff] %v1150
  %1315 = vst [vmem:[%s1293 + $0xa8] sm:$0xff] %v1153
  %1316 = vst [vmem:[%s1293 + $0xb0] sm:$0xff] %v1158
  %1317 = vst [vmem:[%s1293 + $0xb8] sm:$0xff] %v1161
  %1318 = vst [vmem:[%s1293 + $0xc0] sm:$0xff] %v1166
  %1319 = vst [vmem:[%s1293 + $0xc8] sm:$0xff] %v1169
  %1320 = vst [vmem:[%s1293 + $0xd0] sm:$0xff] %v1174
  %1321 = vst [vmem:[%s1293 + $0xd8] sm:$0xff] %v1177
  %1322 = vst [vmem:[%s1293 + $0xe0] sm:$0xff] %v1182
  %1323 = vst [vmem:[%s1293 + $0xe8] sm:$0xff] %v1185
  %1324 = vst [vmem:[%s1293 + $0xf0] sm:$0xff] %v1190
  %1325 = vst [vmem:[%s1293 + $0xf8] sm:$0xff] %v1193
  %1326 = vst [vmem:[%s1293 + $0x100] sm:$0xff] %v1198
  %1327 = vst [vmem:[%s1293 + $0x108] sm:$0xff] %v1201
  %1328 = vst [vmem:[%s1293 + $0x110] sm:$0xff] %v1206
  %1329 = vst [vmem:[%s1293 + $0x118] sm:$0xff] %v1209
  %1330 = vst [vmem:[%s1293 + $0x120] sm:$0xff] %v1214
  %1331 = vst [vmem:[%s1293 + $0x128] sm:$0xff] %v1217
  %1332 = vst [vmem:[%s1293 + $0x130] sm:$0xff] %v1222
  %1333 = vst [vmem:[%s1293 + $0x138] sm:$0xff] %v1225
  %1334 = vst [vmem:[%s1293 + $0x140] sm:$0xff] %v1230
  %1335 = vst [vmem:[%s1293 + $0x148] sm:$0xff] %v1233
  %1336 = vst [vmem:[%s1293 + $0x150] sm:$0xff] %v1238
  %1337 = vst [vmem:[%s1293 + $0x158] sm:$0xff] %v1241
  %1338 = vst [vmem:[%s1293 + $0x160] sm:$0xff] %v1246
  %1339 = vst [vmem:[%s1293 + $0x168] sm:$0xff] %v1249
  %1340 = vst [vmem:[%s1293 + $0x170] sm:$0xff] %v1254
  %1341 = vst [vmem:[%s1293 + $0x178] sm:$0xff] %v1257
  %v1342 = vpack.c.bf16 %v816, %v813
  %v1343 = vpack.c.bf16 %v824, %v821
  %v1344 = vpack.c.bf16 %v832, %v829
  %v1345 = vpack.c.bf16 %v840, %v837
  %v1346 = vpack.c.bf16 %v848, %v845
  %v1347 = vpack.c.bf16 %v856, %v853
  %v1348 = vpack.c.bf16 %v864, %v861
  %v1349 = vpack.c.bf16 %v872, %v869
  %v1350 = vpack.c.bf16 %v880, %v877
  %v1351 = vpack.c.bf16 %v888, %v885
  %v1352 = vpack.c.bf16 %v896, %v893
  %v1353 = vpack.c.bf16 %v904, %v901
  %v1354 = vpack.c.bf16 %v912, %v909
  %v1355 = vpack.c.bf16 %v920, %v917
  %v1356 = vpack.c.bf16 %v928, %v925
  %v1357 = vpack.c.bf16 %v936, %v933
  %v1358 = vpack.c.bf16 %v1073, %v1070
  %v1359 = vpack.c.bf16 %v1081, %v1078
  %v1360 = vpack.c.bf16 %v1089, %v1086
  %v1361 = vpack.c.bf16 %v1097, %v1094
  %v1362 = vpack.c.bf16 %v1105, %v1102
  %v1363 = vpack.c.bf16 %v1113, %v1110
  %v1364 = vpack.c.bf16 %v1121, %v1118
  %v1365 = vpack.c.bf16 %v1129, %v1126
  %v1366 = vpack.c.bf16 %v1137, %v1134
  %v1367 = vpack.c.bf16 %v1145, %v1142
  %v1368 = vpack.c.bf16 %v1153, %v1150
  %v1369 = vpack.c.bf16 %v1161, %v1158
  %v1370 = vpack.c.bf16 %v1169, %v1166
  %v1371 = vpack.c.bf16 %v1177, %v1174
  %v1372 = vpack.c.bf16 %v1185, %v1182
  %v1373 = vpack.c.bf16 %v1193, %v1190
  %v1374 = vpack.c.bf16 %v1201, %v1198
  %v1375 = vpack.c.bf16 %v1209, %v1206
  %v1376 = vpack.c.bf16 %v1217, %v1214
  %v1377 = vpack.c.bf16 %v1225, %v1222
  %v1378 = vpack.c.bf16 %v1233, %v1230
  %v1379 = vpack.c.bf16 %v1241, %v1238
  %v1380 = vpack.c.bf16 %v1249, %v1246
  %v1381 = vpack.c.bf16 %v1257, %v1254
  %1382 = vmatprep.subr.bf16.mxu0 0
  %1383 = vmatpush1.bf16.msra.mxu0 %v1358
  %1384 = vmatprep.subr.bf16.mxu0 0
  %1385 = vmatpush1.bf16.msra.mxu0 %v1359
  %1386 = vmatprep.subr.bf16.mxu0 0
  %1387 = vmatpush1.bf16.msra.mxu0 %v1360
  %1388 = vmatprep.subr.bf16.mxu0 0
  %1389 = vmatpush1.bf16.msra.mxu0 %v1361
  %1390 = vmatprep.subr.bf16.mxu0 0
  %1391 = vmatpush1.bf16.msra.mxu0 %v1362
  %1392 = vmatprep.subr.bf16.mxu0 0
  %1393 = vmatpush1.bf16.msra.mxu0 %v1363
  %1394 = vmatprep.subr.bf16.mxu0 0
  %1395 = vmatpush1.bf16.msra.mxu0 %v1364
  %1396 = vmatprep.subr.bf16.mxu0 0
  %1397 = vmatpush1.bf16.msra.mxu0 %v1365
  %1398 = vmatprep.subr.bf16.mxu0 0
  %1399 = vmatpush1.bf16.msra.mxu0 %v1366
  %1400 = vmatprep.subr.bf16.mxu0 0
  %1401 = vmatpush1.bf16.msra.mxu0 %v1367
  %1402 = vmatprep.subr.bf16.mxu0 0
  %1403 = vmatpush1.bf16.msra.mxu0 %v1368
  %1404 = vmatprep.subr.bf16.mxu0 0
  %1405 = vmatpush1.bf16.msra.mxu0 %v1369
  %1406 = vmatprep.subr.bf16.mxu0 0
  %1407 = vmatpush1.bf16.msra.mxu0 %v1370
  %1408 = vmatprep.subr.bf16.mxu0 0
  %1409 = vmatpush1.bf16.msra.mxu0 %v1371
  %1410 = vmatprep.subr.bf16.mxu0 0
  %1411 = vmatpush1.bf16.msra.mxu0 %v1372
  %1412 = vmatprep.subr.bf16.mxu0 0
  %1413 = vmatpush1.bf16.msra.mxu0 %v1373
  %1414 = vmatprep.mubr.bf16.mxu0 %v522
  %1415 = vmatmul.mubr.bf16.gmra.mrb[0].mxu0 %v521
  %v1416 = vpop.f32.mrb[0].mxu0
  %v1417 = vadd.f32 0.0, %v1416
  %v1418 = vpop.f32.mrb[0].mxu0
  %v1419 = vpop.f32.mrb[0].mxu0
  %v1420 = vadd.f32 0.0, %v1419
  %v1421 = vpop.f32.mrb[0].mxu0
  %1422 = vmatprep.mubr.bf16.mxu0 %v525
  %1423 = vmatmul.mubr.bf16.gmra.mrb[0].mxu0 %v524
  %v1424 = vpop.f32.mrb[0].mxu0
  %v1425 = vadd.f32 0.0, %v1424
  %v1426 = vpop.f32.mrb[0].mxu0
  %v1427 = vpop.f32.mrb[0].mxu0
  %v1428 = vadd.f32 0.0, %v1427
  %v1429 = vpop.f32.mrb[0].mxu0
  %1430 = vmatprep.mubr.bf16.mxu0 %v528
  %1431 = vmatmul.mubr.bf16.gmra.mrb[0].mxu0 %v527
  %v1432 = vpop.f32.mrb[0].mxu0
  %v1433 = vadd.f32 0.0, %v1432
  %v1434 = vpop.f32.mrb[0].mxu0
  %v1435 = vpop.f32.mrb[0].mxu0
  %v1436 = vadd.f32 0.0, %v1435
  %v1437 = vpop.f32.mrb[0].mxu0
  %1438 = vmatprep.mubr.bf16.mxu0 %v531
  %1439 = vmatmul.mubr.bf16.gmra.mrb[0].mxu0 %v530
  %v1440 = vpop.f32.mrb[0].mxu0
  %v1441 = vadd.f32 0.0, %v1440
  %v1442 = vpop.f32.mrb[0].mxu0
  %v1443 = vpop.f32.mrb[0].mxu0
  %v1444 = vadd.f32 0.0, %v1443
  %v1445 = vpop.f32.mrb[0].mxu0
  %1446 = vmatprep.mubr.bf16.mxu0 %v534
  %1447 = vmatmul.mubr.bf16.gmra.mrb[0].mxu0 %v533
  %v1448 = vpop.f32.mrb[0].mxu0
  %v1449 = vadd.f32 0.0, %v1448
  %v1450 = vpop.f32.mrb[0].mxu0
  %v1451 = vpop.f32.mrb[0].mxu0
  %v1452 = vadd.f32 0.0, %v1451
  %v1453 = vpop.f32.mrb[0].mxu0
  %1454 = vmatprep.mubr.bf16.mxu0 %v537
  %1455 = vmatmul.mubr.bf16.gmra.mrb[0].mxu0 %v536
  %v1456 = vpop.f32.mrb[0].mxu0
  %v1457 = vadd.f32 0.0, %v1456
  %v1458 = vpop.f32.mrb[0].mxu0
  %v1459 = vpop.f32.mrb[0].mxu0
  %v1460 = vadd.f32 0.0, %v1459
  %v1461 = vpop.f32.mrb[0].mxu0
  %1462 = vmatprep.mubr.bf16.mxu0 %v540
  %1463 = vmatmul.mubr.bf16.gmra.mrb[0].mxu0 %v539
  %v1464 = vpop.f32.mrb[0].mxu0
  %v1465 = vadd.f32 0.0, %v1464
  %v1466 = vpop.f32.mrb[0].mxu0
  %v1467 = vpop.f32.mrb[0].mxu0
  %v1468 = vadd.f32 0.0, %v1467
  %v1469 = vpop.f32.mrb[0].mxu0
  %1470 = vmatprep.mubr.bf16.mxu0 %v543
  %1471 = vmatmul.mubr.bf16.gmra.mrb[0].mxu0 %v542
  %v1472 = vpop.f32.mrb[0].mxu0
  %v1473 = vadd.f32 0.0, %v1472
  %v1474 = vpop.f32.mrb[0].mxu0
  %v1475 = vpop.f32.mrb[0].mxu0
  %v1476 = vadd.f32 0.0, %v1475
  %v1477 = vpop.f32.mrb[0].mxu0
  %1478 = vmatprep.mubr.bf16.mxu0 %v546
  %1479 = vmatmul.mubr.bf16.gmra.mrb[0].mxu0 %v545
  %v1480 = vpop.f32.mrb[0].mxu0
  %v1481 = vadd.f32 0.0, %v1480
  %v1482 = vpop.f32.mrb[0].mxu0
  %v1483 = vpop.f32.mrb[0].mxu0
  %v1484 = vadd.f32 0.0, %v1483
  %v1485 = vpop.f32.mrb[0].mxu0
  %1486 = vmatprep.mubr.bf16.mxu0 %v549
  %1487 = vmatmul.mubr.bf16.gmra.mrb[0].mxu0 %v548
  %v1488 = vpop.f32.mrb[0].mxu0
  %v1489 = vadd.f32 0.0, %v1488
  %v1490 = vpop.f32.mrb[0].mxu0
  %v1491 = vpop.f32.mrb[0].mxu0
  %v1492 = vadd.f32 0.0, %v1491
  %v1493 = vpop.f32.mrb[0].mxu0
  %1494 = vmatprep.mubr.bf16.mxu0 %v552
  %1495 = vmatmul.mubr.bf16.gmra.mrb[0].mxu0 %v551
  %v1496 = vpop.f32.mrb[0].mxu0
  %v1497 = vadd.f32 0.0, %v1496
  %v1498 = vpop.f32.mrb[0].mxu0
  %v1499 = vpop.f32.mrb[0].mxu0
  %v1500 = vadd.f32 0.0, %v1499
  %v1501 = vpop.f32.mrb[0].mxu0
  %1502 = vmatprep.mubr.bf16.mxu0 %v555
  %1503 = vmatmul.mubr.bf16.gmra.mrb[0].mxu0 %v554
  %v1504 = vpop.f32.mrb[0].mxu0
  %v1505 = vadd.f32 0.0, %v1504
  %v1506 = vpop.f32.mrb[0].mxu0
  %v1507 = vpop.f32.mrb[0].mxu0
  %v1508 = vadd.f32 0.0, %v1507
  %v1509 = vpop.f32.mrb[0].mxu0
  %1510 = vmatprep.mubr.bf16.mxu0 %v558
  %1511 = vmatmul.mubr.bf16.gmra.mrb[0].mxu0 %v557
  %v1512 = vpop.f32.mrb[0].mxu0
  %v1513 = vadd.f32 0.0, %v1512
  %v1514 = vpop.f32.mrb[0].mxu0
  %v1515 = vpop.f32.mrb[0].mxu0
  %v1516 = vadd.f32 0.0, %v1515
  %v1517 = vpop.f32.mrb[0].mxu0
  %1518 = vmatprep.mubr.bf16.mxu0 %v561
  %1519 = vmatmul.mubr.bf16.gmra.mrb[0].mxu0 %v560
  %v1520 = vpop.f32.mrb[0].mxu0
  %v1521 = vadd.f32 0.0, %v1520
  %v1522 = vpop.f32.mrb[0].mxu0
  %v1523 = vpop.f32.mrb[0].mxu0
  %v1524 = vadd.f32 0.0, %v1523
  %v1525 = vpop.f32.mrb[0].mxu0
  %1526 = vmatprep.mubr.bf16.mxu0 %v564
  %1527 = vmatmul.mubr.bf16.gmra.mrb[0].mxu0 %v563
  %v1528 = vpop.f32.mrb[0].mxu0
  %v1529 = vadd.f32 0.0, %v1528
  %v1530 = vpop.f32.mrb[0].mxu0
  %v1531 = vpop.f32.mrb[0].mxu0
  %v1532 = vadd.f32 0.0, %v1531
  %v1533 = vpop.f32.mrb[0].mxu0
  %1534 = vmatprep.mubr.bf16.mxu0 %v567
  %1535 = vmatmul.mubr.bf16.gmra.mrb[0].mxu0 %v566
  %v1536 = vpop.f32.mrb[0].mxu0
  %v1537 = vadd.f32 0.0, %v1536
  %v1538 = vpop.f32.mrb[0].mxu0
  %v1539 = vpop.f32.mrb[0].mxu0
  %v1540 = vadd.f32 0.0, %v1539
  %v1541 = vpop.f32.mrb[0].mxu0
  %1542 = vdwg.mxu0
  %1543 = vmatprep.subr.bf16.mxu0 0
  %1544 = vmatpush1.bf16.msra.mxu0 %v1374
  %1545 = vmatprep.subr.bf16.mxu0 0
  %1546 = vmatpush1.bf16.msra.mxu0 %v1375
  %1547 = vmatprep.subr.bf16.mxu0 0
  %1548 = vmatpush1.bf16.msra.mxu0 %v1376
  %1549 = vmatprep.subr.bf16.mxu0 0
  %1550 = vmatpush1.bf16.msra.mxu0 %v1377
  %1551 = vmatprep.subr.bf16.mxu0 0
  %1552 = vmatpush1.bf16.msra.mxu0 %v1378
  %1553 = vmatprep.subr.bf16.mxu0 0
  %1554 = vmatpush1.bf16.msra.mxu0 %v1379
  %1555 = vmatprep.subr.bf16.mxu0 0
  %1556 = vmatpush1.bf16.msra.mxu0 %v1380
  %1557 = vmatprep.subr.bf16.mxu0 0
  %1558 = vmatpush1.bf16.msra.mxu0 %v1381
  %1559 = vmatprep.subr.bf16.mxu0 0
  %1560 = vmatpush1.bf16.msra.mxu0 0
  %1561 = vmatprep.subr.bf16.mxu0 0
  %1562 = vmatpush1.bf16.msra.mxu0 0
  %1563 = vmatprep.subr.bf16.mxu0 0
  %1564 = vmatpush1.bf16.msra.mxu0 0
  %1565 = vmatprep.subr.bf16.mxu0 0
  %1566 = vmatpush1.bf16.msra.mxu0 0
  %1567 = vmatprep.subr.bf16.mxu0 0
  %1568 = vmatpush1.bf16.msra.mxu0 0
  %1569 = vmatprep.subr.bf16.mxu0 0
  %1570 = vmatpush1.bf16.msra.mxu0 0
  %1571 = vmatprep.subr.bf16.mxu0 0
  %1572 = vmatpush1.bf16.msra.mxu0 0
  %1573 = vmatprep.subr.bf16.mxu0 0
  %1574 = vmatpush1.bf16.msra.mxu0 0
  %1575 = vmatprep.mubr.bf16.mxu0 0
  %1576 = vmatmul.mubr.bf16.gmra.mrb[0].mxu0 %v523
  %v1577 = vpop.f32.mrb[0].mxu0
  %v1578 = vadd.f32 %v1417, %v1577
  %v1579 = vpop.f32.mrb[0].mxu0
  %v1580 = vpop.f32.mrb[0].mxu0
  %v1581 = vadd.f32 %v1420, %v1580
  %v1582 = vpop.f32.mrb[0].mxu0
  %1583 = vmatprep.mubr.bf16.mxu0 0
  %1584 = vmatmul.mubr.bf16.gmra.mrb[0].mxu0 %v526
  %v1585 = vpop.f32.mrb[0].mxu0
  %v1586 = vadd.f32 %v1425, %v1585
  %v1587 = vpop.f32.mrb[0].mxu0
  %v1588 = vpop.f32.mrb[0].mxu0
  %v1589 = vadd.f32 %v1428, %v1588
  %v1590 = vpop.f32.mrb[0].mxu0
  %1591 = vmatprep.mubr.bf16.mxu0 0
  %1592 = vmatmul.mubr.bf16.gmra.mrb[0].mxu0 %v529
  %v1593 = vpop.f32.mrb[0].mxu0
  %v1594 = vadd.f32 %v1433, %v1593
  %v1595 = vpop.f32.mrb[0].mxu0
  %v1596 = vpop.f32.mrb[0].mxu0
  %v1597 = vadd.f32 %v1436, %v1596
  %v1598 = vpop.f32.mrb[0].mxu0
  %1599 = vmatprep.mubr.bf16.mxu0 0
  %1600 = vmatmul.mubr.bf16.gmra.mrb[0].mxu0 %v532
  %v1601 = vpop.f32.mrb[0].mxu0
  %v1602 = vadd.f32 %v1441, %v1601
  %v1603 = vpop.f32.mrb[0].mxu0
  %v1604 = vpop.f32.mrb[0].mxu0
  %v1605 = vadd.f32 %v1444, %v1604
  %v1606 = vpop.f32.mrb[0].mxu0
  %1607 = vmatprep.mubr.bf16.mxu0 0
  %1608 = vmatmul.mubr.bf16.gmra.mrb[0].mxu0 %v535
  %v1609 = vpop.f32.mrb[0].mxu0
  %v1610 = vadd.f32 %v1449, %v1609
  %v1611 = vpop.f32.mrb[0].mxu0
  %v1612 = vpop.f32.mrb[0].mxu0
  %v1613 = vadd.f32 %v1452, %v1612
  %v1614 = vpop.f32.mrb[0].mxu0
  %1615 = vmatprep.mubr.bf16.mxu0 0
  %1616 = vmatmul.mubr.bf16.gmra.mrb[0].mxu0 %v538
  %v1617 = vpop.f32.mrb[0].mxu0
  %v1618 = vadd.f32 %v1457, %v1617
  %v1619 = vpop.f32.mrb[0].mxu0
  %v1620 = vpop.f32.mrb[0].mxu0
  %v1621 = vadd.f32 %v1460, %v1620
  %v1622 = vpop.f32.mrb[0].mxu0
  %1623 = vmatprep.mubr.bf16.mxu0 0
  %1624 = vmatmul.mubr.bf16.gmra.mrb[0].mxu0 %v541
  %v1625 = vpop.f32.mrb[0].mxu0
  %v1626 = vadd.f32 %v1465, %v1625
  %v1627 = vpop.f32.mrb[0].mxu0
  %v1628 = vpop.f32.mrb[0].mxu0
  %v1629 = vadd.f32 %v1468, %v1628
  %v1630 = vpop.f32.mrb[0].mxu0
  %1631 = vmatprep.mubr.bf16.mxu0 0
  %1632 = vmatmul.mubr.bf16.gmra.mrb[0].mxu0 %v544
  %v1633 = vpop.f32.mrb[0].mxu0
  %v1634 = vadd.f32 %v1473, %v1633
  %v1635 = vpop.f32.mrb[0].mxu0
  %v1636 = vpop.f32.mrb[0].mxu0
  %v1637 = vadd.f32 %v1476, %v1636
  %v1638 = vpop.f32.mrb[0].mxu0
  %1639 = vmatprep.mubr.bf16.mxu0 0
  %1640 = vmatmul.mubr.bf16.gmra.mrb[0].mxu0 %v547
  %v1641 = vpop.f32.mrb[0].mxu0
  %v1642 = vadd.f32 %v1481, %v1641
  %v1643 = vpop.f32.mrb[0].mxu0
  %v1644 = vpop.f32.mrb[0].mxu0
  %v1645 = vadd.f32 %v1484, %v1644
  %v1646 = vpop.f32.mrb[0].mxu0
  %1647 = vmatprep.mubr.bf16.mxu0 0
  %1648 = vmatmul.mubr.bf16.gmra.mrb[0].mxu0 %v550
  %v1649 = vpop.f32.mrb[0].mxu0
  %v1650 = vadd.f32 %v1489, %v1649
  %v1651 = vpop.f32.mrb[0].mxu0
  %v1652 = vpop.f32.mrb[0].mxu0
  %v1653 = vadd.f32 %v1492, %v1652
  %v1654 = vpop.f32.mrb[0].mxu0
  %1655 = vmatprep.mubr.bf16.mxu0 0
  %1656 = vmatmul.mubr.bf16.gmra.mrb[0].mxu0 %v553
  %v1657 = vpop.f32.mrb[0].mxu0
  %v1658 = vadd.f32 %v1497, %v1657
  %v1659 = vpop.f32.mrb[0].mxu0
  %v1660 = vpop.f32.mrb[0].mxu0
  %v1661 = vadd.f32 %v1500, %v1660
  %v1662 = vpop.f32.mrb[0].mxu0
  %1663 = vmatprep.mubr.bf16.mxu0 0
  %1664 = vmatmul.mubr.bf16.gmra.mrb[0].mxu0 %v556
  %v1665 = vpop.f32.mrb[0].mxu0
  %v1666 = vadd.f32 %v1505, %v1665
  %v1667 = vpop.f32.mrb[0].mxu0
  %v1668 = vpop.f32.mrb[0].mxu0
  %v1669 = vadd.f32 %v1508, %v1668
  %v1670 = vpop.f32.mrb[0].mxu0
  %1671 = vmatprep.mubr.bf16.mxu0 0
  %1672 = vmatmul.mubr.bf16.gmra.mrb[0].mxu0 %v559
  %v1673 = vpop.f32.mrb[0].mxu0
  %v1674 = vadd.f32 %v1513, %v1673
  %v1675 = vpop.f32.mrb[0].mxu0
  %v1676 = vpop.f32.mrb[0].mxu0
  %v1677 = vadd.f32 %v1516, %v1676
  %v1678 = vpop.f32.mrb[0].mxu0
  %1679 = vmatprep.mubr.bf16.mxu0 0
  %1680 = vmatmul.mubr.bf16.gmra.mrb[0].mxu0 %v562
  %v1681 = vpop.f32.mrb[0].mxu0
  %v1682 = vadd.f32 %v1521, %v1681
  %v1683 = vpop.f32.mrb[0].mxu0
  %v1684 = vpop.f32.mrb[0].mxu0
  %v1685 = vadd.f32 %v1524, %v1684
  %v1686 = vpop.f32.mrb[0].mxu0
  %1687 = vmatprep.mubr.bf16.mxu0 0
  %1688 = vmatmul.mubr.bf16.gmra.mrb[0].mxu0 %v565
  %v1689 = vpop.f32.mrb[0].mxu0
  %v1690 = vadd.f32 %v1529, %v1689
  %v1691 = vpop.f32.mrb[0].mxu0
  %v1692 = vpop.f32.mrb[0].mxu0
  %v1693 = vadd.f32 %v1532, %v1692
  %v1694 = vpop.f32.mrb[0].mxu0
  %1695 = vmatprep.mubr.bf16.mxu0 0
  %1696 = vmatmul.mubr.bf16.gmra.mrb[0].mxu0 %v568
  %v1697 = vpop.f32.mrb[0].mxu0
  %v1698 = vadd.f32 %v1537, %v1697
  %v1699 = vpop.f32.mrb[0].mxu0
  %v1700 = vpop.f32.mrb[0].mxu0
  %v1701 = vadd.f32 %v1540, %v1700
  %v1702 = vpop.f32.mrb[0].mxu0
  %1703 = vdwg.mxu0
  %1704 = vmatprep.subr.bf16.mxu0 0
  %1705 = vmatpush1.bf16.msra.mxu0 %v1342
  %1706 = vmatprep.subr.bf16.mxu0 0
  %1707 = vmatpush1.bf16.msra.mxu0 %v1343
  %1708 = vmatprep.subr.bf16.mxu0 0
  %1709 = vmatpush1.bf16.msra.mxu0 %v1344
  %1710 = vmatprep.subr.bf16.mxu0 0
  %1711 = vmatpush1.bf16.msra.mxu0 %v1345
  %1712 = vmatprep.subr.bf16.mxu0 0
  %1713 = vmatpush1.bf16.msra.mxu0 %v1346
  %1714 = vmatprep.subr.bf16.mxu0 0
  %1715 = vmatpush1.bf16.msra.mxu0 %v1347
  %1716 = vmatprep.subr.bf16.mxu0 0
  %1717 = vmatpush1.bf16.msra.mxu0 %v1348
  %1718 = vmatprep.subr.bf16.mxu0 0
  %1719 = vmatpush1.bf16.msra.mxu0 %v1349
  %1720 = vmatprep.subr.bf16.mxu0 0
  %1721 = vmatpush1.bf16.msra.mxu0 %v1350
  %1722 = vmatprep.subr.bf16.mxu0 0
  %1723 = vmatpush1.bf16.msra.mxu0 %v1351
  %1724 = vmatprep.subr.bf16.mxu0 0
  %1725 = vmatpush1.bf16.msra.mxu0 %v1352
  %1726 = vmatprep.subr.bf16.mxu0 0
  %1727 = vmatpush1.bf16.msra.mxu0 %v1353
  %1728 = vmatprep.subr.bf16.mxu0 0
  %1729 = vmatpush1.bf16.msra.mxu0 %v1354
  %1730 = vmatprep.subr.bf16.mxu0 0
  %1731 = vmatpush1.bf16.msra.mxu0 %v1355
  %1732 = vmatprep.subr.bf16.mxu0 0
  %1733 = vmatpush1.bf16.msra.mxu0 %v1356
  %1734 = vmatprep.subr.bf16.mxu0 0
  %1735 = vmatpush1.bf16.msra.mxu0 %v1357
  %1736 = vmatprep.mubr.bf16.mxu0 %v995
  %1737 = vmatmul.mubr.bf16.gmra.mrb[0].mxu0 %v947
  %v1738 = vpop.f32.mrb[0].mxu0
  %v1739 = vadd.f32 0.0, %v1738
  %v1740 = vpop.f32.mrb[0].mxu0
  %v1741 = vpop.f32.mrb[0].mxu0
  %v1742 = vadd.f32 0.0, %v1741
  %v1743 = vpop.f32.mrb[0].mxu0
  %1744 = vmatprep.mubr.bf16.mxu0 %v996
  %1745 = vmatmul.mubr.bf16.gmra.mrb[0].mxu0 %v948
  %v1746 = vpop.f32.mrb[0].mxu0
  %v1747 = vadd.f32 0.0, %v1746
  %v1748 = vpop.f32.mrb[0].mxu0
  %v1749 = vpop.f32.mrb[0].mxu0
  %v1750 = vadd.f32 0.0, %v1749
  %v1751 = vpop.f32.mrb[0].mxu0
  %1752 = vmatprep.mubr.bf16.mxu0 %v997
  %1753 = vmatmul.mubr.bf16.gmra.mrb[0].mxu0 %v949
  %v1754 = vpop.f32.mrb[0].mxu0
  %v1755 = vadd.f32 0.0, %v1754
  %v1756 = vpop.f32.mrb[0].mxu0
  %v1757 = vpop.f32.mrb[0].mxu0
  %v1758 = vadd.f32 0.0, %v1757
  %v1759 = vpop.f32.mrb[0].mxu0
  %1760 = vmatprep.mubr.bf16.mxu0 %v998
  %1761 = vmatmul.mubr.bf16.gmra.mrb[0].mxu0 %v950
  %v1762 = vpop.f32.mrb[0].mxu0
  %v1763 = vadd.f32 0.0, %v1762
  %v1764 = vpop.f32.mrb[0].mxu0
  %v1765 = vpop.f32.mrb[0].mxu0
  %v1766 = vadd.f32 0.0, %v1765
  %v1767 = vpop.f32.mrb[0].mxu0
  %1768 = vmatprep.mubr.bf16.mxu0 %v999
  %1769 = vmatmul.mubr.bf16.gmra.mrb[0].mxu0 %v951
  %v1770 = vpop.f32.mrb[0].mxu0
  %v1771 = vadd.f32 0.0, %v1770
  %v1772 = vpop.f32.mrb[0].mxu0
  %v1773 = vpop.f32.mrb[0].mxu0
  %v1774 = vadd.f32 0.0, %v1773
  %v1775 = vpop.f32.mrb[0].mxu0
  %1776 = vmatprep.mubr.bf16.mxu0 %v1000
  %1777 = vmatmul.mubr.bf16.gmra.mrb[0].mxu0 %v952
  %v1778 = vpop.f32.mrb[0].mxu0
  %v1779 = vadd.f32 0.0, %v1778
  %v1780 = vpop.f32.mrb[0].mxu0
  %v1781 = vpop.f32.mrb[0].mxu0
  %v1782 = vadd.f32 0.0, %v1781
  %v1783 = vpop.f32.mrb[0].mxu0
  %1784 = vmatprep.mubr.bf16.mxu0 %v1001
  %1785 = vmatmul.mubr.bf16.gmra.mrb[0].mxu0 %v953
  %v1786 = vpop.f32.mrb[0].mxu0
  %v1787 = vadd.f32 0.0, %v1786
  %v1788 = vpop.f32.mrb[0].mxu0
  %v1789 = vpop.f32.mrb[0].mxu0
  %v1790 = vadd.f32 0.0, %v1789
  %v1791 = vpop.f32.mrb[0].mxu0
  %1792 = vmatprep.mubr.bf16.mxu0 %v1002
  %1793 = vmatmul.mubr.bf16.gmra.mrb[0].mxu0 %v954
  %v1794 = vpop.f32.mrb[0].mxu0
  %v1795 = vadd.f32 0.0, %v1794
  %v1796 = vpop.f32.mrb[0].mxu0
  %v1797 = vpop.f32.mrb[0].mxu0
  %v1798 = vadd.f32 0.0, %v1797
  %v1799 = vpop.f32.mrb[0].mxu0
  %1800 = vmatprep.mubr.bf16.mxu0 %v1011
  %1801 = vmatmul.mubr.bf16.gmra.mrb[0].mxu0 %v963
  %v1802 = vpop.f32.mrb[0].mxu0
  %v1803 = vadd.f32 0.0, %v1802
  %v1804 = vpop.f32.mrb[0].mxu0
  %v1805 = vpop.f32.mrb[0].mxu0
  %v1806 = vadd.f32 0.0, %v1805
  %v1807 = vpop.f32.mrb[0].mxu0
  %1808 = vmatprep.mubr.bf16.mxu0 %v1012
  %1809 = vmatmul.mubr.bf16.gmra.mrb[0].mxu0 %v964
  %v1810 = vpop.f32.mrb[0].mxu0
  %v1811 = vadd.f32 0.0, %v1810
  %v1812 = vpop.f32.mrb[0].mxu0
  %v1813 = vpop.f32.mrb[0].mxu0
  %v1814 = vadd.f32 0.0, %v1813
  %v1815 = vpop.f32.mrb[0].mxu0
  %1816 = vmatprep.mubr.bf16.mxu0 %v1013
  %1817 = vmatmul.mubr.bf16.gmra.mrb[0].mxu0 %v965
  %v1818 = vpop.f32.mrb[0].mxu0
  %v1819 = vadd.f32 0.0, %v1818
  %v1820 = vpop.f32.mrb[0].mxu0
  %v1821 = vpop.f32.mrb[0].mxu0
  %v1822 = vadd.f32 0.0, %v1821
  %v1823 = vpop.f32.mrb[0].mxu0
  %1824 = vmatprep.mubr.bf16.mxu0 %v1014
  %1825 = vmatmul.mubr.bf16.gmra.mrb[0].mxu0 %v966
  %v1826 = vpop.f32.mrb[0].mxu0
  %v1827 = vadd.f32 0.0, %v1826
  %v1828 = vpop.f32.mrb[0].mxu0
  %v1829 = vpop.f32.mrb[0].mxu0
  %v1830 = vadd.f32 0.0, %v1829
  %v1831 = vpop.f32.mrb[0].mxu0
  %1832 = vmatprep.mubr.bf16.mxu0 %v1015
  %1833 = vmatmul.mubr.bf16.gmra.mrb[0].mxu0 %v967
  %v1834 = vpop.f32.mrb[0].mxu0
  %v1835 = vadd.f32 0.0, %v1834
  %v1836 = vpop.f32.mrb[0].mxu0
  %v1837 = vpop.f32.mrb[0].mxu0
  %v1838 = vadd.f32 0.0, %v1837
  %v1839 = vpop.f32.mrb[0].mxu0
  %1840 = vmatprep.mubr.bf16.mxu0 %v1016
  %1841 = vmatmul.mubr.bf16.gmra.mrb[0].mxu0 %v968
  %v1842 = vpop.f32.mrb[0].mxu0
  %v1843 = vadd.f32 0.0, %v1842
  %v1844 = vpop.f32.mrb[0].mxu0
  %v1845 = vpop.f32.mrb[0].mxu0
  %v1846 = vadd.f32 0.0, %v1845
  %v1847 = vpop.f32.mrb[0].mxu0
  %1848 = vmatprep.mubr.bf16.mxu0 %v1017
  %1849 = vmatmul.mubr.bf16.gmra.mrb[0].mxu0 %v969
  %v1850 = vpop.f32.mrb[0].mxu0
  %v1851 = vadd.f32 0.0, %v1850
  %v1852 = vpop.f32.mrb[0].mxu0
  %v1853 = vpop.f32.mrb[0].mxu0
  %v1854 = vadd.f32 0.0, %v1853
  %v1855 = vpop.f32.mrb[0].mxu0
  %1856 = vmatprep.mubr.bf16.mxu0 %v1018
  %1857 = vmatmul.mubr.bf16.gmra.mrb[0].mxu0 %v970
  %v1858 = vpop.f32.mrb[0].mxu0
  %v1859 = vadd.f32 0.0, %v1858
  %v1860 = vpop.f32.mrb[0].mxu0
  %v1861 = vpop.f32.mrb[0].mxu0
  %v1862 = vadd.f32 0.0, %v1861
  %v1863 = vpop.f32.mrb[0].mxu0
  %1864 = vmatprep.mubr.bf16.mxu0 %v1027
  %1865 = vmatmul.mubr.bf16.gmra.mrb[0].mxu0 %v979
  %v1866 = vpop.f32.mrb[0].mxu0
  %v1867 = vadd.f32 0.0, %v1866
  %v1868 = vpop.f32.mrb[0].mxu0
  %v1869 = vpop.f32.mrb[0].mxu0
  %v1870 = vadd.f32 0.0, %v1869
  %v1871 = vpop.f32.mrb[0].mxu0
  %1872 = vmatprep.mubr.bf16.mxu0 %v1028
  %1873 = vmatmul.mubr.bf16.gmra.mrb[0].mxu0 %v980
  %v1874 = vpop.f32.mrb[0].mxu0
  %v1875 = vadd.f32 0.0, %v1874
  %v1876 = vpop.f32.mrb[0].mxu0
  %v1877 = vpop.f32.mrb[0].mxu0
  %v1878 = vadd.f32 0.0, %v1877
  %v1879 = vpop.f32.mrb[0].mxu0
  %1880 = vmatprep.mubr.bf16.mxu0 %v1029
  %1881 = vmatmul.mubr.bf16.gmra.mrb[0].mxu0 %v981
  %v1882 = vpop.f32.mrb[0].mxu0
  %v1883 = vadd.f32 0.0, %v1882
  %v1884 = vpop.f32.mrb[0].mxu0
  %v1885 = vpop.f32.mrb[0].mxu0
  %v1886 = vadd.f32 0.0, %v1885
  %v1887 = vpop.f32.mrb[0].mxu0
  %1888 = vmatprep.mubr.bf16.mxu0 %v1030
  %1889 = vmatmul.mubr.bf16.gmra.mrb[0].mxu0 %v982
  %v1890 = vpop.f32.mrb[0].mxu0
  %v1891 = vadd.f32 0.0, %v1890
  %v1892 = vpop.f32.mrb[0].mxu0
  %v1893 = vpop.f32.mrb[0].mxu0
  %v1894 = vadd.f32 0.0, %v1893
  %v1895 = vpop.f32.mrb[0].mxu0
  %1896 = vmatprep.mubr.bf16.mxu0 %v1031
  %1897 = vmatmul.mubr.bf16.gmra.mrb[0].mxu0 %v983
  %v1898 = vpop.f32.mrb[0].mxu0
  %v1899 = vadd.f32 0.0, %v1898
  %v1900 = vpop.f32.mrb[0].mxu0
  %v1901 = vpop.f32.mrb[0].mxu0
  %v1902 = vadd.f32 0.0, %v1901
  %v1903 = vpop.f32.mrb[0].mxu0
  %1904 = vmatprep.mubr.bf16.mxu0 %v1032
  %1905 = vmatmul.mubr.bf16.gmra.mrb[0].mxu0 %v984
  %v1906 = vpop.f32.mrb[0].mxu0
  %v1907 = vadd.f32 0.0, %v1906
  %v1908 = vpop.f32.mrb[0].mxu0
  %v1909 = vpop.f32.mrb[0].mxu0
  %v1910 = vadd.f32 0.0, %v1909
  %v1911 = vpop.f32.mrb[0].mxu0
  %1912 = vmatprep.mubr.bf16.mxu0 %v1033
  %1913 = vmatmul.mubr.bf16.gmra.mrb[0].mxu0 %v985
  %v1914 = vpop.f32.mrb[0].mxu0
  %v1915 = vadd.f32 0.0, %v1914
  %v1916 = vpop.f32.mrb[0].mxu0
  %v1917 = vpop.f32.mrb[0].mxu0
  %v1918 = vadd.f32 0.0, %v1917
  %v1919 = vpop.f32.mrb[0].mxu0
  %1920 = vmatprep.mubr.bf16.mxu0 %v1034
  %1921 = vmatmul.mubr.bf16.gmra.mrb[0].mxu0 %v986
  %v1922 = vpop.f32.mrb[0].mxu0
  %v1923 = vadd.f32 0.0, %v1922
  %v1924 = vpop.f32.mrb[0].mxu0
  %v1925 = vpop.f32.mrb[0].mxu0
  %v1926 = vadd.f32 0.0, %v1925
  %v1927 = vpop.f32.mrb[0].mxu0
  %1928 = vdwg.mxu0
  %s1929 = scalar_lea.vmem %s3, 512
  %1930 = vst [vmem:[%s1929] sm:$0xff] %v1578
  %1931 = vst [vmem:[%s1929 + $0x8] sm:$0xff] %v1581
  %1932 = vst [vmem:[%s1929 + $0x10] sm:$0xff] %v1586
  %1933 = vst [vmem:[%s1929 + $0x18] sm:$0xff] %v1589
  %1934 = vst [vmem:[%s1929 + $0x20] sm:$0xff] %v1594
  %1935 = vst [vmem:[%s1929 + $0x28] sm:$0xff] %v1597
  %1936 = vst [vmem:[%s1929 + $0x30] sm:$0xff] %v1602
  %1937 = vst [vmem:[%s1929 + $0x38] sm:$0xff] %v1605
  %1938 = vst [vmem:[%s1929 + $0x40] sm:$0xff] %v1610
  %1939 = vst [vmem:[%s1929 + $0x48] sm:$0xff] %v1613
  %1940 = vst [vmem:[%s1929 + $0x50] sm:$0xff] %v1618
  %1941 = vst [vmem:[%s1929 + $0x58] sm:$0xff] %v1621
  %1942 = vst [vmem:[%s1929 + $0x60] sm:$0xff] %v1626
  %1943 = vst [vmem:[%s1929 + $0x68] sm:$0xff] %v1629
  %1944 = vst [vmem:[%s1929 + $0x70] sm:$0xff] %v1634
  %1945 = vst [vmem:[%s1929 + $0x78] sm:$0xff] %v1637
  %1946 = vst [vmem:[%s1929 + $0x80] sm:$0xff] %v1642
  %1947 = vst [vmem:[%s1929 + $0x88] sm:$0xff] %v1645
  %1948 = vst [vmem:[%s1929 + $0x90] sm:$0xff] %v1650
  %1949 = vst [vmem:[%s1929 + $0x98] sm:$0xff] %v1653
  %1950 = vst [vmem:[%s1929 + $0xa0] sm:$0xff] %v1658
  %1951 = vst [vmem:[%s1929 + $0xa8] sm:$0xff] %v1661
  %1952 = vst [vmem:[%s1929 + $0xb0] sm:$0xff] %v1666
  %1953 = vst [vmem:[%s1929 + $0xb8] sm:$0xff] %v1669
  %1954 = vst [vmem:[%s1929 + $0xc0] sm:$0xff] %v1674
  %1955 = vst [vmem:[%s1929 + $0xc8] sm:$0xff] %v1677
  %1956 = vst [vmem:[%s1929 + $0xd0] sm:$0xff] %v1682
  %1957 = vst [vmem:[%s1929 + $0xd8] sm:$0xff] %v1685
  %1958 = vst [vmem:[%s1929 + $0xe0] sm:$0xff] %v1690
  %1959 = vst [vmem:[%s1929 + $0xe8] sm:$0xff] %v1693
  %1960 = vst [vmem:[%s1929 + $0xf0] sm:$0xff] %v1698
  %1961 = vst [vmem:[%s1929 + $0xf8] sm:$0xff] %v1701
  %s1962 = scalar_lea.vmem %s4, 768
  %1963 = vst [vmem:[%s1962] sm:$0xff] %v1739
  %1964 = vst [vmem:[%s1962 + $0x8] sm:$0xff] %v1742
  %1965 = vst [vmem:[%s1962 + $0x10] sm:$0xff] %v1747
  %1966 = vst [vmem:[%s1962 + $0x18] sm:$0xff] %v1750
  %1967 = vst [vmem:[%s1962 + $0x20] sm:$0xff] %v1755
  %1968 = vst [vmem:[%s1962 + $0x28] sm:$0xff] %v1758
  %1969 = vst [vmem:[%s1962 + $0x30] sm:$0xff] %v1763
  %1970 = vst [vmem:[%s1962 + $0x38] sm:$0xff] %v1766
  %1971 = vst [vmem:[%s1962 + $0x40] sm:$0xff] %v1771
  %1972 = vst [vmem:[%s1962 + $0x48] sm:$0xff] %v1774
  %1973 = vst [vmem:[%s1962 + $0x50] sm:$0xff] %v1779
  %1974 = vst [vmem:[%s1962 + $0x58] sm:$0xff] %v1782
  %1975 = vst [vmem:[%s1962 + $0x60] sm:$0xff] %v1787
  %1976 = vst [vmem:[%s1962 + $0x68] sm:$0xff] %v1790
  %1977 = vst [vmem:[%s1962 + $0x70] sm:$0xff] %v1795
  %1978 = vst [vmem:[%s1962 + $0x78] sm:$0xff] %v1798
  %1979 = vst [vmem:[%s1962 + $0x80] sm:$0xff] %v1803
  %1980 = vst [vmem:[%s1962 + $0x88] sm:$0xff] %v1806
  %1981 = vst [vmem:[%s1962 + $0x90] sm:$0xff] %v1811
  %1982 = vst [vmem:[%s1962 + $0x98] sm:$0xff] %v1814
  %1983 = vst [vmem:[%s1962 + $0xa0] sm:$0xff] %v1819
  %1984 = vst [vmem:[%s1962 + $0xa8] sm:$0xff] %v1822
  %1985 = vst [vmem:[%s1962 + $0xb0] sm:$0xff] %v1827
  %1986 = vst [vmem:[%s1962 + $0xb8] sm:$0xff] %v1830
  %1987 = vst [vmem:[%s1962 + $0xc0] sm:$0xff] %v1835
  %1988 = vst [vmem:[%s1962 + $0xc8] sm:$0xff] %v1838
  %1989 = vst [vmem:[%s1962 + $0xd0] sm:$0xff] %v1843
  %1990 = vst [vmem:[%s1962 + $0xd8] sm:$0xff] %v1846
  %1991 = vst [vmem:[%s1962 + $0xe0] sm:$0xff] %v1851
  %1992 = vst [vmem:[%s1962 + $0xe8] sm:$0xff] %v1854
  %1993 = vst [vmem:[%s1962 + $0xf0] sm:$0xff] %v1859
  %1994 = vst [vmem:[%s1962 + $0xf8] sm:$0xff] %v1862
  %1995 = vst [vmem:[%s1962 + $0x100] sm:$0xff] %v1867
  %1996 = vst [vmem:[%s1962 + $0x108] sm:$0xff] %v1870
  %1997 = vst [vmem:[%s1962 + $0x110] sm:$0xff] %v1875
  %1998 = vst [vmem:[%s1962 + $0x118] sm:$0xff] %v1878
  %1999 = vst [vmem:[%s1962 + $0x120] sm:$0xff] %v1883
  %2000 = vst [vmem:[%s1962 + $0x128] sm:$0xff] %v1886
  %2001 = vst [vmem:[%s1962 + $0x130] sm:$0xff] %v1891
  %2002 = vst [vmem:[%s1962 + $0x138] sm:$0xff] %v1894
  %2003 = vst [vmem:[%s1962 + $0x140] sm:$0xff] %v1899
  %2004 = vst [vmem:[%s1962 + $0x148] sm:$0xff] %v1902
  %2005 = vst [vmem:[%s1962 + $0x150] sm:$0xff] %v1907
  %2006 = vst [vmem:[%s1962 + $0x158] sm:$0xff] %v1910
  %2007 = vst [vmem:[%s1962 + $0x160] sm:$0xff] %v1915
  %2008 = vst [vmem:[%s1962 + $0x168] sm:$0xff] %v1918
  %2009 = vst [vmem:[%s1962 + $0x170] sm:$0xff] %v1923
  %2010 = vst [vmem:[%s1962 + $0x178] sm:$0xff] %v1926
  %v2011 = vpack.c.bf16 %v1581, %v1578
  %v2012 = vpack.c.bf16 %v1589, %v1586
  %v2013 = vpack.c.bf16 %v1597, %v1594
  %v2014 = vpack.c.bf16 %v1605, %v1602
  %v2015 = vpack.c.bf16 %v1613, %v1610
  %v2016 = vpack.c.bf16 %v1621, %v1618
  %v2017 = vpack.c.bf16 %v1629, %v1626
  %v2018 = vpack.c.bf16 %v1637, %v1634
  %v2019 = vpack.c.bf16 %v1645, %v1642
  %v2020 = vpack.c.bf16 %v1653, %v1650
  %v2021 = vpack.c.bf16 %v1661, %v1658
  %v2022 = vpack.c.bf16 %v1669, %v1666
  %v2023 = vpack.c.bf16 %v1677, %v1674
  %v2024 = vpack.c.bf16 %v1685, %v1682
  %v2025 = vpack.c.bf16 %v1693, %v1690
  %v2026 = vpack.c.bf16 %v1701, %v1698
  %v2027 = vpack.c.bf16 %v1742, %v1739
  %v2028 = vpack.c.bf16 %v1750, %v1747
  %v2029 = vpack.c.bf16 %v1758, %v1755
  %v2030 = vpack.c.bf16 %v1766, %v1763
  %v2031 = vpack.c.bf16 %v1774, %v1771
  %v2032 = vpack.c.bf16 %v1782, %v1779
  %v2033 = vpack.c.bf16 %v1790, %v1787
  %v2034 = vpack.c.bf16 %v1798, %v1795
  %v2035 = vpack.c.bf16 %v1806, %v1803
  %v2036 = vpack.c.bf16 %v1814, %v1811
  %v2037 = vpack.c.bf16 %v1822, %v1819
  %v2038 = vpack.c.bf16 %v1830, %v1827
  %v2039 = vpack.c.bf16 %v1838, %v1835
  %v2040 = vpack.c.bf16 %v1846, %v1843
  %v2041 = vpack.c.bf16 %v1854, %v1851
  %v2042 = vpack.c.bf16 %v1862, %v1859
  %v2043 = vpack.c.bf16 %v1870, %v1867
  %v2044 = vpack.c.bf16 %v1878, %v1875
  %v2045 = vpack.c.bf16 %v1886, %v1883
  %v2046 = vpack.c.bf16 %v1894, %v1891
  %v2047 = vpack.c.bf16 %v1902, %v1899
  %v2048 = vpack.c.bf16 %v1910, %v1907
  %v2049 = vpack.c.bf16 %v1918, %v1915
  %v2050 = vpack.c.bf16 %v1926, %v1923
  %2051 = vmatprep.subr.bf16.mxu0 0
  %2052 = vmatpush1.bf16.msra.mxu0 %v2027
  %2053 = vmatprep.subr.bf16.mxu0 0
  %2054 = vmatpush1.bf16.msra.mxu0 %v2028
  %2055 = vmatprep.subr.bf16.mxu0 0
  %2056 = vmatpush1.bf16.msra.mxu0 %v2029
  %2057 = vmatprep.subr.bf16.mxu0 0
  %2058 = vmatpush1.bf16.msra.mxu0 %v2030
  %2059 = vmatprep.subr.bf16.mxu0 0
  %2060 = vmatpush1.bf16.msra.mxu0 %v2031
  %2061 = vmatprep.subr.bf16.mxu0 0
  %2062 = vmatpush1.bf16.msra.mxu0 %v2032
  %2063 = vmatprep.subr.bf16.mxu0 0
  %2064 = vmatpush1.bf16.msra.mxu0 %v2033
  %2065 = vmatprep.subr.bf16.mxu0 0
  %2066 = vmatpush1.bf16.msra.mxu0 %v2034
  %2067 = vmatprep.subr.bf16.mxu0 0
  %2068 = vmatpush1.bf16.msra.mxu0 %v2035
  %2069 = vmatprep.subr.bf16.mxu0 0
  %2070 = vmatpush1.bf16.msra.mxu0 %v2036
  %2071 = vmatprep.subr.bf16.mxu0 0
  %2072 = vmatpush1.bf16.msra.mxu0 %v2037
  %2073 = vmatprep.subr.bf16.mxu0 0
  %2074 = vmatpush1.bf16.msra.mxu0 %v2038
  %2075 = vmatprep.subr.bf16.mxu0 0
  %2076 = vmatpush1.bf16.msra.mxu0 %v2039
  %2077 = vmatprep.subr.bf16.mxu0 0
  %2078 = vmatpush1.bf16.msra.mxu0 %v2040
  %2079 = vmatprep.subr.bf16.mxu0 0
  %2080 = vmatpush1.bf16.msra.mxu0 %v2041
  %2081 = vmatprep.subr.bf16.mxu0 0
  %2082 = vmatpush1.bf16.msra.mxu0 %v2042
  %2083 = vmatprep.mubr.bf16.mxu0 %v522
  %2084 = vmatmul.mubr.bf16.gmra.mrb[0].mxu0 %v521
  %v2085 = vpop.f32.mrb[0].mxu0
  %v2086 = vadd.f32 0.0, %v2085
  %v2087 = vpop.f32.mrb[0].mxu0
  %v2088 = vpop.f32.mrb[0].mxu0
  %v2089 = vadd.f32 0.0, %v2088
  %v2090 = vpop.f32.mrb[0].mxu0
  %2091 = vmatprep.mubr.bf16.mxu0 %v525
  %2092 = vmatmul.mubr.bf16.gmra.mrb[0].mxu0 %v524
  %v2093 = vpop.f32.mrb[0].mxu0
  %v2094 = vadd.f32 0.0, %v2093
  %v2095 = vpop.f32.mrb[0].mxu0
  %v2096 = vpop.f32.mrb[0].mxu0
  %v2097 = vadd.f32 0.0, %v2096
  %v2098 = vpop.f32.mrb[0].mxu0
  %2099 = vmatprep.mubr.bf16.mxu0 %v528
  %2100 = vmatmul.mubr.bf16.gmra.mrb[0].mxu0 %v527
  %v2101 = vpop.f32.mrb[0].mxu0
  %v2102 = vadd.f32 0.0, %v2101
  %v2103 = vpop.f32.mrb[0].mxu0
  %v2104 = vpop.f32.mrb[0].mxu0
  %v2105 = vadd.f32 0.0, %v2104
  %v2106 = vpop.f32.mrb[0].mxu0
  %2107 = vmatprep.mubr.bf16.mxu0 %v531
  %2108 = vmatmul.mubr.bf16.gmra.mrb[0].mxu0 %v530
  %v2109 = vpop.f32.mrb[0].mxu0
  %v2110 = vadd.f32 0.0, %v2109
  %v2111 = vpop.f32.mrb[0].mxu0
  %v2112 = vpop.f32.mrb[0].mxu0
  %v2113 = vadd.f32 0.0, %v2112
  %v2114 = vpop.f32.mrb[0].mxu0
  %2115 = vmatprep.mubr.bf16.mxu0 %v534
  %2116 = vmatmul.mubr.bf16.gmra.mrb[0].mxu0 %v533
  %v2117 = vpop.f32.mrb[0].mxu0
  %v2118 = vadd.f32 0.0, %v2117
  %v2119 = vpop.f32.mrb[0].mxu0
  %v2120 = vpop.f32.mrb[0].mxu0
  %v2121 = vadd.f32 0.0, %v2120
  %v2122 = vpop.f32.mrb[0].mxu0
  %2123 = vmatprep.mubr.bf16.mxu0 %v537
  %2124 = vmatmul.mubr.bf16.gmra.mrb[0].mxu0 %v536
  %v2125 = vpop.f32.mrb[0].mxu0
  %v2126 = vadd.f32 0.0, %v2125
  %v2127 = vpop.f32.mrb[0].mxu0
  %v2128 = vpop.f32.mrb[0].mxu0
  %v2129 = vadd.f32 0.0, %v2128
  %v2130 = vpop.f32.mrb[0].mxu0
  %2131 = vmatprep.mubr.bf16.mxu0 %v540
  %2132 = vmatmul.mubr.bf16.gmra.mrb[0].mxu0 %v539
  %v2133 = vpop.f32.mrb[0].mxu0
  %v2134 = vadd.f32 0.0, %v2133
  %v2135 = vpop.f32.mrb[0].mxu0
  %v2136 = vpop.f32.mrb[0].mxu0
  %v2137 = vadd.f32 0.0, %v2136
  %v2138 = vpop.f32.mrb[0].mxu0
  %2139 = vmatprep.mubr.bf16.mxu0 %v543
  %2140 = vmatmul.mubr.bf16.gmra.mrb[0].mxu0 %v542
  %v2141 = vpop.f32.mrb[0].mxu0
  %v2142 = vadd.f32 0.0, %v2141
  %v2143 = vpop.f32.mrb[0].mxu0
  %v2144 = vpop.f32.mrb[0].mxu0
  %v2145 = vadd.f32 0.0, %v2144
  %v2146 = vpop.f32.mrb[0].mxu0
  %2147 = vmatprep.mubr.bf16.mxu0 %v546
  %2148 = vmatmul.mubr.bf16.gmra.mrb[0].mxu0 %v545
  %v2149 = vpop.f32.mrb[0].mxu0
  %v2150 = vadd.f32 0.0, %v2149
  %v2151 = vpop.f32.mrb[0].mxu0
  %v2152 = vpop.f32.mrb[0].mxu0
  %v2153 = vadd.f32 0.0, %v2152
  %v2154 = vpop.f32.mrb[0].mxu0
  %2155 = vmatprep.mubr.bf16.mxu0 %v549
  %2156 = vmatmul.mubr.bf16.gmra.mrb[0].mxu0 %v548
  %v2157 = vpop.f32.mrb[0].mxu0
  %v2158 = vadd.f32 0.0, %v2157
  %v2159 = vpop.f32.mrb[0].mxu0
  %v2160 = vpop.f32.mrb[0].mxu0
  %v2161 = vadd.f32 0.0, %v2160
  %v2162 = vpop.f32.mrb[0].mxu0
  %2163 = vmatprep.mubr.bf16.mxu0 %v552
  %2164 = vmatmul.mubr.bf16.gmra.mrb[0].mxu0 %v551
  %v2165 = vpop.f32.mrb[0].mxu0
  %v2166 = vadd.f32 0.0, %v2165
  %v2167 = vpop.f32.mrb[0].mxu0
  %v2168 = vpop.f32.mrb[0].mxu0
  %v2169 = vadd.f32 0.0, %v2168
  %v2170 = vpop.f32.mrb[0].mxu0
  %2171 = vmatprep.mubr.bf16.mxu0 %v555
  %2172 = vmatmul.mubr.bf16.gmra.mrb[0].mxu0 %v554
  %v2173 = vpop.f32.mrb[0].mxu0
  %v2174 = vadd.f32 0.0, %v2173
  %v2175 = vpop.f32.mrb[0].mxu0
  %v2176 = vpop.f32.mrb[0].mxu0
  %v2177 = vadd.f32 0.0, %v2176
  %v2178 = vpop.f32.mrb[0].mxu0
  %2179 = vmatprep.mubr.bf16.mxu0 %v558
  %2180 = vmatmul.mubr.bf16.gmra.mrb[0].mxu0 %v557
  %v2181 = vpop.f32.mrb[0].mxu0
  %v2182 = vadd.f32 0.0, %v2181
  %v2183 = vpop.f32.mrb[0].mxu0
  %v2184 = vpop.f32.mrb[0].mxu0
  %v2185 = vadd.f32 0.0, %v2184
  %v2186 = vpop.f32.mrb[0].mxu0
  %2187 = vmatprep.mubr.bf16.mxu0 %v561
  %2188 = vmatmul.mubr.bf16.gmra.mrb[0].mxu0 %v560
  %v2189 = vpop.f32.mrb[0].mxu0
  %v2190 = vadd.f32 0.0, %v2189
  %v2191 = vpop.f32.mrb[0].mxu0
  %v2192 = vpop.f32.mrb[0].mxu0
  %v2193 = vadd.f32 0.0, %v2192
  %v2194 = vpop.f32.mrb[0].mxu0
  %2195 = vmatprep.mubr.bf16.mxu0 %v564
  %2196 = vmatmul.mubr.bf16.gmra.mrb[0].mxu0 %v563
  %v2197 = vpop.f32.mrb[0].mxu0
  %v2198 = vadd.f32 0.0, %v2197
  %v2199 = vpop.f32.mrb[0].mxu0
  %v2200 = vpop.f32.mrb[0].mxu0
  %v2201 = vadd.f32 0.0, %v2200
  %v2202 = vpop.f32.mrb[0].mxu0
  %2203 = vmatprep.mubr.bf16.mxu0 %v567
  %2204 = vmatmul.mubr.bf16.gmra.mrb[0].mxu0 %v566
  %v2205 = vpop.f32.mrb[0].mxu0
  %v2206 = vadd.f32 0.0, %v2205
  %v2207 = vpop.f32.mrb[0].mxu0
  %v2208 = vpop.f32.mrb[0].mxu0
  %v2209 = vadd.f32 0.0, %v2208
  %v2210 = vpop.f32.mrb[0].mxu0
  %2211 = vdwg.mxu0
  %2212 = vmatprep.subr.bf16.mxu0 0
  %2213 = vmatpush1.bf16.msra.mxu0 %v2043
  %2214 = vmatprep.subr.bf16.mxu0 0
  %2215 = vmatpush1.bf16.msra.mxu0 %v2044
  %2216 = vmatprep.subr.bf16.mxu0 0
  %2217 = vmatpush1.bf16.msra.mxu0 %v2045
  %2218 = vmatprep.subr.bf16.mxu0 0
  %2219 = vmatpush1.bf16.msra.mxu0 %v2046
  %2220 = vmatprep.subr.bf16.mxu0 0
  %2221 = vmatpush1.bf16.msra.mxu0 %v2047
  %2222 = vmatprep.subr.bf16.mxu0 0
  %2223 = vmatpush1.bf16.msra.mxu0 %v2048
  %2224 = vmatprep.subr.bf16.mxu0 0
  %2225 = vmatpush1.bf16.msra.mxu0 %v2049
  %2226 = vmatprep.subr.bf16.mxu0 0
  %2227 = vmatpush1.bf16.msra.mxu0 %v2050
  %2228 = vmatprep.subr.bf16.mxu0 0
  %2229 = vmatpush1.bf16.msra.mxu0 0
  %2230 = vmatprep.subr.bf16.mxu0 0
  %2231 = vmatpush1.bf16.msra.mxu0 0
  %2232 = vmatprep.subr.bf16.mxu0 0
  %2233 = vmatpush1.bf16.msra.mxu0 0
  %2234 = vmatprep.subr.bf16.mxu0 0
  %2235 = vmatpush1.bf16.msra.mxu0 0
  %2236 = vmatprep.subr.bf16.mxu0 0
  %2237 = vmatpush1.bf16.msra.mxu0 0
  %2238 = vmatprep.subr.bf16.mxu0 0
  %2239 = vmatpush1.bf16.msra.mxu0 0
  %2240 = vmatprep.subr.bf16.mxu0 0
  %2241 = vmatpush1.bf16.msra.mxu0 0
  %2242 = vmatprep.subr.bf16.mxu0 0
  %2243 = vmatpush1.bf16.msra.mxu0 0
  %2244 = vmatprep.mubr.bf16.mxu0 0
  %2245 = vmatmul.mubr.bf16.gmra.mrb[0].mxu0 %v523
  %v2246 = vpop.f32.mrb[0].mxu0
  %v2247 = vadd.f32 %v2086, %v2246
  %v2248 = vpop.f32.mrb[0].mxu0
  %v2249 = vpop.f32.mrb[0].mxu0
  %v2250 = vadd.f32 %v2089, %v2249
  %v2251 = vpop.f32.mrb[0].mxu0
  %2252 = vmatprep.mubr.bf16.mxu0 0
  %2253 = vmatmul.mubr.bf16.gmra.mrb[0].mxu0 %v526
  %v2254 = vpop.f32.mrb[0].mxu0
  %v2255 = vadd.f32 %v2094, %v2254
  %v2256 = vpop.f32.mrb[0].mxu0
  %v2257 = vpop.f32.mrb[0].mxu0
  %v2258 = vadd.f32 %v2097, %v2257
  %v2259 = vpop.f32.mrb[0].mxu0
  %2260 = vmatprep.mubr.bf16.mxu0 0
  %2261 = vmatmul.mubr.bf16.gmra.mrb[0].mxu0 %v529
  %v2262 = vpop.f32.mrb[0].mxu0
  %v2263 = vadd.f32 %v2102, %v2262
  %v2264 = vpop.f32.mrb[0].mxu0
  %v2265 = vpop.f32.mrb[0].mxu0
  %v2266 = vadd.f32 %v2105, %v2265
  %v2267 = vpop.f32.mrb[0].mxu0
  %2268 = vmatprep.mubr.bf16.mxu0 0
  %2269 = vmatmul.mubr.bf16.gmra.mrb[0].mxu0 %v532
  %v2270 = vpop.f32.mrb[0].mxu0
  %v2271 = vadd.f32 %v2110, %v2270
  %v2272 = vpop.f32.mrb[0].mxu0
  %v2273 = vpop.f32.mrb[0].mxu0
  %v2274 = vadd.f32 %v2113, %v2273
  %v2275 = vpop.f32.mrb[0].mxu0
  %2276 = vmatprep.mubr.bf16.mxu0 0
  %2277 = vmatmul.mubr.bf16.gmra.mrb[0].mxu0 %v535
  %v2278 = vpop.f32.mrb[0].mxu0
  %v2279 = vadd.f32 %v2118, %v2278
  %v2280 = vpop.f32.mrb[0].mxu0
  %v2281 = vpop.f32.mrb[0].mxu0
  %v2282 = vadd.f32 %v2121, %v2281
  %v2283 = vpop.f32.mrb[0].mxu0
  %2284 = vmatprep.mubr.bf16.mxu0 0
  %2285 = vmatmul.mubr.bf16.gmra.mrb[0].mxu0 %v538
  %v2286 = vpop.f32.mrb[0].mxu0
  %v2287 = vadd.f32 %v2126, %v2286
  %v2288 = vpop.f32.mrb[0].mxu0
  %v2289 = vpop.f32.mrb[0].mxu0
  %v2290 = vadd.f32 %v2129, %v2289
  %v2291 = vpop.f32.mrb[0].mxu0
  %2292 = vmatprep.mubr.bf16.mxu0 0
  %2293 = vmatmul.mubr.bf16.gmra.mrb[0].mxu0 %v541
  %v2294 = vpop.f32.mrb[0].mxu0
  %v2295 = vadd.f32 %v2134, %v2294
  %v2296 = vpop.f32.mrb[0].mxu0
  %v2297 = vpop.f32.mrb[0].mxu0
  %v2298 = vadd.f32 %v2137, %v2297
  %v2299 = vpop.f32.mrb[0].mxu0
  %2300 = vmatprep.mubr.bf16.mxu0 0
  %2301 = vmatmul.mubr.bf16.gmra.mrb[0].mxu0 %v544
  %v2302 = vpop.f32.mrb[0].mxu0
  %v2303 = vadd.f32 %v2142, %v2302
  %v2304 = vpop.f32.mrb[0].mxu0
  %v2305 = vpop.f32.mrb[0].mxu0
  %v2306 = vadd.f32 %v2145, %v2305
  %v2307 = vpop.f32.mrb[0].mxu0
  %2308 = vmatprep.mubr.bf16.mxu0 0
  %2309 = vmatmul.mubr.bf16.gmra.mrb[0].mxu0 %v547
  %v2310 = vpop.f32.mrb[0].mxu0
  %v2311 = vadd.f32 %v2150, %v2310
  %v2312 = vpop.f32.mrb[0].mxu0
  %v2313 = vpop.f32.mrb[0].mxu0
  %v2314 = vadd.f32 %v2153, %v2313
  %v2315 = vpop.f32.mrb[0].mxu0
  %2316 = vmatprep.mubr.bf16.mxu0 0
  %2317 = vmatmul.mubr.bf16.gmra.mrb[0].mxu0 %v550
  %v2318 = vpop.f32.mrb[0].mxu0
  %v2319 = vadd.f32 %v2158, %v2318
  %v2320 = vpop.f32.mrb[0].mxu0
  %v2321 = vpop.f32.mrb[0].mxu0
  %v2322 = vadd.f32 %v2161, %v2321
  %v2323 = vpop.f32.mrb[0].mxu0
  %2324 = vmatprep.mubr.bf16.mxu0 0
  %2325 = vmatmul.mubr.bf16.gmra.mrb[0].mxu0 %v553
  %v2326 = vpop.f32.mrb[0].mxu0
  %v2327 = vadd.f32 %v2166, %v2326
  %v2328 = vpop.f32.mrb[0].mxu0
  %v2329 = vpop.f32.mrb[0].mxu0
  %v2330 = vadd.f32 %v2169, %v2329
  %v2331 = vpop.f32.mrb[0].mxu0
  %2332 = vmatprep.mubr.bf16.mxu0 0
  %2333 = vmatmul.mubr.bf16.gmra.mrb[0].mxu0 %v556
  %v2334 = vpop.f32.mrb[0].mxu0
  %v2335 = vadd.f32 %v2174, %v2334
  %v2336 = vpop.f32.mrb[0].mxu0
  %v2337 = vpop.f32.mrb[0].mxu0
  %v2338 = vadd.f32 %v2177, %v2337
  %v2339 = vpop.f32.mrb[0].mxu0
  %2340 = vmatprep.mubr.bf16.mxu0 0
  %2341 = vmatmul.mubr.bf16.gmra.mrb[0].mxu0 %v559
  %v2342 = vpop.f32.mrb[0].mxu0
  %v2343 = vadd.f32 %v2182, %v2342
  %v2344 = vpop.f32.mrb[0].mxu0
  %v2345 = vpop.f32.mrb[0].mxu0
  %v2346 = vadd.f32 %v2185, %v2345
  %v2347 = vpop.f32.mrb[0].mxu0
  %2348 = vmatprep.mubr.bf16.mxu0 0
  %2349 = vmatmul.mubr.bf16.gmra.mrb[0].mxu0 %v562
  %v2350 = vpop.f32.mrb[0].mxu0
  %v2351 = vadd.f32 %v2190, %v2350
  %v2352 = vpop.f32.mrb[0].mxu0
  %v2353 = vpop.f32.mrb[0].mxu0
  %v2354 = vadd.f32 %v2193, %v2353
  %v2355 = vpop.f32.mrb[0].mxu0
  %2356 = vmatprep.mubr.bf16.mxu0 0
  %2357 = vmatmul.mubr.bf16.gmra.mrb[0].mxu0 %v565
  %v2358 = vpop.f32.mrb[0].mxu0
  %v2359 = vadd.f32 %v2198, %v2358
  %v2360 = vpop.f32.mrb[0].mxu0
  %v2361 = vpop.f32.mrb[0].mxu0
  %v2362 = vadd.f32 %v2201, %v2361
  %v2363 = vpop.f32.mrb[0].mxu0
  %2364 = vmatprep.mubr.bf16.mxu0 0
  %2365 = vmatmul.mubr.bf16.gmra.mrb[0].mxu0 %v568
  %v2366 = vpop.f32.mrb[0].mxu0
  %v2367 = vadd.f32 %v2206, %v2366
  %v2368 = vpop.f32.mrb[0].mxu0
  %v2369 = vpop.f32.mrb[0].mxu0
  %v2370 = vadd.f32 %v2209, %v2369
  %v2371 = vpop.f32.mrb[0].mxu0
  %2372 = vdwg.mxu0
  %2373 = vmatprep.subr.bf16.mxu0 0
  %2374 = vmatpush1.bf16.msra.mxu0 %v2011
  %2375 = vmatprep.subr.bf16.mxu0 0
  %2376 = vmatpush1.bf16.msra.mxu0 %v2012
  %2377 = vmatprep.subr.bf16.mxu0 0
  %2378 = vmatpush1.bf16.msra.mxu0 %v2013
  %2379 = vmatprep.subr.bf16.mxu0 0
  %2380 = vmatpush1.bf16.msra.mxu0 %v2014
  %2381 = vmatprep.subr.bf16.mxu0 0
  %2382 = vmatpush1.bf16.msra.mxu0 %v2015
  %2383 = vmatprep.subr.bf16.mxu0 0
  %2384 = vmatpush1.bf16.msra.mxu0 %v2016
  %2385 = vmatprep.subr.bf16.mxu0 0
  %2386 = vmatpush1.bf16.msra.mxu0 %v2017
  %2387 = vmatprep.subr.bf16.mxu0 0
  %2388 = vmatpush1.bf16.msra.mxu0 %v2018
  %2389 = vmatprep.subr.bf16.mxu0 0
  %2390 = vmatpush1.bf16.msra.mxu0 %v2019
  %2391 = vmatprep.subr.bf16.mxu0 0
  %2392 = vmatpush1.bf16.msra.mxu0 %v2020
  %2393 = vmatprep.subr.bf16.mxu0 0
  %2394 = vmatpush1.bf16.msra.mxu0 %v2021
  %2395 = vmatprep.subr.bf16.mxu0 0
  %2396 = vmatpush1.bf16.msra.mxu0 %v2022
  %2397 = vmatprep.subr.bf16.mxu0 0
  %2398 = vmatpush1.bf16.msra.mxu0 %v2023
  %2399 = vmatprep.subr.bf16.mxu0 0
  %2400 = vmatpush1.bf16.msra.mxu0 %v2024
  %2401 = vmatprep.subr.bf16.mxu0 0
  %2402 = vmatpush1.bf16.msra.mxu0 %v2025
  %2403 = vmatprep.subr.bf16.mxu0 0
  %2404 = vmatpush1.bf16.msra.mxu0 %v2026
  %2405 = vmatprep.mubr.bf16.mxu0 %v995
  %2406 = vmatmul.mubr.bf16.gmra.mrb[0].mxu0 %v947
  %v2407 = vpop.f32.mrb[0].mxu0
  %v2408 = vadd.f32 0.0, %v2407
  %v2409 = vpop.f32.mrb[0].mxu0
  %v2410 = vpop.f32.mrb[0].mxu0
  %v2411 = vadd.f32 0.0, %v2410
  %v2412 = vpop.f32.mrb[0].mxu0
  %2413 = vmatprep.mubr.bf16.mxu0 %v996
  %2414 = vmatmul.mubr.bf16.gmra.mrb[0].mxu0 %v948
  %v2415 = vpop.f32.mrb[0].mxu0
  %v2416 = vadd.f32 0.0, %v2415
  %v2417 = vpop.f32.mrb[0].mxu0
  %v2418 = vpop.f32.mrb[0].mxu0
  %v2419 = vadd.f32 0.0, %v2418
  %v2420 = vpop.f32.mrb[0].mxu0
  %2421 = vmatprep.mubr.bf16.mxu0 %v997
  %2422 = vmatmul.mubr.bf16.gmra.mrb[0].mxu0 %v949
  %v2423 = vpop.f32.mrb[0].mxu0
  %v2424 = vadd.f32 0.0, %v2423
  %v2425 = vpop.f32.mrb[0].mxu0
  %v2426 = vpop.f32.mrb[0].mxu0
  %v2427 = vadd.f32 0.0, %v2426
  %v2428 = vpop.f32.mrb[0].mxu0
  %2429 = vmatprep.mubr.bf16.mxu0 %v998
  %2430 = vmatmul.mubr.bf16.gmra.mrb[0].mxu0 %v950
  %v2431 = vpop.f32.mrb[0].mxu0
  %v2432 = vadd.f32 0.0, %v2431
  %v2433 = vpop.f32.mrb[0].mxu0
  %v2434 = vpop.f32.mrb[0].mxu0
  %v2435 = vadd.f32 0.0, %v2434
  %v2436 = vpop.f32.mrb[0].mxu0
  %2437 = vmatprep.mubr.bf16.mxu0 %v999
  %2438 = vmatmul.mubr.bf16.gmra.mrb[0].mxu0 %v951
  %v2439 = vpop.f32.mrb[0].mxu0
  %v2440 = vadd.f32 0.0, %v2439
  %v2441 = vpop.f32.mrb[0].mxu0
  %v2442 = vpop.f32.mrb[0].mxu0
  %v2443 = vadd.f32 0.0, %v2442
  %v2444 = vpop.f32.mrb[0].mxu0
  %2445 = vmatprep.mubr.bf16.mxu0 %v1000
  %2446 = vmatmul.mubr.bf16.gmra.mrb[0].mxu0 %v952
  %v2447 = vpop.f32.mrb[0].mxu0
  %v2448 = vadd.f32 0.0, %v2447
  %v2449 = vpop.f32.mrb[0].mxu0
  %v2450 = vpop.f32.mrb[0].mxu0
  %v2451 = vadd.f32 0.0, %v2450
  %v2452 = vpop.f32.mrb[0].mxu0
  %2453 = vmatprep.mubr.bf16.mxu0 %v1001
  %2454 = vmatmul.mubr.bf16.gmra.mrb[0].mxu0 %v953
  %v2455 = vpop.f32.mrb[0].mxu0
  %v2456 = vadd.f32 0.0, %v2455
  %v2457 = vpop.f32.mrb[0].mxu0
  %v2458 = vpop.f32.mrb[0].mxu0
  %v2459 = vadd.f32 0.0, %v2458
  %v2460 = vpop.f32.mrb[0].mxu0
  %2461 = vmatprep.mubr.bf16.mxu0 %v1002
  %2462 = vmatmul.mubr.bf16.gmra.mrb[0].mxu0 %v954
  %v2463 = vpop.f32.mrb[0].mxu0
  %v2464 = vadd.f32 0.0, %v2463
  %v2465 = vpop.f32.mrb[0].mxu0
  %v2466 = vpop.f32.mrb[0].mxu0
  %v2467 = vadd.f32 0.0, %v2466
  %v2468 = vpop.f32.mrb[0].mxu0
  %2469 = vmatprep.mubr.bf16.mxu0 %v1011
  %2470 = vmatmul.mubr.bf16.gmra.mrb[0].mxu0 %v963
  %v2471 = vpop.f32.mrb[0].mxu0
  %v2472 = vadd.f32 0.0, %v2471
  %v2473 = vpop.f32.mrb[0].mxu0
  %v2474 = vpop.f32.mrb[0].mxu0
  %v2475 = vadd.f32 0.0, %v2474
  %v2476 = vpop.f32.mrb[0].mxu0
  %2477 = vmatprep.mubr.bf16.mxu0 %v1012
  %2478 = vmatmul.mubr.bf16.gmra.mrb[0].mxu0 %v964
  %v2479 = vpop.f32.mrb[0].mxu0
  %v2480 = vadd.f32 0.0, %v2479
  %v2481 = vpop.f32.mrb[0].mxu0
  %v2482 = vpop.f32.mrb[0].mxu0
  %v2483 = vadd.f32 0.0, %v2482
  %v2484 = vpop.f32.mrb[0].mxu0
  %2485 = vmatprep.mubr.bf16.mxu0 %v1013
  %2486 = vmatmul.mubr.bf16.gmra.mrb[0].mxu0 %v965
  %v2487 = vpop.f32.mrb[0].mxu0
  %v2488 = vadd.f32 0.0, %v2487
  %v2489 = vpop.f32.mrb[0].mxu0
  %v2490 = vpop.f32.mrb[0].mxu0
  %v2491 = vadd.f32 0.0, %v2490
  %v2492 = vpop.f32.mrb[0].mxu0
  %2493 = vmatprep.mubr.bf16.mxu0 %v1014
  %2494 = vmatmul.mubr.bf16.gmra.mrb[0].mxu0 %v966
  %v2495 = vpop.f32.mrb[0].mxu0
  %v2496 = vadd.f32 0.0, %v2495
  %v2497 = vpop.f32.mrb[0].mxu0
  %v2498 = vpop.f32.mrb[0].mxu0
  %v2499 = vadd.f32 0.0, %v2498
  %v2500 = vpop.f32.mrb[0].mxu0
  %2501 = vmatprep.mubr.bf16.mxu0 %v1015
  %2502 = vmatmul.mubr.bf16.gmra.mrb[0].mxu0 %v967
  %v2503 = vpop.f32.mrb[0].mxu0
  %v2504 = vadd.f32 0.0, %v2503
  %v2505 = vpop.f32.mrb[0].mxu0
  %v2506 = vpop.f32.mrb[0].mxu0
  %v2507 = vadd.f32 0.0, %v2506
  %v2508 = vpop.f32.mrb[0].mxu0
  %2509 = vmatprep.mubr.bf16.mxu0 %v1016
  %2510 = vmatmul.mubr.bf16.gmra.mrb[0].mxu0 %v968
  %v2511 = vpop.f32.mrb[0].mxu0
  %v2512 = vadd.f32 0.0, %v2511
  %v2513 = vpop.f32.mrb[0].mxu0
  %v2514 = vpop.f32.mrb[0].mxu0
  %v2515 = vadd.f32 0.0, %v2514
  %v2516 = vpop.f32.mrb[0].mxu0
  %2517 = vmatprep.mubr.bf16.mxu0 %v1017
  %2518 = vmatmul.mubr.bf16.gmra.mrb[0].mxu0 %v969
  %v2519 = vpop.f32.mrb[0].mxu0
  %v2520 = vadd.f32 0.0, %v2519
  %v2521 = vpop.f32.mrb[0].mxu0
  %v2522 = vpop.f32.mrb[0].mxu0
  %v2523 = vadd.f32 0.0, %v2522
  %v2524 = vpop.f32.mrb[0].mxu0
  %2525 = vmatprep.mubr.bf16.mxu0 %v1018
  %2526 = vmatmul.mubr.bf16.gmra.mrb[0].mxu0 %v970
  %v2527 = vpop.f32.mrb[0].mxu0
  %v2528 = vadd.f32 0.0, %v2527
  %v2529 = vpop.f32.mrb[0].mxu0
  %v2530 = vpop.f32.mrb[0].mxu0
  %v2531 = vadd.f32 0.0, %v2530
  %v2532 = vpop.f32.mrb[0].mxu0
  %2533 = vmatprep.mubr.bf16.mxu0 %v1027
  %2534 = vmatmul.mubr.bf16.gmra.mrb[0].mxu0 %v979
  %v2535 = vpop.f32.mrb[0].mxu0
  %v2536 = vadd.f32 0.0, %v2535
  %v2537 = vpop.f32.mrb[0].mxu0
  %v2538 = vpop.f32.mrb[0].mxu0
  %v2539 = vadd.f32 0.0, %v2538
  %v2540 = vpop.f32.mrb[0].mxu0
  %2541 = vmatprep.mubr.bf16.mxu0 %v1028
  %2542 = vmatmul.mubr.bf16.gmra.mrb[0].mxu0 %v980
  %v2543 = vpop.f32.mrb[0].mxu0
  %v2544 = vadd.f32 0.0, %v2543
  %v2545 = vpop.f32.mrb[0].mxu0
  %v2546 = vpop.f32.mrb[0].mxu0
  %v2547 = vadd.f32 0.0, %v2546
  %v2548 = vpop.f32.mrb[0].mxu0
  %2549 = vmatprep.mubr.bf16.mxu0 %v1029
  %2550 = vmatmul.mubr.bf16.gmra.mrb[0].mxu0 %v981
  %v2551 = vpop.f32.mrb[0].mxu0
  %v2552 = vadd.f32 0.0, %v2551
  %v2553 = vpop.f32.mrb[0].mxu0
  %v2554 = vpop.f32.mrb[0].mxu0
  %v2555 = vadd.f32 0.0, %v2554
  %v2556 = vpop.f32.mrb[0].mxu0
  %2557 = vmatprep.mubr.bf16.mxu0 %v1030
  %2558 = vmatmul.mubr.bf16.gmra.mrb[0].mxu0 %v982
  %v2559 = vpop.f32.mrb[0].mxu0
  %v2560 = vadd.f32 0.0, %v2559
  %v2561 = vpop.f32.mrb[0].mxu0
  %v2562 = vpop.f32.mrb[0].mxu0
  %v2563 = vadd.f32 0.0, %v2562
  %v2564 = vpop.f32.mrb[0].mxu0
  %2565 = vmatprep.mubr.bf16.mxu0 %v1031
  %2566 = vmatmul.mubr.bf16.gmra.mrb[0].mxu0 %v983
  %v2567 = vpop.f32.mrb[0].mxu0
  %v2568 = vadd.f32 0.0, %v2567
  %v2569 = vpop.f32.mrb[0].mxu0
  %v2570 = vpop.f32.mrb[0].mxu0
  %v2571 = vadd.f32 0.0, %v2570
  %v2572 = vpop.f32.mrb[0].mxu0
  %2573 = vmatprep.mubr.bf16.mxu0 %v1032
  %2574 = vmatmul.mubr.bf16.gmra.mrb[0].mxu0 %v984
  %v2575 = vpop.f32.mrb[0].mxu0
  %v2576 = vadd.f32 0.0, %v2575
  %v2577 = vpop.f32.mrb[0].mxu0
  %v2578 = vpop.f32.mrb[0].mxu0
  %v2579 = vadd.f32 0.0, %v2578
  %v2580 = vpop.f32.mrb[0].mxu0
  %2581 = vmatprep.mubr.bf16.mxu0 %v1033
  %2582 = vmatmul.mubr.bf16.gmra.mrb[0].mxu0 %v985
  %v2583 = vpop.f32.mrb[0].mxu0
  %v2584 = vadd.f32 0.0, %v2583
  %v2585 = vpop.f32.mrb[0].mxu0
  %v2586 = vpop.f32.mrb[0].mxu0
  %v2587 = vadd.f32 0.0, %v2586
  %v2588 = vpop.f32.mrb[0].mxu0
  %2589 = vmatprep.mubr.bf16.mxu0 %v1034
  %2590 = vmatmul.mubr.bf16.gmra.mrb[0].mxu0 %v986
  %v2591 = vpop.f32.mrb[0].mxu0
  %v2592 = vadd.f32 0.0, %v2591
  %v2593 = vpop.f32.mrb[0].mxu0
  %v2594 = vpop.f32.mrb[0].mxu0
  %v2595 = vadd.f32 0.0, %v2594
  %v2596 = vpop.f32.mrb[0].mxu0
  %2597 = vdwg.mxu0
  %s2598 = scalar_lea.vmem %s3, 768
  %2599 = vst [vmem:[%s2598] sm:$0xff] %v2247
  %2600 = vst [vmem:[%s2598 + $0x8] sm:$0xff] %v2250
  %2601 = vst [vmem:[%s2598 + $0x10] sm:$0xff] %v2255
  %2602 = vst [vmem:[%s2598 + $0x18] sm:$0xff] %v2258
  %2603 = vst [vmem:[%s2598 + $0x20] sm:$0xff] %v2263
  %2604 = vst [vmem:[%s2598 + $0x28] sm:$0xff] %v2266
  %2605 = vst [vmem:[%s2598 + $0x30] sm:$0xff] %v2271
  %2606 = vst [vmem:[%s2598 + $0x38] sm:$0xff] %v2274
  %2607 = vst [vmem:[%s2598 + $0x40] sm:$0xff] %v2279
  %2608 = vst [vmem:[%s2598 + $0x48] sm:$0xff] %v2282
  %2609 = vst [vmem:[%s2598 + $0x50] sm:$0xff] %v2287
  %2610 = vst [vmem:[%s2598 + $0x58] sm:$0xff] %v2290
  %2611 = vst [vmem:[%s2598 + $0x60] sm:$0xff] %v2295
  %2612 = vst [vmem:[%s2598 + $0x68] sm:$0xff] %v2298
  %2613 = vst [vmem:[%s2598 + $0x70] sm:$0xff] %v2303
  %2614 = vst [vmem:[%s2598 + $0x78] sm:$0xff] %v2306
  %2615 = vst [vmem:[%s2598 + $0x80] sm:$0xff] %v2311
  %2616 = vst [vmem:[%s2598 + $0x88] sm:$0xff] %v2314
  %2617 = vst [vmem:[%s2598 + $0x90] sm:$0xff] %v2319
  %2618 = vst [vmem:[%s2598 + $0x98] sm:$0xff] %v2322
  %2619 = vst [vmem:[%s2598 + $0xa0] sm:$0xff] %v2327
  %2620 = vst [vmem:[%s2598 + $0xa8] sm:$0xff] %v2330
  %2621 = vst [vmem:[%s2598 + $0xb0] sm:$0xff] %v2335
  %2622 = vst [vmem:[%s2598 + $0xb8] sm:$0xff] %v2338
  %2623 = vst [vmem:[%s2598 + $0xc0] sm:$0xff] %v2343
  %2624 = vst [vmem:[%s2598 + $0xc8] sm:$0xff] %v2346
  %2625 = vst [vmem:[%s2598 + $0xd0] sm:$0xff] %v2351
  %2626 = vst [vmem:[%s2598 + $0xd8] sm:$0xff] %v2354
  %2627 = vst [vmem:[%s2598 + $0xe0] sm:$0xff] %v2359
  %2628 = vst [vmem:[%s2598 + $0xe8] sm:$0xff] %v2362
  %2629 = vst [vmem:[%s2598 + $0xf0] sm:$0xff] %v2367
  %2630 = vst [vmem:[%s2598 + $0xf8] sm:$0xff] %v2370
  %s2631 = scalar_lea.vmem %s4, 1152
  %2632 = vst [vmem:[%s2631] sm:$0xff] %v2408
  %2633 = vst [vmem:[%s2631 + $0x8] sm:$0xff] %v2411
  %2634 = vst [vmem:[%s2631 + $0x10] sm:$0xff] %v2416
  %2635 = vst [vmem:[%s2631 + $0x18] sm:$0xff] %v2419
  %2636 = vst [vmem:[%s2631 + $0x20] sm:$0xff] %v2424
  %2637 = vst [vmem:[%s2631 + $0x28] sm:$0xff] %v2427
  %2638 = vst [vmem:[%s2631 + $0x30] sm:$0xff] %v2432
  %2639 = vst [vmem:[%s2631 + $0x38] sm:$0xff] %v2435
  %2640 = vst [vmem:[%s2631 + $0x40] sm:$0xff] %v2440
  %2641 = vst [vmem:[%s2631 + $0x48] sm:$0xff] %v2443
  %2642 = vst [vmem:[%s2631 + $0x50] sm:$0xff] %v2448
  %2643 = vst [vmem:[%s2631 + $0x58] sm:$0xff] %v2451
  %2644 = vst [vmem:[%s2631 + $0x60] sm:$0xff] %v2456
  %2645 = vst [vmem:[%s2631 + $0x68] sm:$0xff] %v2459
  %2646 = vst [vmem:[%s2631 + $0x70] sm:$0xff] %v2464
  %2647 = vst [vmem:[%s2631 + $0x78] sm:$0xff] %v2467
  %2648 = vst [vmem:[%s2631 + $0x80] sm:$0xff] %v2472
  %2649 = vst [vmem:[%s2631 + $0x88] sm:$0xff] %v2475
  %2650 = vst [vmem:[%s2631 + $0x90] sm:$0xff] %v2480
  %2651 = vst [vmem:[%s2631 + $0x98] sm:$0xff] %v2483
  %2652 = vst [vmem:[%s2631 + $0xa0] sm:$0xff] %v2488
  %2653 = vst [vmem:[%s2631 + $0xa8] sm:$0xff] %v2491
  %2654 = vst [vmem:[%s2631 + $0xb0] sm:$0xff] %v2496
  %2655 = vst [vmem:[%s2631 + $0xb8] sm:$0xff] %v2499
  %2656 = vst [vmem:[%s2631 + $0xc0] sm:$0xff] %v2504
  %2657 = vst [vmem:[%s2631 + $0xc8] sm:$0xff] %v2507
  %2658 = vst [vmem:[%s2631 + $0xd0] sm:$0xff] %v2512
  %2659 = vst [vmem:[%s2631 + $0xd8] sm:$0xff] %v2515
  %2660 = vst [vmem:[%s2631 + $0xe0] sm:$0xff] %v2520
  %2661 = vst [vmem:[%s2631 + $0xe8] sm:$0xff] %v2523
  %2662 = vst [vmem:[%s2631 + $0xf0] sm:$0xff] %v2528
  %2663 = vst [vmem:[%s2631 + $0xf8] sm:$0xff] %v2531
  %2664 = vst [vmem:[%s2631 + $0x100] sm:$0xff] %v2536
  %2665 = vst [vmem:[%s2631 + $0x108] sm:$0xff] %v2539
  %2666 = vst [vmem:[%s2631 + $0x110] sm:$0xff] %v2544
  %2667 = vst [vmem:[%s2631 + $0x118] sm:$0xff] %v2547
  %2668 = vst [vmem:[%s2631 + $0x120] sm:$0xff] %v2552
  %2669 = vst [vmem:[%s2631 + $0x128] sm:$0xff] %v2555
  %2670 = vst [vmem:[%s2631 + $0x130] sm:$0xff] %v2560
  %2671 = vst [vmem:[%s2631 + $0x138] sm:$0xff] %v2563
  %2672 = vst [vmem:[%s2631 + $0x140] sm:$0xff] %v2568
  %2673 = vst [vmem:[%s2631 + $0x148] sm:$0xff] %v2571
  %2674 = vst [vmem:[%s2631 + $0x150] sm:$0xff] %v2576
  %2675 = vst [vmem:[%s2631 + $0x158] sm:$0xff] %v2579
  %2676 = vst [vmem:[%s2631 + $0x160] sm:$0xff] %v2584
  %2677 = vst [vmem:[%s2631 + $0x168] sm:$0xff] %v2587
  %2678 = vst [vmem:[%s2631 + $0x170] sm:$0xff] %v2592
  %2679 = vst [vmem:[%s2631 + $0x178] sm:$0xff] %v2595
  // Predicated region
  $region14: #{graph_conv_forward.1} parent=0 // pred_check
    _
  $region15: #{graph_conv_forward.1} parent=0 // pred_check_branch
    %2681 = sbr.rel (0) target = $region17
  $region16: #{graph_conv_forward.1} parent=0 // pred_region
    _
  $region17: #{graph_conv_forward.1} parent=0 // pred_fallthru
    _
  // Predicated region
  $region18: #{graph_conv_forward.1} parent=0 // pred_check
    _
  $region19: #{graph_conv_forward.1} parent=0 // pred_check_branch
    %2683 = sbr.rel (0) target = $region21
  $region20: #{graph_conv_forward.1} parent=0 // pred_region
    _
  $region21: #{graph_conv_forward.1} parent=0 // pred_fallthru
    _
  // Predicated region
  $region22: #{graph_conv_forward.1} parent=0 // pred_check
    _
  $region23: #{graph_conv_forward.1} parent=0 // pred_check_branch
    %2685 = sbr.rel (0) target = $region25
  $region24: #{graph_conv_forward.1} parent=0 // pred_region
    _
  $region25: #{graph_conv_forward.1} parent=0 // pred_fallthru
    _
  // Predicated region
  $region26: #{graph_conv_forward.1} parent=0 // pred_check
    _
  $region27: #{graph_conv_forward.1} parent=0 // pred_check_branch
    %2687 = sbr.rel (0) target = $region29
  $region28: #{graph_conv_forward.1} parent=0 // pred_region
    _
  $region29: #{graph_conv_forward.1} parent=0 // pred_fallthru
    _

</llo_original>
